<compile_context>
chip_gen: v5e
topology: v5e:2x2
jax: 0.10.0
libtpu: 0.0.40
codegen_flags: <defaults>
</compile_context>

<pallas_src>
import math

import jax
import jax.numpy as jnp
from jax.experimental import pallas as pl
from jax.experimental.pallas import tpu as pltpu

# ---- static configuration --------------------------------------------------
VOCAB = 50        # dicts.size()
PAD = 0           # onmt.Constants.PAD
WORD_VEC = 32     # opt.word_vec_size
RNN_SIZE = 32     # opt.rnn_size
LAYERS = 2        # opt.layers
T = 8             # target length (len)
B = 2             # batch
S = 10            # source length (src_len)


# ---- Pallas kernel ----------------------------------------------------------
def decoder_kernel(
    emb2d_ref,      # (T*B, E)    embedded target tokens, flattened
    ctxw_ref,       # (H, B*S)    context, transposed+flattened (for score proj)
    ctxf_ref,       # (B*S, H)    context, flattened (for weighted sum)
    h0_ref,         # (L, B, H)   initial hidden
    c0_ref,         # (L, B, H)   initial cell
    feed0_ref,      # (B, H)      initial input feed
    w0e_ref,        # (E, 4H)     layer0 emb cols [i|f|o|g], i/f/o pre-scaled 0.5
    w0f_ref,        # (H, 4H)     layer0 input-feed weights
    w0h_ref,        # (H, 4H)     layer0 hidden weights
    b0_ref,         # (1, 4H)     layer0 b_ih + b_hh
    w1_ref,         # (2H, 4H)    layer1 [W_ih ; W_hh]^T
    b1_ref,         # (1, 4H)     layer1 b_ih + b_hh
    win_ref,        # (H, H)      attention linear_in^T
    woutc_ref,      # (H, H)      attention linear_out^T (context part)
    woutr_ref,      # (H, H)      attention linear_out^T (rnn-out part)
    sbias_ref,      # (B, B*S)    block-diagonal score bias (0 own block, -1e30 else)
    out_ref,        # (T, B, H)   outputs
    attn_ref,       # (T, B, B*S) block-diagonal attention weights
    hT_ref,         # (L, B, H)   final hidden
    cT_ref,         # (L, B, H)   final cell
):
    H = RNN_SIZE
    T_, B_, _ = out_ref.shape

    # ---- loop-invariant hoists (off the serial per-step critical path) ------
    ctxf = ctxf_ref[...]                                   # (B*S, H)
    sbias = sbias_ref[...]                                 # (B, B*S)
    # Attention score projection done ONCE: w_sc[:, b*S+s] = w_in-projected ctx.
    w_sc = jnp.dot(win_ref[...], ctxw_ref[...],
                   preferred_element_type=jnp.float32)     # (H, B*S)
    # Layer-0 embedding contribution + bias as one dense matmul (emb is not
    # loop-carried -> 1/3 of the layer-0 matmul leaves the recurrence).
    emb_pre = jnp.dot(emb2d_ref[...], w0e_ref[...],
                      preferred_element_type=jnp.float32) + b0_ref[...]  # (T*B, 4H)
    w1 = w1_ref[...]                                       # hoisted (8 vregs)
    w1a, w1b = w1[:H], w1[H:]
    b1 = b1_ref[...]
    woutc = woutc_ref[...]
    woutr = woutr_ref[...]
    # NOTE: w0f_ref / w0h_ref intentionally stay in VMEM and are re-read per
    # step (cheap vlds; keeps vreg pressure low in the unrolled recurrence).

    def gates(pre):
        # i/f/o weight+bias columns were pre-scaled by 0.5 in the wrapper, so
        # sigmoid(x) == 0.5*tanh(x/2)+0.5: ONE tanh over the full 4H=128-lane
        # vreg replaces sigmoid(3H)+tanh(H).  The 0.5*t+0.5 runs on the VPU.
        t = jnp.tanh(pre)
        ifo = 0.5 * t[:, :3 * H] + 0.5
        return ifo[:, :H], ifo[:, H:2 * H], ifo[:, 2 * H:3 * H], t[:, 3 * H:]

    h0p, c0p = h0_ref[0], c0_ref[0]
    h1p, c1p = h0_ref[1], c0_ref[1]
    feed = feed0_ref[...]

    outs, attns = [], []
    for t in range(T_):                                    # static, fully unrolled
        # ---- StackedLSTM layer 0: accumulating split dots (no lane concat) --
        pre0 = (emb_pre[t * B_:(t + 1) * B_]
                + jnp.dot(feed, w0f_ref[...], preferred_element_type=jnp.float32)
                + jnp.dot(h0p, w0h_ref[...], preferred_element_type=jnp.float32))
        i0, f0, o0, g0 = gates(pre0)
        c0n = f0 * c0p + i0 * g0
        h0n = o0 * jnp.tanh(c0n)

        # ---- StackedLSTM layer 1 --------------------------------------------
        pre1 = (jnp.dot(h0n, w1a, preferred_element_type=jnp.float32)
                + jnp.dot(h1p, w1b, preferred_element_type=jnp.float32) + b1)
        i1, f1, o1, g1 = gates(pre1)
        c1n = f1 * c1p + i1 * g1
        h1n = o1 * jnp.tanh(c1n)
        rnn_out = h1n                                      # (B, H)

        # ---- GlobalAttention (Luong "general"), all contractions on the MXU -
        scores = jnp.dot(rnn_out, w_sc,
                         preferred_element_type=jnp.float32) + sbias   # (B, B*S)
        # No max-subtraction: scores are bounded (tanh-bounded rnn_out, small
        # ctx/w_in), exp cannot overflow; softmax is shift-invariant.
        e = jnp.exp(scores)                                # off-block -> exactly 0
        a = e / jnp.sum(e, axis=-1, keepdims=True)         # exact softmax (B, B*S)
        weighted = jnp.dot(a, ctxf,
                           preferred_element_type=jnp.float32)          # (B, H)
        attn_out = jnp.tanh(
            jnp.dot(weighted, woutc, preferred_element_type=jnp.float32)
            + jnp.dot(rnn_out, woutr, preferred_element_type=jnp.float32))

        # dropout(p=0) == identity
        outs.append(attn_out)
        attns.append(a)
        h0p, c0p, h1p, c1p, feed = h0n, c0n, h1n, c1n, attn_out

    # Single dense writeback after the recurrence (no per-step masked stores).
    out_ref[...] = jnp.stack(outs).astype(out_ref.dtype)
    attn_ref[...] = jnp.stack(attns).astype(attn_ref.dtype)
    hT_ref[...] = jnp.stack([h0p, h1p]).astype(hT_ref.dtype)
    cT_ref[...] = jnp.stack([c0p, c1p]).astype(cT_ref.dtype)


# ---- wrapper ----------------------------------------------------------------
def decoder_forward(tokens, src, hidden, context, init_feed, params):
    """tokens: (T, B) int32; src unused in the RNN path; hidden = (h, c) each
    (L, B, H); context: (S, B, H); init_feed: (B, H)."""
    del src  # only consumed by the transformer branch of the original module
    h0, c0 = hidden
    E, H, L = WORD_VEC, RNN_SIZE, LAYERS
    Tn, Bn = tokens.shape
    Sn = context.shape[0]

    # Embedding lookup (word_lut) + flatten for the one-shot layer-0 matmul.
    emb2d = params["embedding"][tokens].reshape(Tn * Bn, E)        # (T*B, E)

    # Context in the three layouts the kernel consumes (layout plumbing only).
    ctx_bsh = jnp.transpose(context, (1, 0, 2))                    # (B, S, H)
    ctx_flat = ctx_bsh.reshape(Bn * Sn, H)                         # (B*S, H)
    ctx_wide = jnp.transpose(ctx_bsh, (2, 0, 1)).reshape(H, Bn * Sn)  # (H, B*S)

    # Block-diagonal score bias: query b only attends to its own source block.
    # TODO(synk): fold a real source-length padding mask in here for
    # variable-length OpenNMT batches (all S positions are valid here).
    blk = jnp.repeat(jnp.arange(Bn), Sn)
    sbias = jnp.where(jnp.arange(Bn)[:, None] == blk[None, :],
                      0.0, -1e30).astype(jnp.float32)              # (B, B*S)

    # PyTorch LSTM gate order [i, f, g, o] -> [i, f, o, g], and scale the i/f/o
    # weight+bias columns by 0.5 so one tanh evaluates all gates in the kernel.
    perm = jnp.concatenate([jnp.arange(0, 2 * H),
                            jnp.arange(3 * H, 4 * H),
                            jnp.arange(2 * H, 3 * H)])
    col_scale = jnp.concatenate([jnp.full((3 * H,), 0.5, jnp.float32),
                                 jnp.ones((H,), jnp.float32)])

    # Layer 0: input is cat([emb, feed]); split rows into emb / feed parts.
    w_ih0_t = params["w_ih0"].T[:, perm] * col_scale               # (E+H, 4H)
    w0e = w_ih0_t[:E]                                              # (E, 4H)
    w0f = w_ih0_t[E:]                                              # (H, 4H)
    w0h = params["w_hh0"].T[:, perm] * col_scale                   # (H, 4H)
    b0 = ((params["b_ih0"] + params["b_hh0"])[perm] * col_scale).reshape(1, 4 * H)
    # Layer 1: fused [W_ih ; W_hh]^T.
    w1 = jnp.concatenate([params["w_ih1"].T, params["w_hh1"].T],
                         axis=0)[:, perm] * col_scale              # (2H, 4H)
    b1 = ((params["b_ih1"] + params["b_hh1"])[perm] * col_scale).reshape(1, 4 * H)

    win = params["w_in"].T                                         # (H, H)
    wout_t = params["w_out"].T                                     # (2H, H)
    woutc, woutr = wout_t[:H], wout_t[H:]

    vmem = pl.BlockSpec(memory_space=pltpu.MemorySpace.VMEM)

    outputs, attn_wide, h_t, c_t = pl.pallas_call(
        decoder_kernel,
        out_shape=(
            jax.ShapeDtypeStruct((Tn, Bn, H), jnp.float32),
            jax.ShapeDtypeStruct((Tn, Bn, Bn * Sn), jnp.float32),
            jax.ShapeDtypeStruct((L, Bn, H), jnp.float32),
            jax.ShapeDtypeStruct((L, Bn, H), jnp.float32),
        ),
        in_specs=[vmem] * 16,
        out_specs=(vmem, vmem, vmem, vmem),
    )(emb2d, ctx_wide, ctx_flat, h0, c0, init_feed,
      w0e, w0f, w0h, b0, w1, b1, win, woutc, woutr, sbias)

    # Extract each query's own source block of the block-diagonal attention.
    attn_std = jnp.stack(
        [attn_wide[:, b, b * Sn:(b + 1) * Sn] for b in range(Bn)], axis=1)

    return outputs, (h_t, c_t), {"std": attn_std}


# ---- deterministic parameter init (shapes follow the module's __init__) -----
def init_params(key):
    ks = jax.random.split(key, 11)

    def unif(k, shape, bound):
        return jax.random.uniform(k, shape, jnp.float32, -bound, bound)

    kb = 1.0 / math.sqrt(RNN_SIZE)
    emb = jax.random.normal(ks[0], (VOCAB, WORD_VEC), jnp.float32)
    emb = emb.at[PAD].set(0.0)                         # padding_idx row = 0
    params = {
        "embedding": emb,
        # LSTMCell 0: input_size = word_vec + rnn_size (input feed)
        "w_ih0": unif(ks[1], (4 * RNN_SIZE, WORD_VEC + RNN_SIZE), kb),
        "w_hh0": unif(ks[2], (4 * RNN_SIZE, RNN_SIZE), kb),
        "b_ih0": unif(ks[3], (4 * RNN_SIZE,), kb),
        "b_hh0": unif(ks[4], (4 * RNN_SIZE,), kb),
        # LSTMCell 1: input_size = rnn_size
        "w_ih1": unif(ks[5], (4 * RNN_SIZE, RNN_SIZE), kb),
        "w_hh1": unif(ks[6], (4 * RNN_SIZE, RNN_SIZE), kb),
        "b_ih1": unif(ks[7], (4 * RNN_SIZE,), kb),
        "b_hh1": unif(ks[8], (4 * RNN_SIZE,), kb),
        # GlobalAttention: linear_in (H,H no bias), linear_out (H, 2H no bias)
        "w_in": unif(ks[9], (RNN_SIZE, RNN_SIZE), 1.0 / math.sqrt(RNN_SIZE)),
        "w_out": unif(ks[10], (RNN_SIZE, 2 * RNN_SIZE), 1.0 / math.sqrt(2 * RNN_SIZE)),
    }
    return params


# ---- pure-JAX reference (semantics check) ------------------------------------
def decoder_reference(tokens, hidden, context, init_feed, p):
    emb = p["embedding"][tokens]
    ctx = jnp.transpose(context, (1, 0, 2))
    h, c = hidden
    feed = init_feed
    outs, attns = [], []
    hp = lambda a, b: jnp.dot(a, b, precision=jax.lax.Precision.HIGHEST)
    for t in range(tokens.shape[0]):
        x = jnp.concatenate([emb[t], feed], axis=1)
        g = hp(x, p["w_ih0"].T) + p["b_ih0"] + hp(h[0], p["w_hh0"].T) + p["b_hh0"]
        i, f, gg, o = jnp.split(g, 4, axis=1)
        c0n = jax.nn.sigmoid(f) * c[0] + jax.nn.sigmoid(i) * jnp.tanh(gg)
        h0n = jax.nn.sigmoid(o) * jnp.tanh(c0n)
        g = hp(h0n, p["w_ih1"].T) + p["b_ih1"] + hp(h[1], p["w_hh1"].T) + p["b_hh1"]
        i, f, gg, o = jnp.split(g, 4, axis=1)
        c1n = jax.nn.sigmoid(f) * c[1] + jax.nn.sigmoid(i) * jnp.tanh(gg)
        h1n = jax.nn.sigmoid(o) * jnp.tanh(c1n)
        h = jnp.stack([h0n, h1n])
        c = jnp.stack([c0n, c1n])
        rnn_out = h1n
        target = hp(rnn_out, p["w_in"].T)
        scores = jnp.einsum("bsh,bh->bs", ctx, target,
                            precision=jax.lax.Precision.HIGHEST)
        a = jax.nn.softmax(scores, axis=-1)
        weighted = jnp.einsum("bs,bsh->bh", a, ctx,
                              precision=jax.lax.Precision.HIGHEST)
        attn_out = jnp.tanh(hp(jnp.concatenate([weighted, rnn_out], 1), p["w_out"].T))
        feed = attn_out
        outs.append(attn_out)
        attns.append(a)
    return jnp.stack(outs), (h, c), jnp.stack(attns)


if __name__ == "__main__":
    key = jax.random.PRNGKey(0)
    kp, kt, kh, kc, kf, kx = jax.random.split(key, 6)
    params = init_params(kp)

    tokens = jax.random.randint(kt, (T, B), 1, VOCAB, dtype=jnp.int32)   # (len, batch)
    src = jnp.zeros((S, B, 1), jnp.int32)                                # unused (RNN path)
    h0 = 0.1 * jax.random.normal(kh, (LAYERS, B, RNN_SIZE), jnp.float32)
    c0 = 0.1 * jax.random.normal(kc, (LAYERS, B, RNN_SIZE), jnp.float32)
    init_feed = 0.1 * jax.random.normal(kf, (B, RNN_SIZE), jnp.float32)
    context = 0.1 * jax.random.normal(kx, (S, B, RNN_SIZE), jnp.float32)

    outputs, (h_t, c_t), attns = decoder_forward(
        tokens, src, (h0, c0), context, init_feed, params)
    jax.block_until_ready(outputs)

    ref_out, (ref_h, ref_c), ref_attn = decoder_reference(
        tokens, (h0, c0), context, init_feed, params)

    assert outputs.shape == (T, B, RNN_SIZE)
    assert attns["std"].shape == (T, B, S)
    assert jnp.allclose(outputs, ref_out, atol=1e-2, rtol=1e-2)
    assert jnp.allclose(attns["std"], ref_attn, atol=1e-2, rtol=1e-2)
    assert jnp.allclose(h_t, ref_h, atol=1e-2, rtol=1e-2)
    assert jnp.allclose(c_t, ref_c, atol=1e-2, rtol=1e-2)

    print("KERNEL_OK")
</pallas_src>

<mosaic_0001>
module attributes {stable_mosaic.version = 11 : i64} {
  func.func @decoder_kernel(%arg0: memref<16x32xf32, #tpu.memory_space<vmem>>, %arg1: memref<32x20xf32, #tpu.memory_space<vmem>>, %arg2: memref<20x32xf32, #tpu.memory_space<vmem>>, %arg3: memref<2x2x32xf32, #tpu.memory_space<vmem>>, %arg4: memref<2x2x32xf32, #tpu.memory_space<vmem>>, %arg5: memref<2x32xf32, #tpu.memory_space<vmem>>, %arg6: memref<32x128xf32, #tpu.memory_space<vmem>>, %arg7: memref<32x128xf32, #tpu.memory_space<vmem>>, %arg8: memref<32x128xf32, #tpu.memory_space<vmem>>, %arg9: memref<1x128xf32, #tpu.memory_space<vmem>>, %arg10: memref<64x128xf32, #tpu.memory_space<vmem>>, %arg11: memref<1x128xf32, #tpu.memory_space<vmem>>, %arg12: memref<32x32xf32, #tpu.memory_space<vmem>>, %arg13: memref<32x32xf32, #tpu.memory_space<vmem>>, %arg14: memref<32x32xf32, #tpu.memory_space<vmem>>, %arg15: memref<2x20xf32, #tpu.memory_space<vmem>>, %arg16: memref<8x2x32xf32, #tpu.memory_space<vmem>>, %arg17: memref<8x2x20xf32, #tpu.memory_space<vmem>>, %arg18: memref<2x2x32xf32, #tpu.memory_space<vmem>>, %arg19: memref<2x2x32xf32, #tpu.memory_space<vmem>>) attributes {dimension_semantics = [], scalar_prefetch = 0 : i64, scratch_operands = 0 : i64, tpu.core_type = #tpu.core_type<tc>} {
    %c0 = arith.constant 0 : index
    %c0_0 = arith.constant 0 : index
    %0 = vector.load %arg2[%c0, %c0_0] : memref<20x32xf32, #tpu.memory_space<vmem>>, vector<20x32xf32>
    %c0_1 = arith.constant 0 : index
    %c0_2 = arith.constant 0 : index
    %1 = vector.load %arg15[%c0_1, %c0_2] : memref<2x20xf32, #tpu.memory_space<vmem>>, vector<2x20xf32>
    %c0_3 = arith.constant 0 : index
    %c0_4 = arith.constant 0 : index
    %2 = vector.load %arg12[%c0_3, %c0_4] : memref<32x32xf32, #tpu.memory_space<vmem>>, vector<32x32xf32>
    %c0_5 = arith.constant 0 : index
    %c0_6 = arith.constant 0 : index
    %3 = vector.load %arg1[%c0_5, %c0_6] : memref<32x20xf32, #tpu.memory_space<vmem>>, vector<32x20xf32>
    %cst = arith.constant dense<0.000000e+00> : vector<32x20xf32>
    %4 = tpu.matmul %2, %3, %cst {dimension_numbers = #tpu.dot_dimension_numbers<[1], [0], [0], [1], [0, 0, 1, 1], [], []>} : vector<32x32xf32>, vector<32x20xf32>, vector<32x20xf32> -> vector<32x20xf32>
    %c0_7 = arith.constant 0 : index
    %c0_8 = arith.constant 0 : index
    %5 = vector.load %arg0[%c0_7, %c0_8] : memref<16x32xf32, #tpu.memory_space<vmem>>, vector<16x32xf32>
    %c0_9 = arith.constant 0 : index
    %c0_10 = arith.constant 0 : index
    %6 = vector.load %arg6[%c0_9, %c0_10] : memref<32x128xf32, #tpu.memory_space<vmem>>, vector<32x128xf32>
    %cst_11 = arith.constant dense<0.000000e+00> : vector<16x128xf32>
    %7 = tpu.matmul %5, %6, %cst_11 {dimension_numbers = #tpu.dot_dimension_numbers<[1], [0], [0], [1], [0, 0, 1, 1], [], []>} : vector<16x32xf32>, vector<32x128xf32>, vector<16x128xf32> -> vector<16x128xf32>
    %c0_12 = arith.constant 0 : index
    %c0_13 = arith.constant 0 : index
    %8 = vector.load %arg9[%c0_12, %c0_13] : memref<1x128xf32, #tpu.memory_space<vmem>>, vector<1x128xf32>
    %9 = vector.broadcast %8 : vector<1x128xf32> to vector<16x128xf32>
    %10 = arith.addf %7, %9 : vector<16x128xf32>
    %c0_14 = arith.constant 0 : index
    %c0_15 = arith.constant 0 : index
    %11 = vector.load %arg10[%c0_14, %c0_15] : memref<64x128xf32, #tpu.memory_space<vmem>>, vector<64x128xf32>
    %12 = vector.extract_strided_slice %11 {offsets = [0, 0], sizes = [32, 128], strides = [1, 1]} : vector<64x128xf32> to vector<32x128xf32>
    %13 = vector.extract_strided_slice %11 {offsets = [32, 0], sizes = [32, 128], strides = [1, 1]} : vector<64x128xf32> to vector<32x128xf32>
    %c0_16 = arith.constant 0 : index
    %c0_17 = arith.constant 0 : index
    %14 = vector.load %arg11[%c0_16, %c0_17] : memref<1x128xf32, #tpu.memory_space<vmem>>, vector<1x128xf32>
    %c0_18 = arith.constant 0 : index
    %c0_19 = arith.constant 0 : index
    %15 = vector.load %arg13[%c0_18, %c0_19] : memref<32x32xf32, #tpu.memory_space<vmem>>, vector<32x32xf32>
    %c0_20 = arith.constant 0 : index
    %c0_21 = arith.constant 0 : index
    %16 = vector.load %arg14[%c0_20, %c0_21] : memref<32x32xf32, #tpu.memory_space<vmem>>, vector<32x32xf32>
    %c0_22 = arith.constant 0 : index
    %c0_23 = arith.constant 0 : index
    %c0_24 = arith.constant 0 : index
    %17 = vector.load %arg3[%c0_22, %c0_23, %c0_24] : memref<2x2x32xf32, #tpu.memory_space<vmem>>, vector<1x2x32xf32>
    %18 = vector.shape_cast %17 : vector<1x2x32xf32> to vector<2x32xf32>
    %c0_25 = arith.constant 0 : index
    %c0_26 = arith.constant 0 : index
    %c0_27 = arith.constant 0 : index
    %19 = vector.load %arg4[%c0_25, %c0_26, %c0_27] : memref<2x2x32xf32, #tpu.memory_space<vmem>>, vector<1x2x32xf32>
    %20 = vector.shape_cast %19 : vector<1x2x32xf32> to vector<2x32xf32>
    %c1 = arith.constant 1 : index
    %c0_28 = arith.constant 0 : index
    %c0_29 = arith.constant 0 : index
    %21 = vector.load %arg3[%c1, %c0_28, %c0_29] : memref<2x2x32xf32, #tpu.memory_space<vmem>>, vector<1x2x32xf32>
    %22 = vector.shape_cast %21 : vector<1x2x32xf32> to vector<2x32xf32>
    %c1_30 = arith.constant 1 : index
    %c0_31 = arith.constant 0 : index
    %c0_32 = arith.constant 0 : index
    %23 = vector.load %arg4[%c1_30, %c0_31, %c0_32] : memref<2x2x32xf32, #tpu.memory_space<vmem>>, vector<1x2x32xf32>
    %24 = vector.shape_cast %23 : vector<1x2x32xf32> to vector<2x32xf32>
    %c0_33 = arith.constant 0 : index
    %c0_34 = arith.constant 0 : index
    %25 = vector.load %arg5[%c0_33, %c0_34] : memref<2x32xf32, #tpu.memory_space<vmem>>, vector<2x32xf32>
    %26 = vector.extract_strided_slice %10 {offsets = [0, 0], sizes = [2, 128], strides = [1, 1]} : vector<16x128xf32> to vector<2x128xf32>
    %c0_35 = arith.constant 0 : index
    %c0_36 = arith.constant 0 : index
    %27 = vector.load %arg7[%c0_35, %c0_36] : memref<32x128xf32, #tpu.memory_space<vmem>>, vector<32x128xf32>
    %cst_37 = arith.constant dense<0.000000e+00> : vector<2x128xf32>
    %28 = tpu.matmul %25, %27, %cst_37 {dimension_numbers = #tpu.dot_dimension_numbers<[1], [0], [0], [1], [0, 0, 1, 1], [], []>} : vector<2x32xf32>, vector<32x128xf32>, vector<2x128xf32> -> vector<2x128xf32>
    %29 = arith.addf %26, %28 : vector<2x128xf32>
    %c0_38 = arith.constant 0 : index
    %c0_39 = arith.constant 0 : index
    %30 = vector.load %arg8[%c0_38, %c0_39] : memref<32x128xf32, #tpu.memory_space<vmem>>, vector<32x128xf32>
    %cst_40 = arith.constant dense<0.000000e+00> : vector<2x128xf32>
    %31 = tpu.matmul %18, %30, %cst_40 {dimension_numbers = #tpu.dot_dimension_numbers<[1], [0], [0], [1], [0, 0, 1, 1], [], []>} : vector<2x32xf32>, vector<32x128xf32>, vector<2x128xf32> -> vector<2x128xf32>
    %32 = arith.addf %29, %31 : vector<2x128xf32>
    %33 = math.tanh %32 : vector<2x128xf32>
    %34 = vector.extract_strided_slice %33 {offsets = [0, 0], sizes = [2, 96], strides = [1, 1]} : vector<2x128xf32> to vector<2x96xf32>
    %cst_41 = arith.constant 5.000000e-01 : f32
    %35 = vector.broadcast %cst_41 : f32 to vector<2x96xf32>
    %36 = arith.mulf %35, %34 : vector<2x96xf32>
    %cst_42 = arith.constant 5.000000e-01 : f32
    %37 = vector.broadcast %cst_42 : f32 to vector<2x96xf32>
    %38 = arith.addf %36, %37 : vector<2x96xf32>
    %39 = vector.extract_strided_slice %38 {offsets = [0, 0], sizes = [2, 32], strides = [1, 1]} : vector<2x96xf32> to vector<2x32xf32>
    %40 = vector.extract_strided_slice %38 {offsets = [0, 32], sizes = [2, 32], strides = [1, 1]} : vector<2x96xf32> to vector<2x32xf32>
    %41 = vector.extract_strided_slice %38 {offsets = [0, 64], sizes = [2, 32], strides = [1, 1]} : vector<2x96xf32> to vector<2x32xf32>
    %42 = vector.extract_strided_slice %33 {offsets = [0, 96], sizes = [2, 32], strides = [1, 1]} : vector<2x128xf32> to vector<2x32xf32>
    %43 = arith.mulf %40, %20 : vector<2x32xf32>
    %44 = arith.mulf %39, %42 : vector<2x32xf32>
    %45 = arith.addf %43, %44 : vector<2x32xf32>
    %46 = math.tanh %45 : vector<2x32xf32>
    %47 = arith.mulf %41, %46 : vector<2x32xf32>
    %cst_43 = arith.constant dense<0.000000e+00> : vector<2x128xf32>
    %48 = tpu.matmul %47, %12, %cst_43 {dimension_numbers = #tpu.dot_dimension_numbers<[1], [0], [0], [1], [0, 0, 1, 1], [], []>} : vector<2x32xf32>, vector<32x128xf32>, vector<2x128xf32> -> vector<2x128xf32>
    %cst_44 = arith.constant dense<0.000000e+00> : vector<2x128xf32>
    %49 = tpu.matmul %22, %13, %cst_44 {dimension_numbers = #tpu.dot_dimension_numbers<[1], [0], [0], [1], [0, 0, 1, 1], [], []>} : vector<2x32xf32>, vector<32x128xf32>, vector<2x128xf32> -> vector<2x128xf32>
    %50 = arith.addf %48, %49 : vector<2x128xf32>
    %51 = vector.broadcast %14 : vector<1x128xf32> to vector<2x128xf32>
    %52 = arith.addf %50, %51 : vector<2x128xf32>
    %53 = math.tanh %52 : vector<2x128xf32>
    %54 = vector.extract_strided_slice %53 {offsets = [0, 0], sizes = [2, 96], strides = [1, 1]} : vector<2x128xf32> to vector<2x96xf32>
    %cst_45 = arith.constant 5.000000e-01 : f32
    %55 = vector.broadcast %cst_45 : f32 to vector<2x96xf32>
    %56 = arith.mulf %55, %54 : vector<2x96xf32>
    %cst_46 = arith.constant 5.000000e-01 : f32
    %57 = vector.broadcast %cst_46 : f32 to vector<2x96xf32>
    %58 = arith.addf %56, %57 : vector<2x96xf32>
    %59 = vector.extract_strided_slice %58 {offsets = [0, 0], sizes = [2, 32], strides = [1, 1]} : vector<2x96xf32> to vector<2x32xf32>
    %60 = vector.extract_strided_slice %58 {offsets = [0, 32], sizes = [2, 32], strides = [1, 1]} : vector<2x96xf32> to vector<2x32xf32>
    %61 = vector.extract_strided_slice %58 {offsets = [0, 64], sizes = [2, 32], strides = [1, 1]} : vector<2x96xf32> to vector<2x32xf32>
    %62 = vector.extract_strided_slice %53 {offsets = [0, 96], sizes = [2, 32], strides = [1, 1]} : vector<2x128xf32> to vector<2x32xf32>
    %63 = arith.mulf %60, %24 : vector<2x32xf32>
    %64 = arith.mulf %59, %62 : vector<2x32xf32>
    %65 = arith.addf %63, %64 : vector<2x32xf32>
    %66 = math.tanh %65 : vector<2x32xf32>
    %67 = arith.mulf %61, %66 : vector<2x32xf32>
    %cst_47 = arith.constant dense<0.000000e+00> : vector<2x20xf32>
    %68 = tpu.matmul %67, %4, %cst_47 {dimension_numbers = #tpu.dot_dimension_numbers<[1], [0], [0], [1], [0, 0, 1, 1], [], []>} : vector<2x32xf32>, vector<32x20xf32>, vector<2x20xf32> -> vector<2x20xf32>
    %69 = arith.addf %68, %1 : vector<2x20xf32>
    %70 = math.exp %69 : vector<2x20xf32>
    %cst_48 = arith.constant dense<0.000000e+00> : vector<2xf32>
    %71 = vector.multi_reduction <add>, %70, %cst_48 [1] : vector<2x20xf32> to vector<2xf32>
    %72 = vector.shape_cast %71 : vector<2xf32> to vector<2x1xf32>
    %73 = vector.broadcast %72 : vector<2x1xf32> to vector<2x20xf32>
    %74 = arith.divf %70, %73 : vector<2x20xf32>
    %cst_49 = arith.constant dense<0.000000e+00> : vector<2x32xf32>
    %75 = tpu.matmul %74, %0, %cst_49 {dimension_numbers = #tpu.dot_dimension_numbers<[1], [0], [0], [1], [0, 0, 1, 1], [], []>} : vector<2x20xf32>, vector<20x32xf32>, vector<2x32xf32> -> vector<2x32xf32>
    %cst_50 = arith.constant dense<0.000000e+00> : vector<2x32xf32>
    %76 = tpu.matmul %75, %15, %cst_50 {dimension_numbers = #tpu.dot_dimension_numbers<[1], [0], [0], [1], [0, 0, 1, 1], [], []>} : vector<2x32xf32>, vector<32x32xf32>, vector<2x32xf32> -> vector<2x32xf32>
    %cst_51 = arith.constant dense<0.000000e+00> : vector<2x32xf32>
    %77 = tpu.matmul %67, %16, %cst_51 {dimension_numbers = #tpu.dot_dimension_numbers<[1], [0], [0], [1], [0, 0, 1, 1], [], []>} : vector<2x32xf32>, vector<32x32xf32>, vector<2x32xf32> -> vector<2x32xf32>
    %78 = arith.addf %76, %77 : vector<2x32xf32>
    %79 = math.tanh %78 : vector<2x32xf32>
    %80 = vector.extract_strided_slice %10 {offsets = [2, 0], sizes = [2, 128], strides = [1, 1]} : vector<16x128xf32> to vector<2x128xf32>
    %c0_52 = arith.constant 0 : index
    %c0_53 = arith.constant 0 : index
    %81 = vector.load %arg7[%c0_52, %c0_53] : memref<32x128xf32, #tpu.memory_space<vmem>>, vector<32x128xf32>
    %cst_54 = arith.constant dense<0.000000e+00> : vector<2x128xf32>
    %82 = tpu.matmul %79, %81, %cst_54 {dimension_numbers = #tpu.dot_dimension_numbers<[1], [0], [0], [1], [0, 0, 1, 1], [], []>} : vector<2x32xf32>, vector<32x128xf32>, vector<2x128xf32> -> vector<2x128xf32>
    %83 = arith.addf %80, %82 : vector<2x128xf32>
    %c0_55 = arith.constant 0 : index
    %c0_56 = arith.constant 0 : index
    %84 = vector.load %arg8[%c0_55, %c0_56] : memref<32x128xf32, #tpu.memory_space<vmem>>, vector<32x128xf32>
    %cst_57 = arith.constant dense<0.000000e+00> : vector<2x128xf32>
    %85 = tpu.matmul %47, %84, %cst_57 {dimension_numbers = #tpu.dot_dimension_numbers<[1], [0], [0], [1], [0, 0, 1, 1], [], []>} : vector<2x32xf32>, vector<32x128xf32>, vector<2x128xf32> -> vector<2x128xf32>
    %86 = arith.addf %83, %85 : vector<2x128xf32>
    %87 = math.tanh %86 : vector<2x128xf32>
    %88 = vector.extract_strided_slice %87 {offsets = [0, 0], sizes = [2, 96], strides = [1, 1]} : vector<2x128xf32> to vector<2x96xf32>
    %cst_58 = arith.constant 5.000000e-01 : f32
    %89 = vector.broadcast %cst_58 : f32 to vector<2x96xf32>
    %90 = arith.mulf %89, %88 : vector<2x96xf32>
    %cst_59 = arith.constant 5.000000e-01 : f32
    %91 = vector.broadcast %cst_59 : f32 to vector<2x96xf32>
    %92 = arith.addf %90, %91 : vector<2x96xf32>
    %93 = vector.extract_strided_slice %92 {offsets = [0, 0], sizes = [2, 32], strides = [1, 1]} : vector<2x96xf32> to vector<2x32xf32>
    %94 = vector.extract_strided_slice %92 {offsets = [0, 32], sizes = [2, 32], strides = [1, 1]} : vector<2x96xf32> to vector<2x32xf32>
    %95 = vector.extract_strided_slice %92 {offsets = [0, 64], sizes = [2, 32], strides = [1, 1]} : vector<2x96xf32> to vector<2x32xf32>
    %96 = vector.extract_strided_slice %87 {offsets = [0, 96], sizes = [2, 32], strides = [1, 1]} : vector<2x128xf32> to vector<2x32xf32>
    %97 = arith.mulf %94, %45 : vector<2x32xf32>
    %98 = arith.mulf %93, %96 : vector<2x32xf32>
    %99 = arith.addf %97, %98 : vector<2x32xf32>
    %100 = math.tanh %99 : vector<2x32xf32>
    %101 = arith.mulf %95, %100 : vector<2x32xf32>
    %cst_60 = arith.constant dense<0.000000e+00> : vector<2x128xf32>
    %102 = tpu.matmul %101, %12, %cst_60 {dimension_numbers = #tpu.dot_dimension_numbers<[1], [0], [0], [1], [0, 0, 1, 1], [], []>} : vector<2x32xf32>, vector<32x128xf32>, vector<2x128xf32> -> vector<2x128xf32>
    %cst_61 = arith.constant dense<0.000000e+00> : vector<2x128xf32>
    %103 = tpu.matmul %67, %13, %cst_61 {dimension_numbers = #tpu.dot_dimension_numbers<[1], [0], [0], [1], [0, 0, 1, 1], [], []>} : vector<2x32xf32>, vector<32x128xf32>, vector<2x128xf32> -> vector<2x128xf32>
    %104 = arith.addf %102, %103 : vector<2x128xf32>
    %105 = vector.broadcast %14 : vector<1x128xf32> to vector<2x128xf32>
    %106 = arith.addf %104, %105 : vector<2x128xf32>
    %107 = math.tanh %106 : vector<2x128xf32>
    %108 = vector.extract_strided_slice %107 {offsets = [0, 0], sizes = [2, 96], strides = [1, 1]} : vector<2x128xf32> to vector<2x96xf32>
    %cst_62 = arith.constant 5.000000e-01 : f32
    %109 = vector.broadcast %cst_62 : f32 to vector<2x96xf32>
    %110 = arith.mulf %109, %108 : vector<2x96xf32>
    %cst_63 = arith.constant 5.000000e-01 : f32
    %111 = vector.broadcast %cst_63 : f32 to vector<2x96xf32>
    %112 = arith.addf %110, %111 : vector<2x96xf32>
    %113 = vector.extract_strided_slice %112 {offsets = [0, 0], sizes = [2, 32], strides = [1, 1]} : vector<2x96xf32> to vector<2x32xf32>
    %114 = vector.extract_strided_slice %112 {offsets = [0, 32], sizes = [2, 32], strides = [1, 1]} : vector<2x96xf32> to vector<2x32xf32>
    %115 = vector.extract_strided_slice %112 {offsets = [0, 64], sizes = [2, 32], strides = [1, 1]} : vector<2x96xf32> to vector<2x32xf32>
    %116 = vector.extract_strided_slice %107 {offsets = [0, 96], sizes = [2, 32], strides = [1, 1]} : vector<2x128xf32> to vector<2x32xf32>
    %117 = arith.mulf %114, %65 : vector<2x32xf32>
    %118 = arith.mulf %113, %116 : vector<2x32xf32>
    %119 = arith.addf %117, %118 : vector<2x32xf32>
    %120 = math.tanh %119 : vector<2x32xf32>
    %121 = arith.mulf %115, %120 : vector<2x32xf32>
    %cst_64 = arith.constant dense<0.000000e+00> : vector<2x20xf32>
    %122 = tpu.matmul %121, %4, %cst_64 {dimension_numbers = #tpu.dot_dimension_numbers<[1], [0], [0], [1], [0, 0, 1, 1], [], []>} : vector<2x32xf32>, vector<32x20xf32>, vector<2x20xf32> -> vector<2x20xf32>
    %123 = arith.addf %122, %1 : vector<2x20xf32>
    %124 = math.exp %123 : vector<2x20xf32>
    %cst_65 = arith.constant dense<0.000000e+00> : vector<2xf32>
    %125 = vector.multi_reduction <add>, %124, %cst_65 [1] : vector<2x20xf32> to vector<2xf32>
    %126 = vector.shape_cast %125 : vector<2xf32> to vector<2x1xf32>
    %127 = vector.broadcast %126 : vector<2x1xf32> to vector<2x20xf32>
    %128 = arith.divf %124, %127 : vector<2x20xf32>
    %cst_66 = arith.constant dense<0.000000e+00> : vector<2x32xf32>
    %129 = tpu.matmul %128, %0, %cst_66 {dimension_numbers = #tpu.dot_dimension_numbers<[1], [0], [0], [1], [0, 0, 1, 1], [], []>} : vector<2x20xf32>, vector<20x32xf32>, vector<2x32xf32> -> vector<2x32xf32>
    %cst_67 = arith.constant dense<0.000000e+00> : vector<2x32xf32>
    %130 = tpu.matmul %129, %15, %cst_67 {dimension_numbers = #tpu.dot_dimension_numbers<[1], [0], [0], [1], [0, 0, 1, 1], [], []>} : vector<2x32xf32>, vector<32x32xf32>, vector<2x32xf32> -> vector<2x32xf32>
    %cst_68 = arith.constant dense<0.000000e+00> : vector<2x32xf32>
    %131 = tpu.matmul %121, %16, %cst_68 {dimension_numbers = #tpu.dot_dimension_numbers<[1], [0], [0], [1], [0, 0, 1, 1], [], []>} : vector<2x32xf32>, vector<32x32xf32>, vector<2x32xf32> -> vector<2x32xf32>
    %132 = arith.addf %130, %131 : vector<2x32xf32>
    %133 = math.tanh %132 : vector<2x32xf32>
    %134 = vector.extract_strided_slice %10 {offsets = [4, 0], sizes = [2, 128], strides = [1, 1]} : vector<16x128xf32> to vector<2x128xf32>
    %c0_69 = arith.constant 0 : index
    %c0_70 = arith.constant 0 : index
    %135 = vector.load %arg7[%c0_69, %c0_70] : memref<32x128xf32, #tpu.memory_space<vmem>>, vector<32x128xf32>
    %cst_71 = arith.constant dense<0.000000e+00> : vector<2x128xf32>
    %136 = tpu.matmul %133, %135, %cst_71 {dimension_numbers = #tpu.dot_dimension_numbers<[1], [0], [0], [1], [0, 0, 1, 1], [], []>} : vector<2x32xf32>, vector<32x128xf32>, vector<2x128xf32> -> vector<2x128xf32>
    %137 = arith.addf %134, %136 : vector<2x128xf32>
    %c0_72 = arith.constant 0 : index
    %c0_73 = arith.constant 0 : index
    %138 = vector.load %arg8[%c0_72, %c0_73] : memref<32x128xf32, #tpu.memory_space<vmem>>, vector<32x128xf32>
    %cst_74 = arith.constant dense<0.000000e+00> : vector<2x128xf32>
    %139 = tpu.matmul %101, %138, %cst_74 {dimension_numbers = #tpu.dot_dimension_numbers<[1], [0], [0], [1], [0, 0, 1, 1], [], []>} : vector<2x32xf32>, vector<32x128xf32>, vector<2x128xf32> -> vector<2x128xf32>
    %140 = arith.addf %137, %139 : vector<2x128xf32>
    %141 = math.tanh %140 : vector<2x128xf32>
    %142 = vector.extract_strided_slice %141 {offsets = [0, 0], sizes = [2, 96], strides = [1, 1]} : vector<2x128xf32> to vector<2x96xf32>
    %cst_75 = arith.constant 5.000000e-01 : f32
    %143 = vector.broadcast %cst_75 : f32 to vector<2x96xf32>
    %144 = arith.mulf %143, %142 : vector<2x96xf32>
    %cst_76 = arith.constant 5.000000e-01 : f32
    %145 = vector.broadcast %cst_76 : f32 to vector<2x96xf32>
    %146 = arith.addf %144, %145 : vector<2x96xf32>
    %147 = vector.extract_strided_slice %146 {offsets = [0, 0], sizes = [2, 32], strides = [1, 1]} : vector<2x96xf32> to vector<2x32xf32>
    %148 = vector.extract_strided_slice %146 {offsets = [0, 32], sizes = [2, 32], strides = [1, 1]} : vector<2x96xf32> to vector<2x32xf32>
    %149 = vector.extract_strided_slice %146 {offsets = [0, 64], sizes = [2, 32], strides = [1, 1]} : vector<2x96xf32> to vector<2x32xf32>
    %150 = vector.extract_strided_slice %141 {offsets = [0, 96], sizes = [2, 32], strides = [1, 1]} : vector<2x128xf32> to vector<2x32xf32>
    %151 = arith.mulf %148, %99 : vector<2x32xf32>
    %152 = arith.mulf %147, %150 : vector<2x32xf32>
    %153 = arith.addf %151, %152 : vector<2x32xf32>
    %154 = math.tanh %153 : vector<2x32xf32>
    %155 = arith.mulf %149, %154 : vector<2x32xf32>
    %cst_77 = arith.constant dense<0.000000e+00> : vector<2x128xf32>
    %156 = tpu.matmul %155, %12, %cst_77 {dimension_numbers = #tpu.dot_dimension_numbers<[1], [0], [0], [1], [0, 0, 1, 1], [], []>} : vector<2x32xf32>, vector<32x128xf32>, vector<2x128xf32> -> vector<2x128xf32>
    %cst_78 = arith.constant dense<0.000000e+00> : vector<2x128xf32>
    %157 = tpu.matmul %121, %13, %cst_78 {dimension_numbers = #tpu.dot_dimension_numbers<[1], [0], [0], [1], [0, 0, 1, 1], [], []>} : vector<2x32xf32>, vector<32x128xf32>, vector<2x128xf32> -> vector<2x128xf32>
    %158 = arith.addf %156, %157 : vector<2x128xf32>
    %159 = vector.broadcast %14 : vector<1x128xf32> to vector<2x128xf32>
    %160 = arith.addf %158, %159 : vector<2x128xf32>
    %161 = math.tanh %160 : vector<2x128xf32>
    %162 = vector.extract_strided_slice %161 {offsets = [0, 0], sizes = [2, 96], strides = [1, 1]} : vector<2x128xf32> to vector<2x96xf32>
    %cst_79 = arith.constant 5.000000e-01 : f32
    %163 = vector.broadcast %cst_79 : f32 to vector<2x96xf32>
    %164 = arith.mulf %163, %162 : vector<2x96xf32>
    %cst_80 = arith.constant 5.000000e-01 : f32
    %165 = vector.broadcast %cst_80 : f32 to vector<2x96xf32>
    %166 = arith.addf %164, %165 : vector<2x96xf32>
    %167 = vector.extract_strided_slice %166 {offsets = [0, 0], sizes = [2, 32], strides = [1, 1]} : vector<2x96xf32> to vector<2x32xf32>
    %168 = vector.extract_strided_slice %166 {offsets = [0, 32], sizes = [2, 32], strides = [1, 1]} : vector<2x96xf32> to vector<2x32xf32>
    %169 = vector.extract_strided_slice %166 {offsets = [0, 64], sizes = [2, 32], strides = [1, 1]} : vector<2x96xf32> to vector<2x32xf32>
    %170 = vector.extract_strided_slice %161 {offsets = [0, 96], sizes = [2, 32], strides = [1, 1]} : vector<2x128xf32> to vector<2x32xf32>
    %171 = arith.mulf %168, %119 : vector<2x32xf32>
    %172 = arith.mulf %167, %170 : vector<2x32xf32>
    %173 = arith.addf %171, %172 : vector<2x32xf32>
    %174 = math.tanh %173 : vector<2x32xf32>
    %175 = arith.mulf %169, %174 : vector<2x32xf32>
    %cst_81 = arith.constant dense<0.000000e+00> : vector<2x20xf32>
    %176 = tpu.matmul %175, %4, %cst_81 {dimension_numbers = #tpu.dot_dimension_numbers<[1], [0], [0], [1], [0, 0, 1, 1], [], []>} : vector<2x32xf32>, vector<32x20xf32>, vector<2x20xf32> -> vector<2x20xf32>
    %177 = arith.addf %176, %1 : vector<2x20xf32>
    %178 = math.exp %177 : vector<2x20xf32>
    %cst_82 = arith.constant dense<0.000000e+00> : vector<2xf32>
    %179 = vector.multi_reduction <add>, %178, %cst_82 [1] : vector<2x20xf32> to vector<2xf32>
    %180 = vector.shape_cast %179 : vector<2xf32> to vector<2x1xf32>
    %181 = vector.broadcast %180 : vector<2x1xf32> to vector<2x20xf32>
    %182 = arith.divf %178, %181 : vector<2x20xf32>
    %cst_83 = arith.constant dense<0.000000e+00> : vector<2x32xf32>
    %183 = tpu.matmul %182, %0, %cst_83 {dimension_numbers = #tpu.dot_dimension_numbers<[1], [0], [0], [1], [0, 0, 1, 1], [], []>} : vector<2x20xf32>, vector<20x32xf32>, vector<2x32xf32> -> vector<2x32xf32>
    %cst_84 = arith.constant dense<0.000000e+00> : vector<2x32xf32>
    %184 = tpu.matmul %183, %15, %cst_84 {dimension_numbers = #tpu.dot_dimension_numbers<[1], [0], [0], [1], [0, 0, 1, 1], [], []>} : vector<2x32xf32>, vector<32x32xf32>, vector<2x32xf32> -> vector<2x32xf32>
    %cst_85 = arith.constant dense<0.000000e+00> : vector<2x32xf32>
    %185 = tpu.matmul %175, %16, %cst_85 {dimension_numbers = #tpu.dot_dimension_numbers<[1], [0], [0], [1], [0, 0, 1, 1], [], []>} : vector<2x32xf32>, vector<32x32xf32>, vector<2x32xf32> -> vector<2x32xf32>
    %186 = arith.addf %184, %185 : vector<2x32xf32>
    %187 = math.tanh %186 : vector<2x32xf32>
    %188 = vector.extract_strided_slice %10 {offsets = [6, 0], sizes = [2, 128], strides = [1, 1]} : vector<16x128xf32> to vector<2x128xf32>
    %c0_86 = arith.constant 0 : index
    %c0_87 = arith.constant 0 : index
    %189 = vector.load %arg7[%c0_86, %c0_87] : memref<32x128xf32, #tpu.memory_space<vmem>>, vector<32x128xf32>
    %cst_88 = arith.constant dense<0.000000e+00> : vector<2x128xf32>
    %190 = tpu.matmul %187, %189, %cst_88 {dimension_numbers = #tpu.dot_dimension_numbers<[1], [0], [0], [1], [0, 0, 1, 1], [], []>} : vector<2x32xf32>, vector<32x128xf32>, vector<2x128xf32> -> vector<2x128xf32>
    %191 = arith.addf %188, %190 : vector<2x128xf32>
    %c0_89 = arith.constant 0 : index
    %c0_90 = arith.constant 0 : index
    %192 = vector.load %arg8[%c0_89, %c0_90] : memref<32x128xf32, #tpu.memory_space<vmem>>, vector<32x128xf32>
    %cst_91 = arith.constant dense<0.000000e+00> : vector<2x128xf32>
    %193 = tpu.matmul %155, %192, %cst_91 {dimension_numbers = #tpu.dot_dimension_numbers<[1], [0], [0], [1], [0, 0, 1, 1], [], []>} : vector<2x32xf32>, vector<32x128xf32>, vector<2x128xf32> -> vector<2x128xf32>
    %194 = arith.addf %191, %193 : vector<2x128xf32>
    %195 = math.tanh %194 : vector<2x128xf32>
    %196 = vector.extract_strided_slice %195 {offsets = [0, 0], sizes = [2, 96], strides = [1, 1]} : vector<2x128xf32> to vector<2x96xf32>
    %cst_92 = arith.constant 5.000000e-01 : f32
    %197 = vector.broadcast %cst_92 : f32 to vector<2x96xf32>
    %198 = arith.mulf %197, %196 : vector<2x96xf32>
    %cst_93 = arith.constant 5.000000e-01 : f32
    %199 = vector.broadcast %cst_93 : f32 to vector<2x96xf32>
    %200 = arith.addf %198, %199 : vector<2x96xf32>
    %201 = vector.extract_strided_slice %200 {offsets = [0, 0], sizes = [2, 32], strides = [1, 1]} : vector<2x96xf32> to vector<2x32xf32>
    %202 = vector.extract_strided_slice %200 {offsets = [0, 32], sizes = [2, 32], strides = [1, 1]} : vector<2x96xf32> to vector<2x32xf32>
    %203 = vector.extract_strided_slice %200 {offsets = [0, 64], sizes = [2, 32], strides = [1, 1]} : vector<2x96xf32> to vector<2x32xf32>
    %204 = vector.extract_strided_slice %195 {offsets = [0, 96], sizes = [2, 32], strides = [1, 1]} : vector<2x128xf32> to vector<2x32xf32>
    %205 = arith.mulf %202, %153 : vector<2x32xf32>
    %206 = arith.mulf %201, %204 : vector<2x32xf32>
    %207 = arith.addf %205, %206 : vector<2x32xf32>
    %208 = math.tanh %207 : vector<2x32xf32>
    %209 = arith.mulf %203, %208 : vector<2x32xf32>
    %cst_94 = arith.constant dense<0.000000e+00> : vector<2x128xf32>
    %210 = tpu.matmul %209, %12, %cst_94 {dimension_numbers = #tpu.dot_dimension_numbers<[1], [0], [0], [1], [0, 0, 1, 1], [], []>} : vector<2x32xf32>, vector<32x128xf32>, vector<2x128xf32> -> vector<2x128xf32>
    %cst_95 = arith.constant dense<0.000000e+00> : vector<2x128xf32>
    %211 = tpu.matmul %175, %13, %cst_95 {dimension_numbers = #tpu.dot_dimension_numbers<[1], [0], [0], [1], [0, 0, 1, 1], [], []>} : vector<2x32xf32>, vector<32x128xf32>, vector<2x128xf32> -> vector<2x128xf32>
    %212 = arith.addf %210, %211 : vector<2x128xf32>
    %213 = vector.broadcast %14 : vector<1x128xf32> to vector<2x128xf32>
    %214 = arith.addf %212, %213 : vector<2x128xf32>
    %215 = math.tanh %214 : vector<2x128xf32>
    %216 = vector.extract_strided_slice %215 {offsets = [0, 0], sizes = [2, 96], strides = [1, 1]} : vector<2x128xf32> to vector<2x96xf32>
    %cst_96 = arith.constant 5.000000e-01 : f32
    %217 = vector.broadcast %cst_96 : f32 to vector<2x96xf32>
    %218 = arith.mulf %217, %216 : vector<2x96xf32>
    %cst_97 = arith.constant 5.000000e-01 : f32
    %219 = vector.broadcast %cst_97 : f32 to vector<2x96xf32>
    %220 = arith.addf %218, %219 : vector<2x96xf32>
    %221 = vector.extract_strided_slice %220 {offsets = [0, 0], sizes = [2, 32], strides = [1, 1]} : vector<2x96xf32> to vector<2x32xf32>
    %222 = vector.extract_strided_slice %220 {offsets = [0, 32], sizes = [2, 32], strides = [1, 1]} : vector<2x96xf32> to vector<2x32xf32>
    %223 = vector.extract_strided_slice %220 {offsets = [0, 64], sizes = [2, 32], strides = [1, 1]} : vector<2x96xf32> to vector<2x32xf32>
    %224 = vector.extract_strided_slice %215 {offsets = [0, 96], sizes = [2, 32], strides = [1, 1]} : vector<2x128xf32> to vector<2x32xf32>
    %225 = arith.mulf %222, %173 : vector<2x32xf32>
    %226 = arith.mulf %221, %224 : vector<2x32xf32>
    %227 = arith.addf %225, %226 : vector<2x32xf32>
    %228 = math.tanh %227 : vector<2x32xf32>
    %229 = arith.mulf %223, %228 : vector<2x32xf32>
    %cst_98 = arith.constant dense<0.000000e+00> : vector<2x20xf32>
    %230 = tpu.matmul %229, %4, %cst_98 {dimension_numbers = #tpu.dot_dimension_numbers<[1], [0], [0], [1], [0, 0, 1, 1], [], []>} : vector<2x32xf32>, vector<32x20xf32>, vector<2x20xf32> -> vector<2x20xf32>
    %231 = arith.addf %230, %1 : vector<2x20xf32>
    %232 = math.exp %231 : vector<2x20xf32>
    %cst_99 = arith.constant dense<0.000000e+00> : vector<2xf32>
    %233 = vector.multi_reduction <add>, %232, %cst_99 [1] : vector<2x20xf32> to vector<2xf32>
    %234 = vector.shape_cast %233 : vector<2xf32> to vector<2x1xf32>
    %235 = vector.broadcast %234 : vector<2x1xf32> to vector<2x20xf32>
    %236 = arith.divf %232, %235 : vector<2x20xf32>
    %cst_100 = arith.constant dense<0.000000e+00> : vector<2x32xf32>
    %237 = tpu.matmul %236, %0, %cst_100 {dimension_numbers = #tpu.dot_dimension_numbers<[1], [0], [0], [1], [0, 0, 1, 1], [], []>} : vector<2x20xf32>, vector<20x32xf32>, vector<2x32xf32> -> vector<2x32xf32>
    %cst_101 = arith.constant dense<0.000000e+00> : vector<2x32xf32>
    %238 = tpu.matmul %237, %15, %cst_101 {dimension_numbers = #tpu.dot_dimension_numbers<[1], [0], [0], [1], [0, 0, 1, 1], [], []>} : vector<2x32xf32>, vector<32x32xf32>, vector<2x32xf32> -> vector<2x32xf32>
    %cst_102 = arith.constant dense<0.000000e+00> : vector<2x32xf32>
    %239 = tpu.matmul %229, %16, %cst_102 {dimension_numbers = #tpu.dot_dimension_numbers<[1], [0], [0], [1], [0, 0, 1, 1], [], []>} : vector<2x32xf32>, vector<32x32xf32>, vector<2x32xf32> -> vector<2x32xf32>
    %240 = arith.addf %238, %239 : vector<2x32xf32>
    %241 = math.tanh %240 : vector<2x32xf32>
    %242 = vector.extract_strided_slice %10 {offsets = [8, 0], sizes = [2, 128], strides = [1, 1]} : vector<16x128xf32> to vector<2x128xf32>
    %c0_103 = arith.constant 0 : index
    %c0_104 = arith.constant 0 : index
    %243 = vector.load %arg7[%c0_103, %c0_104] : memref<32x128xf32, #tpu.memory_space<vmem>>, vector<32x128xf32>
    %cst_105 = arith.constant dense<0.000000e+00> : vector<2x128xf32>
    %244 = tpu.matmul %241, %243, %cst_105 {dimension_numbers = #tpu.dot_dimension_numbers<[1], [0], [0], [1], [0, 0, 1, 1], [], []>} : vector<2x32xf32>, vector<32x128xf32>, vector<2x128xf32> -> vector<2x128xf32>
    %245 = arith.addf %242, %244 : vector<2x128xf32>
    %c0_106 = arith.constant 0 : index
    %c0_107 = arith.constant 0 : index
    %246 = vector.load %arg8[%c0_106, %c0_107] : memref<32x128xf32, #tpu.memory_space<vmem>>, vector<32x128xf32>
    %cst_108 = arith.constant dense<0.000000e+00> : vector<2x128xf32>
    %247 = tpu.matmul %209, %246, %cst_108 {dimension_numbers = #tpu.dot_dimension_numbers<[1], [0], [0], [1], [0, 0, 1, 1], [], []>} : vector<2x32xf32>, vector<32x128xf32>, vector<2x128xf32> -> vector<2x128xf32>
    %248 = arith.addf %245, %247 : vector<2x128xf32>
    %249 = math.tanh %248 : vector<2x128xf32>
    %250 = vector.extract_strided_slice %249 {offsets = [0, 0], sizes = [2, 96], strides = [1, 1]} : vector<2x128xf32> to vector<2x96xf32>
    %cst_109 = arith.constant 5.000000e-01 : f32
    %251 = vector.broadcast %cst_109 : f32 to vector<2x96xf32>
    %252 = arith.mulf %251, %250 : vector<2x96xf32>
    %cst_110 = arith.constant 5.000000e-01 : f32
    %253 = vector.broadcast %cst_110 : f32 to vector<2x96xf32>
    %254 = arith.addf %252, %253 : vector<2x96xf32>
    %255 = vector.extract_strided_slice %254 {offsets = [0, 0], sizes = [2, 32], strides = [1, 1]} : vector<2x96xf32> to vector<2x32xf32>
    %256 = vector.extract_strided_slice %254 {offsets = [0, 32], sizes = [2, 32], strides = [1, 1]} : vector<2x96xf32> to vector<2x32xf32>
    %257 = vector.extract_strided_slice %254 {offsets = [0, 64], sizes = [2, 32], strides = [1, 1]} : vector<2x96xf32> to vector<2x32xf32>
    %258 = vector.extract_strided_slice %249 {offsets = [0, 96], sizes = [2, 32], strides = [1, 1]} : vector<2x128xf32> to vector<2x32xf32>
    %259 = arith.mulf %256, %207 : vector<2x32xf32>
    %260 = arith.mulf %255, %258 : vector<2x32xf32>
    %261 = arith.addf %259, %260 : vector<2x32xf32>
    %262 = math.tanh %261 : vector<2x32xf32>
    %263 = arith.mulf %257, %262 : vector<2x32xf32>
    %cst_111 = arith.constant dense<0.000000e+00> : vector<2x128xf32>
    %264 = tpu.matmul %263, %12, %cst_111 {dimension_numbers = #tpu.dot_dimension_numbers<[1], [0], [0], [1], [0, 0, 1, 1], [], []>} : vector<2x32xf32>, vector<32x128xf32>, vector<2x128xf32> -> vector<2x128xf32>
    %cst_112 = arith.constant dense<0.000000e+00> : vector<2x128xf32>
    %265 = tpu.matmul %229, %13, %cst_112 {dimension_numbers = #tpu.dot_dimension_numbers<[1], [0], [0], [1], [0, 0, 1, 1], [], []>} : vector<2x32xf32>, vector<32x128xf32>, vector<2x128xf32> -> vector<2x128xf32>
    %266 = arith.addf %264, %265 : vector<2x128xf32>
    %267 = vector.broadcast %14 : vector<1x128xf32> to vector<2x128xf32>
    %268 = arith.addf %266, %267 : vector<2x128xf32>
    %269 = math.tanh %268 : vector<2x128xf32>
    %270 = vector.extract_strided_slice %269 {offsets = [0, 0], sizes = [2, 96], strides = [1, 1]} : vector<2x128xf32> to vector<2x96xf32>
    %cst_113 = arith.constant 5.000000e-01 : f32
    %271 = vector.broadcast %cst_113 : f32 to vector<2x96xf32>
    %272 = arith.mulf %271, %270 : vector<2x96xf32>
    %cst_114 = arith.constant 5.000000e-01 : f32
    %273 = vector.broadcast %cst_114 : f32 to vector<2x96xf32>
    %274 = arith.addf %272, %273 : vector<2x96xf32>
    %275 = vector.extract_strided_slice %274 {offsets = [0, 0], sizes = [2, 32], strides = [1, 1]} : vector<2x96xf32> to vector<2x32xf32>
    %276 = vector.extract_strided_slice %274 {offsets = [0, 32], sizes = [2, 32], strides = [1, 1]} : vector<2x96xf32> to vector<2x32xf32>
    %277 = vector.extract_strided_slice %274 {offsets = [0, 64], sizes = [2, 32], strides = [1, 1]} : vector<2x96xf32> to vector<2x32xf32>
    %278 = vector.extract_strided_slice %269 {offsets = [0, 96], sizes = [2, 32], strides = [1, 1]} : vector<2x128xf32> to vector<2x32xf32>
    %279 = arith.mulf %276, %227 : vector<2x32xf32>
    %280 = arith.mulf %275, %278 : vector<2x32xf32>
    %281 = arith.addf %279, %280 : vector<2x32xf32>
    %282 = math.tanh %281 : vector<2x32xf32>
    %283 = arith.mulf %277, %282 : vector<2x32xf32>
    %cst_115 = arith.constant dense<0.000000e+00> : vector<2x20xf32>
    %284 = tpu.matmul %283, %4, %cst_115 {dimension_numbers = #tpu.dot_dimension_numbers<[1], [0], [0], [1], [0, 0, 1, 1], [], []>} : vector<2x32xf32>, vector<32x20xf32>, vector<2x20xf32> -> vector<2x20xf32>
    %285 = arith.addf %284, %1 : vector<2x20xf32>
    %286 = math.exp %285 : vector<2x20xf32>
    %cst_116 = arith.constant dense<0.000000e+00> : vector<2xf32>
    %287 = vector.multi_reduction <add>, %286, %cst_116 [1] : vector<2x20xf32> to vector<2xf32>
    %288 = vector.shape_cast %287 : vector<2xf32> to vector<2x1xf32>
    %289 = vector.broadcast %288 : vector<2x1xf32> to vector<2x20xf32>
    %290 = arith.divf %286, %289 : vector<2x20xf32>
    %cst_117 = arith.constant dense<0.000000e+00> : vector<2x32xf32>
    %291 = tpu.matmul %290, %0, %cst_117 {dimension_numbers = #tpu.dot_dimension_numbers<[1], [0], [0], [1], [0, 0, 1, 1], [], []>} : vector<2x20xf32>, vector<20x32xf32>, vector<2x32xf32> -> vector<2x32xf32>
    %cst_118 = arith.constant dense<0.000000e+00> : vector<2x32xf32>
    %292 = tpu.matmul %291, %15, %cst_118 {dimension_numbers = #tpu.dot_dimension_numbers<[1], [0], [0], [1], [0, 0, 1, 1], [], []>} : vector<2x32xf32>, vector<32x32xf32>, vector<2x32xf32> -> vector<2x32xf32>
    %cst_119 = arith.constant dense<0.000000e+00> : vector<2x32xf32>
    %293 = tpu.matmul %283, %16, %cst_119 {dimension_numbers = #tpu.dot_dimension_numbers<[1], [0], [0], [1], [0, 0, 1, 1], [], []>} : vector<2x32xf32>, vector<32x32xf32>, vector<2x32xf32> -> vector<2x32xf32>
    %294 = arith.addf %292, %293 : vector<2x32xf32>
    %295 = math.tanh %294 : vector<2x32xf32>
    %296 = vector.extract_strided_slice %10 {offsets = [10, 0], sizes = [2, 128], strides = [1, 1]} : vector<16x128xf32> to vector<2x128xf32>
    %c0_120 = arith.constant 0 : index
    %c0_121 = arith.constant 0 : index
    %297 = vector.load %arg7[%c0_120, %c0_121] : memref<32x128xf32, #tpu.memory_space<vmem>>, vector<32x128xf32>
    %cst_122 = arith.constant dense<0.000000e+00> : vector<2x128xf32>
    %298 = tpu.matmul %295, %297, %cst_122 {dimension_numbers = #tpu.dot_dimension_numbers<[1], [0], [0], [1], [0, 0, 1, 1], [], []>} : vector<2x32xf32>, vector<32x128xf32>, vector<2x128xf32> -> vector<2x128xf32>
    %299 = arith.addf %296, %298 : vector<2x128xf32>
    %c0_123 = arith.constant 0 : index
    %c0_124 = arith.constant 0 : index
    %300 = vector.load %arg8[%c0_123, %c0_124] : memref<32x128xf32, #tpu.memory_space<vmem>>, vector<32x128xf32>
    %cst_125 = arith.constant dense<0.000000e+00> : vector<2x128xf32>
    %301 = tpu.matmul %263, %300, %cst_125 {dimension_numbers = #tpu.dot_dimension_numbers<[1], [0], [0], [1], [0, 0, 1, 1], [], []>} : vector<2x32xf32>, vector<32x128xf32>, vector<2x128xf32> -> vector<2x128xf32>
    %302 = arith.addf %299, %301 : vector<2x128xf32>
    %303 = math.tanh %302 : vector<2x128xf32>
    %304 = vector.extract_strided_slice %303 {offsets = [0, 0], sizes = [2, 96], strides = [1, 1]} : vector<2x128xf32> to vector<2x96xf32>
    %cst_126 = arith.constant 5.000000e-01 : f32
    %305 = vector.broadcast %cst_126 : f32 to vector<2x96xf32>
    %306 = arith.mulf %305, %304 : vector<2x96xf32>
    %cst_127 = arith.constant 5.000000e-01 : f32
    %307 = vector.broadcast %cst_127 : f32 to vector<2x96xf32>
    %308 = arith.addf %306, %307 : vector<2x96xf32>
    %309 = vector.extract_strided_slice %308 {offsets = [0, 0], sizes = [2, 32], strides = [1, 1]} : vector<2x96xf32> to vector<2x32xf32>
    %310 = vector.extract_strided_slice %308 {offsets = [0, 32], sizes = [2, 32], strides = [1, 1]} : vector<2x96xf32> to vector<2x32xf32>
    %311 = vector.extract_strided_slice %308 {offsets = [0, 64], sizes = [2, 32], strides = [1, 1]} : vector<2x96xf32> to vector<2x32xf32>
    %312 = vector.extract_strided_slice %303 {offsets = [0, 96], sizes = [2, 32], strides = [1, 1]} : vector<2x128xf32> to vector<2x32xf32>
    %313 = arith.mulf %310, %261 : vector<2x32xf32>
    %314 = arith.mulf %309, %312 : vector<2x32xf32>
    %315 = arith.addf %313, %314 : vector<2x32xf32>
    %316 = math.tanh %315 : vector<2x32xf32>
    %317 = arith.mulf %311, %316 : vector<2x32xf32>
    %cst_128 = arith.constant dense<0.000000e+00> : vector<2x128xf32>
    %318 = tpu.matmul %317, %12, %cst_128 {dimension_numbers = #tpu.dot_dimension_numbers<[1], [0], [0], [1], [0, 0, 1, 1], [], []>} : vector<2x32xf32>, vector<32x128xf32>, vector<2x128xf32> -> vector<2x128xf32>
    %cst_129 = arith.constant dense<0.000000e+00> : vector<2x128xf32>
    %319 = tpu.matmul %283, %13, %cst_129 {dimension_numbers = #tpu.dot_dimension_numbers<[1], [0], [0], [1], [0, 0, 1, 1], [], []>} : vector<2x32xf32>, vector<32x128xf32>, vector<2x128xf32> -> vector<2x128xf32>
    %320 = arith.addf %318, %319 : vector<2x128xf32>
    %321 = vector.broadcast %14 : vector<1x128xf32> to vector<2x128xf32>
    %322 = arith.addf %320, %321 : vector<2x128xf32>
    %323 = math.tanh %322 : vector<2x128xf32>
    %324 = vector.extract_strided_slice %323 {offsets = [0, 0], sizes = [2, 96], strides = [1, 1]} : vector<2x128xf32> to vector<2x96xf32>
    %cst_130 = arith.constant 5.000000e-01 : f32
    %325 = vector.broadcast %cst_130 : f32 to vector<2x96xf32>
    %326 = arith.mulf %325, %324 : vector<2x96xf32>
    %cst_131 = arith.constant 5.000000e-01 : f32
    %327 = vector.broadcast %cst_131 : f32 to vector<2x96xf32>
    %328 = arith.addf %326, %327 : vector<2x96xf32>
    %329 = vector.extract_strided_slice %328 {offsets = [0, 0], sizes = [2, 32], strides = [1, 1]} : vector<2x96xf32> to vector<2x32xf32>
    %330 = vector.extract_strided_slice %328 {offsets = [0, 32], sizes = [2, 32], strides = [1, 1]} : vector<2x96xf32> to vector<2x32xf32>
    %331 = vector.extract_strided_slice %328 {offsets = [0, 64], sizes = [2, 32], strides = [1, 1]} : vector<2x96xf32> to vector<2x32xf32>
    %332 = vector.extract_strided_slice %323 {offsets = [0, 96], sizes = [2, 32], strides = [1, 1]} : vector<2x128xf32> to vector<2x32xf32>
    %333 = arith.mulf %330, %281 : vector<2x32xf32>
    %334 = arith.mulf %329, %332 : vector<2x32xf32>
    %335 = arith.addf %333, %334 : vector<2x32xf32>
    %336 = math.tanh %335 : vector<2x32xf32>
    %337 = arith.mulf %331, %336 : vector<2x32xf32>
    %cst_132 = arith.constant dense<0.000000e+00> : vector<2x20xf32>
    %338 = tpu.matmul %337, %4, %cst_132 {dimension_numbers = #tpu.dot_dimension_numbers<[1], [0], [0], [1], [0, 0, 1, 1], [], []>} : vector<2x32xf32>, vector<32x20xf32>, vector<2x20xf32> -> vector<2x20xf32>
    %339 = arith.addf %338, %1 : vector<2x20xf32>
    %340 = math.exp %339 : vector<2x20xf32>
    %cst_133 = arith.constant dense<0.000000e+00> : vector<2xf32>
    %341 = vector.multi_reduction <add>, %340, %cst_133 [1] : vector<2x20xf32> to vector<2xf32>
    %342 = vector.shape_cast %341 : vector<2xf32> to vector<2x1xf32>
    %343 = vector.broadcast %342 : vector<2x1xf32> to vector<2x20xf32>
    %344 = arith.divf %340, %343 : vector<2x20xf32>
    %cst_134 = arith.constant dense<0.000000e+00> : vector<2x32xf32>
    %345 = tpu.matmul %344, %0, %cst_134 {dimension_numbers = #tpu.dot_dimension_numbers<[1], [0], [0], [1], [0, 0, 1, 1], [], []>} : vector<2x20xf32>, vector<20x32xf32>, vector<2x32xf32> -> vector<2x32xf32>
    %cst_135 = arith.constant dense<0.000000e+00> : vector<2x32xf32>
    %346 = tpu.matmul %345, %15, %cst_135 {dimension_numbers = #tpu.dot_dimension_numbers<[1], [0], [0], [1], [0, 0, 1, 1], [], []>} : vector<2x32xf32>, vector<32x32xf32>, vector<2x32xf32> -> vector<2x32xf32>
    %cst_136 = arith.constant dense<0.000000e+00> : vector<2x32xf32>
    %347 = tpu.matmul %337, %16, %cst_136 {dimension_numbers = #tpu.dot_dimension_numbers<[1], [0], [0], [1], [0, 0, 1, 1], [], []>} : vector<2x32xf32>, vector<32x32xf32>, vector<2x32xf32> -> vector<2x32xf32>
    %348 = arith.addf %346, %347 : vector<2x32xf32>
    %349 = math.tanh %348 : vector<2x32xf32>
    %350 = vector.extract_strided_slice %10 {offsets = [12, 0], sizes = [2, 128], strides = [1, 1]} : vector<16x128xf32> to vector<2x128xf32>
    %c0_137 = arith.constant 0 : index
    %c0_138 = arith.constant 0 : index
    %351 = vector.load %arg7[%c0_137, %c0_138] : memref<32x128xf32, #tpu.memory_space<vmem>>, vector<32x128xf32>
    %cst_139 = arith.constant dense<0.000000e+00> : vector<2x128xf32>
    %352 = tpu.matmul %349, %351, %cst_139 {dimension_numbers = #tpu.dot_dimension_numbers<[1], [0], [0], [1], [0, 0, 1, 1], [], []>} : vector<2x32xf32>, vector<32x128xf32>, vector<2x128xf32> -> vector<2x128xf32>
    %353 = arith.addf %350, %352 : vector<2x128xf32>
    %c0_140 = arith.constant 0 : index
    %c0_141 = arith.constant 0 : index
    %354 = vector.load %arg8[%c0_140, %c0_141] : memref<32x128xf32, #tpu.memory_space<vmem>>, vector<32x128xf32>
    %cst_142 = arith.constant dense<0.000000e+00> : vector<2x128xf32>
    %355 = tpu.matmul %317, %354, %cst_142 {dimension_numbers = #tpu.dot_dimension_numbers<[1], [0], [0], [1], [0, 0, 1, 1], [], []>} : vector<2x32xf32>, vector<32x128xf32>, vector<2x128xf32> -> vector<2x128xf32>
    %356 = arith.addf %353, %355 : vector<2x128xf32>
    %357 = math.tanh %356 : vector<2x128xf32>
    %358 = vector.extract_strided_slice %357 {offsets = [0, 0], sizes = [2, 96], strides = [1, 1]} : vector<2x128xf32> to vector<2x96xf32>
    %cst_143 = arith.constant 5.000000e-01 : f32
    %359 = vector.broadcast %cst_143 : f32 to vector<2x96xf32>
    %360 = arith.mulf %359, %358 : vector<2x96xf32>
    %cst_144 = arith.constant 5.000000e-01 : f32
    %361 = vector.broadcast %cst_144 : f32 to vector<2x96xf32>
    %362 = arith.addf %360, %361 : vector<2x96xf32>
    %363 = vector.extract_strided_slice %362 {offsets = [0, 0], sizes = [2, 32], strides = [1, 1]} : vector<2x96xf32> to vector<2x32xf32>
    %364 = vector.extract_strided_slice %362 {offsets = [0, 32], sizes = [2, 32], strides = [1, 1]} : vector<2x96xf32> to vector<2x32xf32>
    %365 = vector.extract_strided_slice %362 {offsets = [0, 64], sizes = [2, 32], strides = [1, 1]} : vector<2x96xf32> to vector<2x32xf32>
    %366 = vector.extract_strided_slice %357 {offsets = [0, 96], sizes = [2, 32], strides = [1, 1]} : vector<2x128xf32> to vector<2x32xf32>
    %367 = arith.mulf %364, %315 : vector<2x32xf32>
    %368 = arith.mulf %363, %366 : vector<2x32xf32>
    %369 = arith.addf %367, %368 : vector<2x32xf32>
    %370 = math.tanh %369 : vector<2x32xf32>
    %371 = arith.mulf %365, %370 : vector<2x32xf32>
    %cst_145 = arith.constant dense<0.000000e+00> : vector<2x128xf32>
    %372 = tpu.matmul %371, %12, %cst_145 {dimension_numbers = #tpu.dot_dimension_numbers<[1], [0], [0], [1], [0, 0, 1, 1], [], []>} : vector<2x32xf32>, vector<32x128xf32>, vector<2x128xf32> -> vector<2x128xf32>
    %cst_146 = arith.constant dense<0.000000e+00> : vector<2x128xf32>
    %373 = tpu.matmul %337, %13, %cst_146 {dimension_numbers = #tpu.dot_dimension_numbers<[1], [0], [0], [1], [0, 0, 1, 1], [], []>} : vector<2x32xf32>, vector<32x128xf32>, vector<2x128xf32> -> vector<2x128xf32>
    %374 = arith.addf %372, %373 : vector<2x128xf32>
    %375 = vector.broadcast %14 : vector<1x128xf32> to vector<2x128xf32>
    %376 = arith.addf %374, %375 : vector<2x128xf32>
    %377 = math.tanh %376 : vector<2x128xf32>
    %378 = vector.extract_strided_slice %377 {offsets = [0, 0], sizes = [2, 96], strides = [1, 1]} : vector<2x128xf32> to vector<2x96xf32>
    %cst_147 = arith.constant 5.000000e-01 : f32
    %379 = vector.broadcast %cst_147 : f32 to vector<2x96xf32>
    %380 = arith.mulf %379, %378 : vector<2x96xf32>
    %cst_148 = arith.constant 5.000000e-01 : f32
    %381 = vector.broadcast %cst_148 : f32 to vector<2x96xf32>
    %382 = arith.addf %380, %381 : vector<2x96xf32>
    %383 = vector.extract_strided_slice %382 {offsets = [0, 0], sizes = [2, 32], strides = [1, 1]} : vector<2x96xf32> to vector<2x32xf32>
    %384 = vector.extract_strided_slice %382 {offsets = [0, 32], sizes = [2, 32], strides = [1, 1]} : vector<2x96xf32> to vector<2x32xf32>
    %385 = vector.extract_strided_slice %382 {offsets = [0, 64], sizes = [2, 32], strides = [1, 1]} : vector<2x96xf32> to vector<2x32xf32>
    %386 = vector.extract_strided_slice %377 {offsets = [0, 96], sizes = [2, 32], strides = [1, 1]} : vector<2x128xf32> to vector<2x32xf32>
    %387 = arith.mulf %384, %335 : vector<2x32xf32>
    %388 = arith.mulf %383, %386 : vector<2x32xf32>
    %389 = arith.addf %387, %388 : vector<2x32xf32>
    %390 = math.tanh %389 : vector<2x32xf32>
    %391 = arith.mulf %385, %390 : vector<2x32xf32>
    %cst_149 = arith.constant dense<0.000000e+00> : vector<2x20xf32>
    %392 = tpu.matmul %391, %4, %cst_149 {dimension_numbers = #tpu.dot_dimension_numbers<[1], [0], [0], [1], [0, 0, 1, 1], [], []>} : vector<2x32xf32>, vector<32x20xf32>, vector<2x20xf32> -> vector<2x20xf32>
    %393 = arith.addf %392, %1 : vector<2x20xf32>
    %394 = math.exp %393 : vector<2x20xf32>
    %cst_150 = arith.constant dense<0.000000e+00> : vector<2xf32>
    %395 = vector.multi_reduction <add>, %394, %cst_150 [1] : vector<2x20xf32> to vector<2xf32>
    %396 = vector.shape_cast %395 : vector<2xf32> to vector<2x1xf32>
    %397 = vector.broadcast %396 : vector<2x1xf32> to vector<2x20xf32>
    %398 = arith.divf %394, %397 : vector<2x20xf32>
    %cst_151 = arith.constant dense<0.000000e+00> : vector<2x32xf32>
    %399 = tpu.matmul %398, %0, %cst_151 {dimension_numbers = #tpu.dot_dimension_numbers<[1], [0], [0], [1], [0, 0, 1, 1], [], []>} : vector<2x20xf32>, vector<20x32xf32>, vector<2x32xf32> -> vector<2x32xf32>
    %cst_152 = arith.constant dense<0.000000e+00> : vector<2x32xf32>
    %400 = tpu.matmul %399, %15, %cst_152 {dimension_numbers = #tpu.dot_dimension_numbers<[1], [0], [0], [1], [0, 0, 1, 1], [], []>} : vector<2x32xf32>, vector<32x32xf32>, vector<2x32xf32> -> vector<2x32xf32>
    %cst_153 = arith.constant dense<0.000000e+00> : vector<2x32xf32>
    %401 = tpu.matmul %391, %16, %cst_153 {dimension_numbers = #tpu.dot_dimension_numbers<[1], [0], [0], [1], [0, 0, 1, 1], [], []>} : vector<2x32xf32>, vector<32x32xf32>, vector<2x32xf32> -> vector<2x32xf32>
    %402 = arith.addf %400, %401 : vector<2x32xf32>
    %403 = math.tanh %402 : vector<2x32xf32>
    %404 = vector.extract_strided_slice %10 {offsets = [14, 0], sizes = [2, 128], strides = [1, 1]} : vector<16x128xf32> to vector<2x128xf32>
    %c0_154 = arith.constant 0 : index
    %c0_155 = arith.constant 0 : index
    %405 = vector.load %arg7[%c0_154, %c0_155] : memref<32x128xf32, #tpu.memory_space<vmem>>, vector<32x128xf32>
    %cst_156 = arith.constant dense<0.000000e+00> : vector<2x128xf32>
    %406 = tpu.matmul %403, %405, %cst_156 {dimension_numbers = #tpu.dot_dimension_numbers<[1], [0], [0], [1], [0, 0, 1, 1], [], []>} : vector<2x32xf32>, vector<32x128xf32>, vector<2x128xf32> -> vector<2x128xf32>
    %407 = arith.addf %404, %406 : vector<2x128xf32>
    %c0_157 = arith.constant 0 : index
    %c0_158 = arith.constant 0 : index
    %408 = vector.load %arg8[%c0_157, %c0_158] : memref<32x128xf32, #tpu.memory_space<vmem>>, vector<32x128xf32>
    %cst_159 = arith.constant dense<0.000000e+00> : vector<2x128xf32>
    %409 = tpu.matmul %371, %408, %cst_159 {dimension_numbers = #tpu.dot_dimension_numbers<[1], [0], [0], [1], [0, 0, 1, 1], [], []>} : vector<2x32xf32>, vector<32x128xf32>, vector<2x128xf32> -> vector<2x128xf32>
    %410 = arith.addf %407, %409 : vector<2x128xf32>
    %411 = math.tanh %410 : vector<2x128xf32>
    %412 = vector.extract_strided_slice %411 {offsets = [0, 0], sizes = [2, 96], strides = [1, 1]} : vector<2x128xf32> to vector<2x96xf32>
    %cst_160 = arith.constant 5.000000e-01 : f32
    %413 = vector.broadcast %cst_160 : f32 to vector<2x96xf32>
    %414 = arith.mulf %413, %412 : vector<2x96xf32>
    %cst_161 = arith.constant 5.000000e-01 : f32
    %415 = vector.broadcast %cst_161 : f32 to vector<2x96xf32>
    %416 = arith.addf %414, %415 : vector<2x96xf32>
    %417 = vector.extract_strided_slice %416 {offsets = [0, 0], sizes = [2, 32], strides = [1, 1]} : vector<2x96xf32> to vector<2x32xf32>
    %418 = vector.extract_strided_slice %416 {offsets = [0, 32], sizes = [2, 32], strides = [1, 1]} : vector<2x96xf32> to vector<2x32xf32>
    %419 = vector.extract_strided_slice %416 {offsets = [0, 64], sizes = [2, 32], strides = [1, 1]} : vector<2x96xf32> to vector<2x32xf32>
    %420 = vector.extract_strided_slice %411 {offsets = [0, 96], sizes = [2, 32], strides = [1, 1]} : vector<2x128xf32> to vector<2x32xf32>
    %421 = arith.mulf %418, %369 : vector<2x32xf32>
    %422 = arith.mulf %417, %420 : vector<2x32xf32>
    %423 = arith.addf %421, %422 : vector<2x32xf32>
    %424 = math.tanh %423 : vector<2x32xf32>
    %425 = arith.mulf %419, %424 : vector<2x32xf32>
    %cst_162 = arith.constant dense<0.000000e+00> : vector<2x128xf32>
    %426 = tpu.matmul %425, %12, %cst_162 {dimension_numbers = #tpu.dot_dimension_numbers<[1], [0], [0], [1], [0, 0, 1, 1], [], []>} : vector<2x32xf32>, vector<32x128xf32>, vector<2x128xf32> -> vector<2x128xf32>
    %cst_163 = arith.constant dense<0.000000e+00> : vector<2x128xf32>
    %427 = tpu.matmul %391, %13, %cst_163 {dimension_numbers = #tpu.dot_dimension_numbers<[1], [0], [0], [1], [0, 0, 1, 1], [], []>} : vector<2x32xf32>, vector<32x128xf32>, vector<2x128xf32> -> vector<2x128xf32>
    %428 = arith.addf %426, %427 : vector<2x128xf32>
    %429 = vector.broadcast %14 : vector<1x128xf32> to vector<2x128xf32>
    %430 = arith.addf %428, %429 : vector<2x128xf32>
    %431 = math.tanh %430 : vector<2x128xf32>
    %432 = vector.extract_strided_slice %431 {offsets = [0, 0], sizes = [2, 96], strides = [1, 1]} : vector<2x128xf32> to vector<2x96xf32>
    %cst_164 = arith.constant 5.000000e-01 : f32
    %433 = vector.broadcast %cst_164 : f32 to vector<2x96xf32>
    %434 = arith.mulf %433, %432 : vector<2x96xf32>
    %cst_165 = arith.constant 5.000000e-01 : f32
    %435 = vector.broadcast %cst_165 : f32 to vector<2x96xf32>
    %436 = arith.addf %434, %435 : vector<2x96xf32>
    %437 = vector.extract_strided_slice %436 {offsets = [0, 0], sizes = [2, 32], strides = [1, 1]} : vector<2x96xf32> to vector<2x32xf32>
    %438 = vector.extract_strided_slice %436 {offsets = [0, 32], sizes = [2, 32], strides = [1, 1]} : vector<2x96xf32> to vector<2x32xf32>
    %439 = vector.extract_strided_slice %436 {offsets = [0, 64], sizes = [2, 32], strides = [1, 1]} : vector<2x96xf32> to vector<2x32xf32>
    %440 = vector.extract_strided_slice %431 {offsets = [0, 96], sizes = [2, 32], strides = [1, 1]} : vector<2x128xf32> to vector<2x32xf32>
    %441 = arith.mulf %438, %389 : vector<2x32xf32>
    %442 = arith.mulf %437, %440 : vector<2x32xf32>
    %443 = arith.addf %441, %442 : vector<2x32xf32>
    %444 = math.tanh %443 : vector<2x32xf32>
    %445 = arith.mulf %439, %444 : vector<2x32xf32>
    %cst_166 = arith.constant dense<0.000000e+00> : vector<2x20xf32>
    %446 = tpu.matmul %445, %4, %cst_166 {dimension_numbers = #tpu.dot_dimension_numbers<[1], [0], [0], [1], [0, 0, 1, 1], [], []>} : vector<2x32xf32>, vector<32x20xf32>, vector<2x20xf32> -> vector<2x20xf32>
    %447 = arith.addf %446, %1 : vector<2x20xf32>
    %448 = math.exp %447 : vector<2x20xf32>
    %cst_167 = arith.constant dense<0.000000e+00> : vector<2xf32>
    %449 = vector.multi_reduction <add>, %448, %cst_167 [1] : vector<2x20xf32> to vector<2xf32>
    %450 = vector.shape_cast %449 : vector<2xf32> to vector<2x1xf32>
    %451 = vector.broadcast %450 : vector<2x1xf32> to vector<2x20xf32>
    %452 = arith.divf %448, %451 : vector<2x20xf32>
    %cst_168 = arith.constant dense<0.000000e+00> : vector<2x32xf32>
    %453 = tpu.matmul %452, %0, %cst_168 {dimension_numbers = #tpu.dot_dimension_numbers<[1], [0], [0], [1], [0, 0, 1, 1], [], []>} : vector<2x20xf32>, vector<20x32xf32>, vector<2x32xf32> -> vector<2x32xf32>
    %cst_169 = arith.constant dense<0.000000e+00> : vector<2x32xf32>
    %454 = tpu.matmul %453, %15, %cst_169 {dimension_numbers = #tpu.dot_dimension_numbers<[1], [0], [0], [1], [0, 0, 1, 1], [], []>} : vector<2x32xf32>, vector<32x32xf32>, vector<2x32xf32> -> vector<2x32xf32>
    %cst_170 = arith.constant dense<0.000000e+00> : vector<2x32xf32>
    %455 = tpu.matmul %445, %16, %cst_170 {dimension_numbers = #tpu.dot_dimension_numbers<[1], [0], [0], [1], [0, 0, 1, 1], [], []>} : vector<2x32xf32>, vector<32x32xf32>, vector<2x32xf32> -> vector<2x32xf32>
    %456 = arith.addf %454, %455 : vector<2x32xf32>
    %457 = math.tanh %456 : vector<2x32xf32>
    %458 = vector.shape_cast %79 : vector<2x32xf32> to vector<1x2x32xf32>
    %459 = vector.shape_cast %133 : vector<2x32xf32> to vector<1x2x32xf32>
    %460 = vector.shape_cast %187 : vector<2x32xf32> to vector<1x2x32xf32>
    %461 = vector.shape_cast %241 : vector<2x32xf32> to vector<1x2x32xf32>
    %462 = vector.shape_cast %295 : vector<2x32xf32> to vector<1x2x32xf32>
    %463 = vector.shape_cast %349 : vector<2x32xf32> to vector<1x2x32xf32>
    %464 = vector.shape_cast %403 : vector<2x32xf32> to vector<1x2x32xf32>
    %465 = vector.shape_cast %457 : vector<2x32xf32> to vector<1x2x32xf32>
    %466 = tpu.concatenate %458, %459, %460, %461, %462, %463, %464, %465 in 0 : vector<1x2x32xf32>, vector<1x2x32xf32>, vector<1x2x32xf32>, vector<1x2x32xf32>, vector<1x2x32xf32>, vector<1x2x32xf32>, vector<1x2x32xf32>, vector<1x2x32xf32> -> vector<8x2x32xf32>
    %c0_171 = arith.constant 0 : index
    %c0_172 = arith.constant 0 : index
    %c0_173 = arith.constant 0 : index
    %467 = vector.load %arg16[%c0_171, %c0_172, %c0_173] : memref<8x2x32xf32, #tpu.memory_space<vmem>>, vector<8x2x32xf32>
    tpu.vector_store %arg16[%c0_171, %c0_172, %c0_173], %466 {strides = array<i32>} : memref<8x2x32xf32, #tpu.memory_space<vmem>>, vector<8x2x32xf32>,
    %468 = vector.shape_cast %74 : vector<2x20xf32> to vector<1x2x20xf32>
    %469 = vector.shape_cast %128 : vector<2x20xf32> to vector<1x2x20xf32>
    %470 = vector.shape_cast %182 : vector<2x20xf32> to vector<1x2x20xf32>
    %471 = vector.shape_cast %236 : vector<2x20xf32> to vector<1x2x20xf32>
    %472 = vector.shape_cast %290 : vector<2x20xf32> to vector<1x2x20xf32>
    %473 = vector.shape_cast %344 : vector<2x20xf32> to vector<1x2x20xf32>
    %474 = vector.shape_cast %398 : vector<2x20xf32> to vector<1x2x20xf32>
    %475 = vector.shape_cast %452 : vector<2x20xf32> to vector<1x2x20xf32>
    %476 = tpu.concatenate %468, %469, %470, %471, %472, %473, %474, %475 in 0 : vector<1x2x20xf32>, vector<1x2x20xf32>, vector<1x2x20xf32>, vector<1x2x20xf32>, vector<1x2x20xf32>, vector<1x2x20xf32>, vector<1x2x20xf32>, vector<1x2x20xf32> -> vector<8x2x20xf32>
    %c0_174 = arith.constant 0 : index
    %c0_175 = arith.constant 0 : index
    %c0_176 = arith.constant 0 : index
    %477 = vector.load %arg17[%c0_174, %c0_175, %c0_176] : memref<8x2x20xf32, #tpu.memory_space<vmem>>, vector<8x2x20xf32>
    tpu.vector_store %arg17[%c0_174, %c0_175, %c0_176], %476 {strides = array<i32>} : memref<8x2x20xf32, #tpu.memory_space<vmem>>, vector<8x2x20xf32>,
    %478 = vector.shape_cast %425 : vector<2x32xf32> to vector<1x2x32xf32>
    %479 = vector.shape_cast %445 : vector<2x32xf32> to vector<1x2x32xf32>
    %480 = tpu.concatenate %478, %479 in 0 : vector<1x2x32xf32>, vector<1x2x32xf32> -> vector<2x2x32xf32>
    %c0_177 = arith.constant 0 : index
    %c0_178 = arith.constant 0 : index
    %c0_179 = arith.constant 0 : index
    %481 = vector.load %arg18[%c0_177, %c0_178, %c0_179] : memref<2x2x32xf32, #tpu.memory_space<vmem>>, vector<2x2x32xf32>
    tpu.vector_store %arg18[%c0_177, %c0_178, %c0_179], %480 {strides = array<i32>} : memref<2x2x32xf32, #tpu.memory_space<vmem>>, vector<2x2x32xf32>,
    %482 = vector.shape_cast %423 : vector<2x32xf32> to vector<1x2x32xf32>
    %483 = vector.shape_cast %443 : vector<2x32xf32> to vector<1x2x32xf32>
    %484 = tpu.concatenate %482, %483 in 0 : vector<1x2x32xf32>, vector<1x2x32xf32> -> vector<2x2x32xf32>
    %c0_180 = arith.constant 0 : index
    %c0_181 = arith.constant 0 : index
    %c0_182 = arith.constant 0 : index
    %485 = vector.load %arg19[%c0_180, %c0_181, %c0_182] : memref<2x2x32xf32, #tpu.memory_space<vmem>>, vector<2x2x32xf32>
    tpu.vector_store %arg19[%c0_180, %c0_181, %c0_182], %484 {strides = array<i32>} : memref<2x2x32xf32, #tpu.memory_space<vmem>>, vector<2x2x32xf32>,
    return
  }
}

</mosaic_0001>

<llo_original>
// kernel: tpu_custom_call.1
$region0: #{tpu_custom_call.1}
  #allocation0 [shape = 'u32[]', space=smem, size = 0x4, offset = 0x4, fixed_abs, tag = 'smem constant byte address 0x4 - core index']
  #allocation1 [shape = 'u32[72,128]{1,0:T(1,128)}', space=vmem, size = 0x9000, scoped, tag = 'internal scratch']
  %s0 = inlined_call_operand.hbm [shape: f32[16,32], index: 0, kind: input, shape index: {}]
  %s1 = inlined_call_operand.vmem [shape: f32[32,20], index: 1, kind: input, shape index: {}]
  %s2 = inlined_call_operand.hbm [shape: f32[20,32], index: 2, kind: input, shape index: {}]
  %s3 = inlined_call_operand.hbm [shape: f32[2,2,32], index: 3, kind: input, shape index: {}]
  %s4 = inlined_call_operand.hbm [shape: f32[2,2,32], index: 4, kind: input, shape index: {}]
  %s5 = inlined_call_operand.hbm [shape: f32[2,32], index: 5, kind: input, shape index: {}]
  %s6 = inlined_call_operand.hbm [shape: f32[32,128], index: 6, kind: input, shape index: {}]
  %s7 = inlined_call_operand.hbm [shape: f32[32,128], index: 7, kind: input, shape index: {}]
  %s8 = inlined_call_operand.hbm [shape: f32[32,128], index: 8, kind: input, shape index: {}]
  %s9 = inlined_call_operand.hbm [shape: f32[1,128], index: 9, kind: input, shape index: {}]
  %s10 = inlined_call_operand.vmem [shape: f32[64,128], index: 10, kind: input, shape index: {}]
  %s11 = inlined_call_operand.hbm [shape: f32[1,128], index: 11, kind: input, shape index: {}]
  %s12 = inlined_call_operand.hbm [shape: f32[32,32], index: 12, kind: input, shape index: {}]
  %s13 = inlined_call_operand.hbm [shape: f32[32,32], index: 13, kind: input, shape index: {}]
  %s14 = inlined_call_operand.hbm [shape: f32[32,32], index: 14, kind: input, shape index: {}]
  %s15 = inlined_call_operand.vmem [shape: f32[2,20], index: 15, kind: input, shape index: {}]
  %s16 = inlined_call_operand.hbm [shape: f32[8,2,32], index: 16, kind: output, shape index: {0}]
  %s17 = inlined_call_operand.hbm [shape: f32[8,2,20], index: 17, kind: output, shape index: {1}]
  %s18 = inlined_call_operand.hbm [shape: f32[2,2,32], index: 18, kind: output, shape index: {2}]
  %s19 = inlined_call_operand.hbm [shape: f32[2,2,32], index: 19, kind: output, shape index: {3}]
  %20 = xla_tuple %s16, %s17, %s18, %s19
  %s21 = sld [smem:[#allocation0]]
  $region150: #{tpu_custom_call.1} parent=0
    _
  %s23 = ssub.s32 1, %s21
  %s24 = scalar_select 0, %s23, %s21
  $region1: #{tpu_custom_call.1} parent=0
    #allocation2 [shape = 'u8[8192]{0}', space=vmem, size = 0x2000, scoped, tag = 'input window, operand 0, single buffered']
    #allocation3 [shape = 's32[1]{0}', space=sflag, size = 0x4, scoped, tag = 'scoped memory for tpu_custom_call.1']
    #allocation4 [shape = 's32[1]{0}', space=sflag, size = 0x4, scoped, tag = 'scoped memory for tpu_custom_call.1']
    #allocation5 [shape = 'u8[12288]{0}', space=vmem, size = 0x3000, scoped, tag = 'input window, operand 2, single buffered']
    #allocation6 [shape = 's32[1]{0}', space=sflag, size = 0x4, scoped, tag = 'scoped memory for tpu_custom_call.1']
    #allocation7 [shape = 'u8[2048]{0}', space=vmem, size = 0x800, scoped, tag = 'input window, operand 3, single buffered']
    #allocation8 [shape = 'u8[2048]{0}', space=vmem, size = 0x800, scoped, tag = 'input window, operand 4, single buffered']
    #allocation9 [shape = 's32[1]{0}', space=sflag, size = 0x4, scoped, tag = 'scoped memory for tpu_custom_call.1']
    #allocation10 [shape = 'u8[1024]{0}', space=vmem, size = 0x400, scoped, tag = 'input window, operand 5, single buffered']
    #allocation11 [shape = 'u8[16384]{0}', space=vmem, size = 0x4000, scoped, tag = 'input window, operand 6, single buffered']
    #allocation12 [shape = 's32[1]{0}', space=sflag, size = 0x4, scoped, tag = 'scoped memory for tpu_custom_call.1']
    #allocation13 [shape = 'u8[16384]{0}', space=vmem, size = 0x4000, scoped, tag = 'input window, operand 7, single buffered']
    #allocation14 [shape = 'u8[16384]{0}', space=vmem, size = 0x4000, scoped, tag = 'input window, operand 8, single buffered']
    #allocation15 [shape = 's32[1]{0}', space=sflag, size = 0x4, scoped, tag = 'scoped memory for tpu_custom_call.1']
    #allocation16 [shape = 'u8[512]{0}', space=vmem, size = 0x400, scoped, tag = 'input window, operand 9, single buffered']
    #allocation17 [shape = 'u8[512]{0}', space=vmem, size = 0x400, scoped, tag = 'input window, operand 11, single buffered']
    #allocation18 [shape = 's32[1]{0}', space=sflag, size = 0x4, scoped, tag = 'scoped memory for tpu_custom_call.1']
    #allocation19 [shape = 'u8[16384]{0}', space=vmem, size = 0x4000, scoped, tag = 'input window, operand 12, single buffered']
    #allocation20 [shape = 'u8[16384]{0}', space=vmem, size = 0x4000, scoped, tag = 'input window, operand 13, single buffered']
    #allocation21 [shape = 's32[1]{0}', space=sflag, size = 0x4, scoped, tag = 'scoped memory for tpu_custom_call.1']
    #allocation22 [shape = 'u8[16384]{0}', space=vmem, size = 0x4000, scoped, tag = 'input window, operand 14, single buffered']
    #allocation23 [shape = 'u8[8192]{0}', space=vmem, size = 0x2000, scoped, tag = 'output window, operand 0, single buffered']
    #allocation24 [shape = 'u8[8192]{0}', space=vmem, size = 0x2000, scoped, tag = 'output window, operand 1, single buffered']
    #allocation25 [shape = 's32[1]{0}', space=sflag, size = 0x4, scoped, tag = 'scoped memory for tpu_custom_call.1']
    #allocation26 [shape = 'u8[2048]{0}', space=vmem, size = 0x800, scoped, tag = 'output window, operand 2, single buffered']
    #allocation27 [shape = 'u8[2048]{0}', space=vmem, size = 0x800, scoped, tag = 'output window, operand 3, single buffered']
    #allocation28 [shape = 's32[1]{0}', space=sflag, size = 0x4, scoped, tag = 'scoped memory for tpu_custom_call.1']
    %25 = vsyncpa [#allocation3], 0
    %26 = vsyncpa [#allocation6], 0
    %27 = vsyncpa [#allocation9], 0
    %28 = vsyncpa [#allocation12], 0
    %29 = vsyncpa [#allocation15], 0
    %30 = vsyncpa [#allocation18], 0
    %31 = vsyncpa [#allocation21], 0
    %32 = vsyncpa [#allocation4], 0
    %33 = vsyncpa [#allocation25], 0
    %34 = vsyncpa [#allocation28], 0
    // Predicated region
    $region2: #{tpu_custom_call.1} parent=1 // pred_check
      _
    $region3: #{tpu_custom_call.1} parent=1 // pred_check_branch
      %36 = sbr.rel (0) target = $region5
    $region4: #{tpu_custom_call.1} parent=1 // pred_region
      %38 = vsyncadd [#allocation3], 0
      %s39 = sshll.u32 %s0, 4
      %s40 = int_to_ptr.hbm [resolvable:$true] %s39
      %s41 = sshll.u32 [#allocation2], 4
      %s42 = int_to_ptr.vmem [resolvable:$true] %s41
      %47 = dma.hbm_to_vmem [thread:$0]  %s40, 256, %s42, [#allocation3], 128, 128, 8
    $region5: #{tpu_custom_call.1} parent=1 // pred_fallthru
      _
    // Predicated region
    $region6: #{tpu_custom_call.1} parent=1 // pred_check
      _
    $region7: #{tpu_custom_call.1} parent=1 // pred_check_branch
      %49 = sbr.rel (0) target = $region9
    $region8: #{tpu_custom_call.1} parent=1 // pred_region
      _
    $region9: #{tpu_custom_call.1} parent=1 // pred_fallthru
      _
    // Predicated region
    $region10: #{tpu_custom_call.1} parent=1 // pred_check
      _
    $region11: #{tpu_custom_call.1} parent=1 // pred_check_branch
      %51 = sbr.rel (0) target = $region13
    $region12: #{tpu_custom_call.1} parent=1 // pred_region
      %53 = vsyncadd [#allocation6], 0
      %s54 = sshll.u32 %s2, 4
      %s55 = int_to_ptr.hbm [resolvable:$true] %s54
      %s56 = sshll.u32 [#allocation5], 4
      %s57 = int_to_ptr.vmem [resolvable:$true] %s56
      %62 = dma.hbm_to_vmem [thread:$0]  %s55, 384, %s57, [#allocation6], 128, 128, 8
    $region13: #{tpu_custom_call.1} parent=1 // pred_fallthru
      _
    // Predicated region
    $region14: #{tpu_custom_call.1} parent=1 // pred_check
      _
    $region15: #{tpu_custom_call.1} parent=1 // pred_check_branch
      %64 = sbr.rel (0) target = $region17
    $region16: #{tpu_custom_call.1} parent=1 // pred_region
      %66 = vsyncadd [#allocation6], 0
      %s67 = sshll.u32 %s3, 4
      %s68 = int_to_ptr.hbm [resolvable:$true] %s67
      %s69 = sshll.u32 [#allocation7], 4
      %s70 = int_to_ptr.vmem [resolvable:$true] %s69
      %75 = dma.hbm_to_vmem [thread:$0]  %s68, 64, %s70, [#allocation6], 32, 32, 2
    $region17: #{tpu_custom_call.1} parent=1 // pred_fallthru
      _
    // Predicated region
    $region18: #{tpu_custom_call.1} parent=1 // pred_check
      _
    $region19: #{tpu_custom_call.1} parent=1 // pred_check_branch
      %77 = sbr.rel (0) target = $region21
    $region20: #{tpu_custom_call.1} parent=1 // pred_region
      %79 = vsyncadd [#allocation9], 0
      %s80 = sshll.u32 %s4, 4
      %s81 = int_to_ptr.hbm [resolvable:$true] %s80
      %s82 = sshll.u32 [#allocation8], 4
      %s83 = int_to_ptr.vmem [resolvable:$true] %s82
      %88 = dma.hbm_to_vmem [thread:$0]  %s81, 64, %s83, [#allocation9], 32, 32, 2
    $region21: #{tpu_custom_call.1} parent=1 // pred_fallthru
      _
    // Predicated region
    $region22: #{tpu_custom_call.1} parent=1 // pred_check
      _
    $region23: #{tpu_custom_call.1} parent=1 // pred_check_branch
      %90 = sbr.rel (0) target = $region25
    $region24: #{tpu_custom_call.1} parent=1 // pred_region
      %92 = vsyncadd [#allocation9], 0
      %s94 = sshll.u32 %s5, 4
      %s95 = int_to_ptr.hbm [resolvable:$true] %s94
      %s96 = sshll.u32 [#allocation10], 4
      %s97 = int_to_ptr.vmem [resolvable:$true] %s96
      %99 = dma.hbm_to_vmem [thread:$0]  %s95, 32, %s97, [#allocation9]
    $region25: #{tpu_custom_call.1} parent=1 // pred_fallthru
      _
    // Predicated region
    $region26: #{tpu_custom_call.1} parent=1 // pred_check
      _
    $region27: #{tpu_custom_call.1} parent=1 // pred_check_branch
      %101 = sbr.rel (0) target = $region29
    $region28: #{tpu_custom_call.1} parent=1 // pred_region
      %103 = vsyncadd [#allocation12], 0
      %s104 = sshll.u32 %s6, 4
      %s105 = int_to_ptr.hbm [resolvable:$true] %s104
      %s106 = sshll.u32 [#allocation11], 4
      %s107 = int_to_ptr.vmem [resolvable:$true] %s106
      %112 = dma.hbm_to_vmem [thread:$0]  %s105, 512, %s107, [#allocation12], 128, 128, 8
    $region29: #{tpu_custom_call.1} parent=1 // pred_fallthru
      _
    // Predicated region
    $region30: #{tpu_custom_call.1} parent=1 // pred_check
      _
    $region31: #{tpu_custom_call.1} parent=1 // pred_check_branch
      %114 = sbr.rel (0) target = $region33
    $region32: #{tpu_custom_call.1} parent=1 // pred_region
      %116 = vsyncadd [#allocation12], 0
      %s117 = sshll.u32 %s7, 4
      %s118 = int_to_ptr.hbm [resolvable:$true] %s117
      %s119 = sshll.u32 [#allocation13], 4
      %s120 = int_to_ptr.vmem [resolvable:$true] %s119
      %125 = dma.hbm_to_vmem [thread:$0]  %s118, 512, %s120, [#allocation12], 128, 128, 8
    $region33: #{tpu_custom_call.1} parent=1 // pred_fallthru
      _
    // Predicated region
    $region34: #{tpu_custom_call.1} parent=1 // pred_check
      _
    $region35: #{tpu_custom_call.1} parent=1 // pred_check_branch
      %127 = sbr.rel (0) target = $region37
    $region36: #{tpu_custom_call.1} parent=1 // pred_region
      %129 = vsyncadd [#allocation15], 0
      %s130 = sshll.u32 %s8, 4
      %s131 = int_to_ptr.hbm [resolvable:$true] %s130
      %s132 = sshll.u32 [#allocation14], 4
      %s133 = int_to_ptr.vmem [resolvable:$true] %s132
      %138 = dma.hbm_to_vmem [thread:$0]  %s131, 512, %s133, [#allocation15], 128, 128, 8
    $region37: #{tpu_custom_call.1} parent=1 // pred_fallthru
      _
    // Predicated region
    $region38: #{tpu_custom_call.1} parent=1 // pred_check
      _
    $region39: #{tpu_custom_call.1} parent=1 // pred_check_branch
      %140 = sbr.rel (0) target = $region41
    $region40: #{tpu_custom_call.1} parent=1 // pred_region
      %142 = vsyncadd [#allocation15], 0
      %s144 = sshll.u32 %s9, 4
      %s145 = int_to_ptr.hbm [resolvable:$true] %s144
      %s146 = sshll.u32 [#allocation16], 4
      %s147 = int_to_ptr.vmem [resolvable:$true] %s146
      %149 = dma.hbm_to_vmem [thread:$0]  %s145, 16, %s147, [#allocation15]
    $region41: #{tpu_custom_call.1} parent=1 // pred_fallthru
      _
    // Predicated region
    $region42: #{tpu_custom_call.1} parent=1 // pred_check
      _
    $region43: #{tpu_custom_call.1} parent=1 // pred_check_branch
      %151 = sbr.rel (0) target = $region45
    $region44: #{tpu_custom_call.1} parent=1 // pred_region
      _
    $region45: #{tpu_custom_call.1} parent=1 // pred_fallthru
      _
    // Predicated region
    $region46: #{tpu_custom_call.1} parent=1 // pred_check
      _
    $region47: #{tpu_custom_call.1} parent=1 // pred_check_branch
      %153 = sbr.rel (0) target = $region49
    $region48: #{tpu_custom_call.1} parent=1 // pred_region
      %155 = vsyncadd [#allocation18], 0
      %s157 = sshll.u32 %s11, 4
      %s158 = int_to_ptr.hbm [resolvable:$true] %s157
      %s159 = sshll.u32 [#allocation17], 4
      %s160 = int_to_ptr.vmem [resolvable:$true] %s159
      %162 = dma.hbm_to_vmem [thread:$0]  %s158, 16, %s160, [#allocation18]
    $region49: #{tpu_custom_call.1} parent=1 // pred_fallthru
      _
    // Predicated region
    $region50: #{tpu_custom_call.1} parent=1 // pred_check
      _
    $region51: #{tpu_custom_call.1} parent=1 // pred_check_branch
      %164 = sbr.rel (0) target = $region53
    $region52: #{tpu_custom_call.1} parent=1 // pred_region
      %166 = vsyncadd [#allocation18], 0
      %s167 = sshll.u32 %s12, 4
      %s168 = int_to_ptr.hbm [resolvable:$true] %s167
      %s169 = sshll.u32 [#allocation19], 4
      %s170 = int_to_ptr.vmem [resolvable:$true] %s169
      %175 = dma.hbm_to_vmem [thread:$0]  %s168, 512, %s170, [#allocation18], 128, 128, 8
    $region53: #{tpu_custom_call.1} parent=1 // pred_fallthru
      _
    // Predicated region
    $region54: #{tpu_custom_call.1} parent=1 // pred_check
      _
    $region55: #{tpu_custom_call.1} parent=1 // pred_check_branch
      %177 = sbr.rel (0) target = $region57
    $region56: #{tpu_custom_call.1} parent=1 // pred_region
      %179 = vsyncadd [#allocation21], 0
      %s180 = sshll.u32 %s13, 4
      %s181 = int_to_ptr.hbm [resolvable:$true] %s180
      %s182 = sshll.u32 [#allocation20], 4
      %s183 = int_to_ptr.vmem [resolvable:$true] %s182
      %188 = dma.hbm_to_vmem [thread:$0]  %s181, 512, %s183, [#allocation21], 128, 128, 8
    $region57: #{tpu_custom_call.1} parent=1 // pred_fallthru
      _
    // Predicated region
    $region58: #{tpu_custom_call.1} parent=1 // pred_check
      _
    $region59: #{tpu_custom_call.1} parent=1 // pred_check_branch
      %190 = sbr.rel (0) target = $region61
    $region60: #{tpu_custom_call.1} parent=1 // pred_region
      %192 = vsyncadd [#allocation21], 0
      %s193 = sshll.u32 %s14, 4
      %s194 = int_to_ptr.hbm [resolvable:$true] %s193
      %s195 = sshll.u32 [#allocation22], 4
      %s196 = int_to_ptr.vmem [resolvable:$true] %s195
      %201 = dma.hbm_to_vmem [thread:$0]  %s194, 512, %s196, [#allocation21], 128, 128, 8
    $region61: #{tpu_custom_call.1} parent=1 // pred_fallthru
      _
    // Predicated region
    $region62: #{tpu_custom_call.1} parent=1 // pred_check
      _
    $region63: #{tpu_custom_call.1} parent=1 // pred_check_branch
      %203 = sbr.rel (0) target = $region65
    $region64: #{tpu_custom_call.1} parent=1 // pred_region
      _
    $region65: #{tpu_custom_call.1} parent=1 // pred_fallthru
      _
    // Predicated region
    $region66: #{tpu_custom_call.1} parent=1 // pred_check
      _
    $region67: #{tpu_custom_call.1} parent=1 // pred_check_branch
      %205 = sbr.rel (0) target = $region69
    $region68: #{tpu_custom_call.1} parent=1 // pred_region
      %207 = dma.done [#allocation3], 256
    $region69: #{tpu_custom_call.1} parent=1 // pred_fallthru
      _
    // Predicated region
    $region70: #{tpu_custom_call.1} parent=1 // pred_check
      _
    $region71: #{tpu_custom_call.1} parent=1 // pred_check_branch
      %209 = sbr.rel (0) target = $region73
    $region72: #{tpu_custom_call.1} parent=1 // pred_region
      %211 = dma.done [#allocation6], 384
    $region73: #{tpu_custom_call.1} parent=1 // pred_fallthru
      _
    // Predicated region
    $region74: #{tpu_custom_call.1} parent=1 // pred_check
      _
    $region75: #{tpu_custom_call.1} parent=1 // pred_check_branch
      %213 = sbr.rel (0) target = $region77
    $region76: #{tpu_custom_call.1} parent=1 // pred_region
      %215 = dma.done [#allocation6], 64
    $region77: #{tpu_custom_call.1} parent=1 // pred_fallthru
      _
    // Predicated region
    $region78: #{tpu_custom_call.1} parent=1 // pred_check
      _
    $region79: #{tpu_custom_call.1} parent=1 // pred_check_branch
      %217 = sbr.rel (0) target = $region81
    $region80: #{tpu_custom_call.1} parent=1 // pred_region
      %219 = dma.done [#allocation9], 64
    $region81: #{tpu_custom_call.1} parent=1 // pred_fallthru
      _
    // Predicated region
    $region82: #{tpu_custom_call.1} parent=1 // pred_check
      _
    $region83: #{tpu_custom_call.1} parent=1 // pred_check_branch
      %221 = sbr.rel (0) target = $region85
    $region84: #{tpu_custom_call.1} parent=1 // pred_region
      %223 = dma.done [#allocation9], 32
    $region85: #{tpu_custom_call.1} parent=1 // pred_fallthru
      _
    // Predicated region
    $region86: #{tpu_custom_call.1} parent=1 // pred_check
      _
    $region87: #{tpu_custom_call.1} parent=1 // pred_check_branch
      %225 = sbr.rel (0) target = $region89
    $region88: #{tpu_custom_call.1} parent=1 // pred_region
      %227 = dma.done [#allocation12], 512
    $region89: #{tpu_custom_call.1} parent=1 // pred_fallthru
      _
    // Predicated region
    $region90: #{tpu_custom_call.1} parent=1 // pred_check
      _
    $region91: #{tpu_custom_call.1} parent=1 // pred_check_branch
      %229 = sbr.rel (0) target = $region93
    $region92: #{tpu_custom_call.1} parent=1 // pred_region
      %231 = dma.done [#allocation12], 512
    $region93: #{tpu_custom_call.1} parent=1 // pred_fallthru
      _
    // Predicated region
    $region94: #{tpu_custom_call.1} parent=1 // pred_check
      _
    $region95: #{tpu_custom_call.1} parent=1 // pred_check_branch
      %233 = sbr.rel (0) target = $region97
    $region96: #{tpu_custom_call.1} parent=1 // pred_region
      %235 = dma.done [#allocation15], 512
    $region97: #{tpu_custom_call.1} parent=1 // pred_fallthru
      _
    // Predicated region
    $region98: #{tpu_custom_call.1} parent=1 // pred_check
      _
    $region99: #{tpu_custom_call.1} parent=1 // pred_check_branch
      %237 = sbr.rel (0) target = $region101
    $region100: #{tpu_custom_call.1} parent=1 // pred_region
      %239 = dma.done [#allocation15], 16
    $region101: #{tpu_custom_call.1} parent=1 // pred_fallthru
      _
    // Predicated region
    $region102: #{tpu_custom_call.1} parent=1 // pred_check
      _
    $region103: #{tpu_custom_call.1} parent=1 // pred_check_branch
      %241 = sbr.rel (0) target = $region105
    $region104: #{tpu_custom_call.1} parent=1 // pred_region
      %243 = dma.done [#allocation18], 16
    $region105: #{tpu_custom_call.1} parent=1 // pred_fallthru
      _
    // Predicated region
    $region106: #{tpu_custom_call.1} parent=1 // pred_check
      _
    $region107: #{tpu_custom_call.1} parent=1 // pred_check_branch
      %245 = sbr.rel (0) target = $region109
    $region108: #{tpu_custom_call.1} parent=1 // pred_region
      %247 = dma.done [#allocation18], 512
    $region109: #{tpu_custom_call.1} parent=1 // pred_fallthru
      _
    // Predicated region
    $region110: #{tpu_custom_call.1} parent=1 // pred_check
      _
    $region111: #{tpu_custom_call.1} parent=1 // pred_check_branch
      %249 = sbr.rel (0) target = $region113
    $region112: #{tpu_custom_call.1} parent=1 // pred_region
      %251 = dma.done [#allocation21], 512
    $region113: #{tpu_custom_call.1} parent=1 // pred_fallthru
      _
    // Predicated region
    $region114: #{tpu_custom_call.1} parent=1 // pred_check
      _
    $region115: #{tpu_custom_call.1} parent=1 // pred_check_branch
      %253 = sbr.rel (0) target = $region117
    $region116: #{tpu_custom_call.1} parent=1 // pred_region
      %255 = dma.done [#allocation21], 512
    $region117: #{tpu_custom_call.1} parent=1 // pred_fallthru
      _
    %v256 = vld [vmem:[#allocation5] sm:$0xff]
    %v257 = vld [vmem:[#allocation5 + $0x8] sm:$0xff]
    %v258 = vld [vmem:[#allocation5 + $0x10] sm:$0xf]
    %v259 = vld [vmem:[%s15] sm:$0x3]
    %v260 = vld [vmem:[#allocation19] sm:$0xff]
    %v261 = vld [vmem:[#allocation19 + $0x8] sm:$0xff]
    %v262 = vld [vmem:[#allocation19 + $0x10] sm:$0xff]
    %v263 = vld [vmem:[#allocation19 + $0x18] sm:$0xff]
    %v264 = vld [vmem:[%s1] sm:$0xff]
    %v265 = vld [vmem:[%s1 + $0x8] sm:$0xff]
    %v266 = vld [vmem:[%s1 + $0x10] sm:$0xff]
    %v267 = vld [vmem:[%s1 + $0x18] sm:$0xff]
    %vm268 = vcmask 261120
    %v270 = vsel %vm268, %v260, 0
    %v273 = vsel %vm268, %v261, 0
    %v276 = vsel %vm268, %v262, 0
    %v279 = vsel %vm268, %v263, 0
    %281 = vmatpush.msra.mxu0 0.0
    %282 = vmatpush.msra.mxu0 0.0
    %283 = vmatpush.msra.mxu0 0.0
    %284 = vmatpush.msra.mxu0 0.0
    %285 = vmatpush.msra.mxu0 0.0
    %286 = vmatpush.msra.mxu0 0.0
    %287 = vmatpush.msra.mxu0 0.0
    %288 = vmatpush.msra.mxu0 0.0
    %289 = vmatpush.msra.mxu0 0.0
    %290 = vmatpush.msra.mxu0 0.0
    %291 = vmatpush.msra.mxu0 0.0
    %292 = vmatpush.msra.mxu0 0.0
    %293 = vmatpush.msra.mxu0 %v267
    %294 = vmatpush.msra.mxu0 %v266
    %295 = vmatpush.msra.mxu0 %v265
    %296 = vmatpush.msra.mxu0 %v264
    %297 = vmatmul.f32.gmra.mxu0 %v270
    %v298 = vpop.f32.mrf.mxu0
    %v299 = vadd.f32 0.0, %v298
    %300 = vmatmul.f32.gmra.mxu0 %v273
    %v301 = vpop.f32.mrf.mxu0
    %v302 = vadd.f32 0.0, %v301
    %303 = vmatmul.f32.gmra.mxu0 %v276
    %v304 = vpop.f32.mrf.mxu0
    %v305 = vadd.f32 0.0, %v304
    %306 = vmatmul.f32.gmra.mxu0 %v279
    %v307 = vpop.f32.mrf.mxu0
    %v308 = vadd.f32 0.0, %v307
    %309 = vdwg.mxu0
    %v310 = vld [vmem:[#allocation2] sm:$0xff]
    %v311 = vld [vmem:[#allocation2 + $0x8] sm:$0xff]
    %v312 = vld [vmem:[#allocation11] sm:$0xff]
    %v313 = vld [vmem:[#allocation11 + $0x8] sm:$0xff]
    %v314 = vld [vmem:[#allocation11 + $0x10] sm:$0xff]
    %v315 = vld [vmem:[#allocation11 + $0x18] sm:$0xff]
    %v316 = vld [vmem:[#allocation16] sm:$0x1]
    %v318 = vperm.slane %v316, 0
    %v321 = vsel %vm268, %v310, 0
    %v324 = vsel %vm268, %v311, 0
    %326 = vmatpush.msra.mxu0 0.0
    %327 = vmatpush.msra.mxu0 0.0
    %328 = vmatpush.msra.mxu0 0.0
    %329 = vmatpush.msra.mxu0 0.0
    %330 = vmatpush.msra.mxu0 0.0
    %331 = vmatpush.msra.mxu0 0.0
    %332 = vmatpush.msra.mxu0 0.0
    %333 = vmatpush.msra.mxu0 0.0
    %334 = vmatpush.msra.mxu0 0.0
    %335 = vmatpush.msra.mxu0 0.0
    %336 = vmatpush.msra.mxu0 0.0
    %337 = vmatpush.msra.mxu0 0.0
    %338 = vmatpush.msra.mxu0 %v315
    %339 = vmatpush.msra.mxu0 %v314
    %340 = vmatpush.msra.mxu0 %v313
    %341 = vmatpush.msra.mxu0 %v312
    %342 = vmatmul.f32.gmra.mxu0 %v321
    %v343 = vpop.f32.mrf.mxu0
    %v344 = vadd.f32 %v318, %v343
    %345 = vmatmul.f32.gmra.mxu0 %v324
    %v346 = vpop.f32.mrf.mxu0
    %v347 = vadd.f32 %v318, %v346
    %348 = vdwg.mxu0
    %v349 = vld [vmem:[%s10] sm:$0xff]
    %v350 = vld [vmem:[%s10 + $0x8] sm:$0xff]
    %v351 = vld [vmem:[%s10 + $0x10] sm:$0xff]
    %v352 = vld [vmem:[%s10 + $0x18] sm:$0xff]
    %v353 = vld [vmem:[%s10 + $0x20] sm:$0xff]
    %v354 = vld [vmem:[%s10 + $0x28] sm:$0xff]
    %v355 = vld [vmem:[%s10 + $0x30] sm:$0xff]
    %v356 = vld [vmem:[%s10 + $0x38] sm:$0xff]
    %v357 = vld [vmem:[#allocation17] sm:$0x1]
    %v358 = vld [vmem:[#allocation20] sm:$0xff]
    %v359 = vld [vmem:[#allocation20 + $0x8] sm:$0xff]
    %v360 = vld [vmem:[#allocation20 + $0x10] sm:$0xff]
    %v361 = vld [vmem:[#allocation20 + $0x18] sm:$0xff]
    %v362 = vld [vmem:[#allocation22] sm:$0xff]
    %v363 = vld [vmem:[#allocation22 + $0x8] sm:$0xff]
    %v364 = vld [vmem:[#allocation22 + $0x10] sm:$0xff]
    %v365 = vld [vmem:[#allocation22 + $0x18] sm:$0xff]
    %v366 = vld [vmem:[#allocation7] sm:$0x3]
    %v367 = vld [vmem:[#allocation8] sm:$0x3]
    %s368 = scalar_lea.vmem [#allocation7], 2
    %v369 = vld [vmem:[%s368] sm:$0x3]
    %s370 = scalar_lea.vmem [#allocation8], 2
    %v371 = vld [vmem:[%s370] sm:$0x3]
    %v372 = vld [vmem:[#allocation10] sm:$0x3]
    %v373 = vld [vmem:[#allocation13] sm:$0xff]
    %v374 = vld [vmem:[#allocation13 + $0x8] sm:$0xff]
    %v375 = vld [vmem:[#allocation13 + $0x10] sm:$0xff]
    %v376 = vld [vmem:[#allocation13 + $0x18] sm:$0xff]
    %v378 = vsel %vm268, %v372, 0
    %380 = vmatpush.msra.mxu0 0.0
    %381 = vmatpush.msra.mxu0 0.0
    %382 = vmatpush.msra.mxu0 0.0
    %383 = vmatpush.msra.mxu0 0.0
    %384 = vmatpush.msra.mxu0 0.0
    %385 = vmatpush.msra.mxu0 0.0
    %386 = vmatpush.msra.mxu0 0.0
    %387 = vmatpush.msra.mxu0 0.0
    %388 = vmatpush.msra.mxu0 0.0
    %389 = vmatpush.msra.mxu0 0.0
    %390 = vmatpush.msra.mxu0 0.0
    %391 = vmatpush.msra.mxu0 0.0
    %392 = vmatpush.msra.mxu0 %v376
    %393 = vmatpush.msra.mxu0 %v375
    %394 = vmatpush.msra.mxu0 %v374
    %395 = vmatpush.msra.mxu0 %v373
    %396 = vmatmul.f32.gmra.mxu0 %v378
    %v397 = vpop.f32.mrf.mxu0
    %v398 = vadd.f32 0.0, %v397
    %399 = vdwg.mxu0
    %v400 = vadd.f32 %v344, %v398
    %v401 = vld [vmem:[#allocation14] sm:$0xff]
    %v402 = vld [vmem:[#allocation14 + $0x8] sm:$0xff]
    %v403 = vld [vmem:[#allocation14 + $0x10] sm:$0xff]
    %v404 = vld [vmem:[#allocation14 + $0x18] sm:$0xff]
    %v406 = vsel %vm268, %v366, 0
    %408 = vmatpush.msra.mxu0 0.0
    %409 = vmatpush.msra.mxu0 0.0
    %410 = vmatpush.msra.mxu0 0.0
    %411 = vmatpush.msra.mxu0 0.0
    %412 = vmatpush.msra.mxu0 0.0
    %413 = vmatpush.msra.mxu0 0.0
    %414 = vmatpush.msra.mxu0 0.0
    %415 = vmatpush.msra.mxu0 0.0
    %416 = vmatpush.msra.mxu0 0.0
    %417 = vmatpush.msra.mxu0 0.0
    %418 = vmatpush.msra.mxu0 0.0
    %419 = vmatpush.msra.mxu0 0.0
    %420 = vmatpush.msra.mxu0 %v404
    %421 = vmatpush.msra.mxu0 %v403
    %422 = vmatpush.msra.mxu0 %v402
    %423 = vmatpush.msra.mxu0 %v401
    %424 = vmatmul.f32.gmra.mxu0 %v406
    %v425 = vpop.f32.mrf.mxu0
    %v426 = vadd.f32 0.0, %v425
    %427 = vdwg.mxu0
    %v428 = vadd.f32 %v400, %v426
    %v429 = vtanh.pop %v428
    %v430 = vmul.f32 %v429, 0.5
    %v431 = vadd.f32 %v430, 0.5
    %433 = vrot.lane.b32.xlu0 %v367, 32
    %v434 = vpop.permute.xlu0 %433
    %v436 = vmul.f32 %v431, %v434
    %438 = vrot.lane.b32.xlu0 %v429, 32
    %v439 = vpop.permute.xlu0 %438
    %v441 = vmul.f32 %v431, %v439
    %443 = vrot.lane.b32.xlu0 %v441, 32
    %v444 = vpop.permute.xlu0 %443
    %v446 = vadd.f32 %v436, %v444
    %v447 = vtanh.pop %v446
    %449 = vrot.lane.b32.xlu0 %v447, 32
    %v450 = vpop.permute.xlu0 %449
    %v452 = vmul.f32 %v431, %v450
    %v454 = vsel %vm268, %v369, 0
    %456 = vmatpush.msra.mxu0 0.0
    %457 = vmatpush.msra.mxu0 0.0
    %458 = vmatpush.msra.mxu0 0.0
    %459 = vmatpush.msra.mxu0 0.0
    %460 = vmatpush.msra.mxu0 0.0
    %461 = vmatpush.msra.mxu0 0.0
    %462 = vmatpush.msra.mxu0 0.0
    %463 = vmatpush.msra.mxu0 0.0
    %464 = vmatpush.msra.mxu0 0.0
    %465 = vmatpush.msra.mxu0 0.0
    %466 = vmatpush.msra.mxu0 0.0
    %467 = vmatpush.msra.mxu0 0.0
    %468 = vmatpush.msra.mxu0 %v356
    %469 = vmatpush.msra.mxu0 %v355
    %470 = vmatpush.msra.mxu0 %v354
    %471 = vmatpush.msra.mxu0 %v353
    %472 = vmatmul.f32.gmra.mxu0 %v454
    %v473 = vpop.f32.mrf.mxu0
    %v474 = vadd.f32 0.0, %v473
    %475 = vdwg.mxu0
    %477 = vrot.lane.b32.xlu0 %v452, 64
    %v478 = vpop.permute.xlu0 %477
    %v479 = vsel %vm268, %v478, 0
    %481 = vmatpush.msra.mxu0 0.0
    %482 = vmatpush.msra.mxu0 0.0
    %483 = vmatpush.msra.mxu0 0.0
    %484 = vmatpush.msra.mxu0 0.0
    %485 = vmatpush.msra.mxu0 0.0
    %486 = vmatpush.msra.mxu0 0.0
    %487 = vmatpush.msra.mxu0 0.0
    %488 = vmatpush.msra.mxu0 0.0
    %489 = vmatpush.msra.mxu0 0.0
    %490 = vmatpush.msra.mxu0 0.0
    %491 = vmatpush.msra.mxu0 0.0
    %492 = vmatpush.msra.mxu0 0.0
    %493 = vmatpush.msra.mxu0 %v352
    %494 = vmatpush.msra.mxu0 %v351
    %495 = vmatpush.msra.mxu0 %v350
    %496 = vmatpush.msra.mxu0 %v349
    %497 = vmatmul.f32.gmra.mxu0 %v479
    %v498 = vpop.f32.mrf.mxu0
    %v499 = vadd.f32 %v474, %v498
    %500 = vdwg.mxu0
    %v502 = vperm.slane %v357, 0
    %v504 = vadd.f32 %v499, %v502
    %v505 = vtanh.pop %v504
    %v506 = vmul.f32 %v505, 0.5
    %v507 = vadd.f32 %v506, 0.5
    %509 = vrot.lane.b32.xlu0 %v371, 32
    %v510 = vpop.permute.xlu0 %509
    %v512 = vmul.f32 %v507, %v510
    %514 = vrot.lane.b32.xlu0 %v505, 32
    %v515 = vpop.permute.xlu0 %514
    %v517 = vmul.f32 %v507, %v515
    %519 = vrot.lane.b32.xlu0 %v517, 32
    %v520 = vpop.permute.xlu0 %519
    %v522 = vadd.f32 %v512, %v520
    %v523 = vtanh.pop %v522
    %525 = vrot.lane.b32.xlu0 %v523, 32
    %v526 = vpop.permute.xlu0 %525
    %v528 = vmul.f32 %v507, %v526
    %530 = vrot.lane.b32.xlu0 %v528, 64
    %v531 = vpop.permute.xlu0 %530
    %v532 = vsel %vm268, %v531, 0
    %534 = vmatpush.msra.mxu0 0.0
    %535 = vmatpush.msra.mxu0 0.0
    %536 = vmatpush.msra.mxu0 0.0
    %537 = vmatpush.msra.mxu0 0.0
    %538 = vmatpush.msra.mxu0 0.0
    %539 = vmatpush.msra.mxu0 0.0
    %540 = vmatpush.msra.mxu0 0.0
    %541 = vmatpush.msra.mxu0 0.0
    %542 = vmatpush.msra.mxu0 0.0
    %543 = vmatpush.msra.mxu0 0.0
    %544 = vmatpush.msra.mxu0 0.0
    %545 = vmatpush.msra.mxu0 0.0
    %546 = vmatpush.msra.mxu0 %v308
    %547 = vmatpush.msra.mxu0 %v305
    %548 = vmatpush.msra.mxu0 %v302
    %549 = vmatpush.msra.mxu0 %v299
    %550 = vmatmul.f32.gmra.mxu0 %v532
    %v551 = vpop.f32.mrf.mxu0
    %v552 = vadd.f32 %v259, %v551
    %553 = vdwg.mxu0
    %v554 = vmul.f32 %v552, 1.442695
    %v555 = vpow.pop %v554
    %vm556 = vcmask 156672
    %v557 = vsel %vm556, %v555, 0.0
    %558 = vadd.xlane.f32.xlu0 %v557
    %v559 = vpop.xlane.xlu0 %558
    %v560 = vrcp.pop %v559
    %v561 = vmul.f32 %v559, %v560
    %v562 = vsub.f32 1.0, %v561
    %v563 = vmul.f32 %v560, %v562
    %v564 = vadd.f32 %v560, %v563
    %vm565 = vweird.f32 %v559
    %vm566 = vweird.f32 %v560
    %vm567 = vmor %vm565, %vm566
    %v568 = vsel %vm567, %v560, %v564
    %v569 = vand.u32 2147483647, %v559
    %vm570 = vcmp.eq.f32.partialorder %v569, 8.507059e+37
    %v571 = vand.u32 %v559, 2147483648
    %v572 = vor.u32 1.1754944e-38, %v571
    %v573 = vsel %vm570, %v572, %v568
    %v574 = vmul.f32 %v555, %v573
    %vm575 = vcmask 162816
    %v577 = vsel %vm575, %v574, 0
    %vm579 = vcmask 1043456
    %v581 = vsel %vm579, %v258, 0
    %583 = vmatpush.msra.mxu0 0.0
    %584 = vmatpush.msra.mxu0 0.0
    %585 = vmatpush.msra.mxu0 0.0
    %586 = vmatpush.msra.mxu0 0.0
    %587 = vmatpush.msra.mxu0 0.0
    %588 = vmatpush.msra.mxu0 0.0
    %589 = vmatpush.msra.mxu0 0.0
    %590 = vmatpush.msra.mxu0 0.0
    %591 = vmatpush.msra.mxu0 0.0
    %592 = vmatpush.msra.mxu0 0.0
    %593 = vmatpush.msra.mxu0 0.0
    %594 = vmatpush.msra.mxu0 0.0
    %595 = vmatpush.msra.mxu0 0.0
    %596 = vmatpush.msra.mxu0 %v581
    %597 = vmatpush.msra.mxu0 %v257
    %598 = vmatpush.msra.mxu0 %v256
    %599 = vmatmul.f32.gmra.mxu0 %v577
    %v600 = vpop.f32.mrf.mxu0
    %v601 = vadd.f32 0.0, %v600
    %602 = vdwg.mxu0
    %603 = vmatpush.msra.mxu0 0.0
    %604 = vmatpush.msra.mxu0 0.0
    %605 = vmatpush.msra.mxu0 0.0
    %606 = vmatpush.msra.mxu0 0.0
    %607 = vmatpush.msra.mxu0 0.0
    %608 = vmatpush.msra.mxu0 0.0
    %609 = vmatpush.msra.mxu0 0.0
    %610 = vmatpush.msra.mxu0 0.0
    %611 = vmatpush.msra.mxu0 0.0
    %612 = vmatpush.msra.mxu0 0.0
    %613 = vmatpush.msra.mxu0 0.0
    %614 = vmatpush.msra.mxu0 0.0
    %615 = vmatpush.msra.mxu0 %v365
    %616 = vmatpush.msra.mxu0 %v364
    %617 = vmatpush.msra.mxu0 %v363
    %618 = vmatpush.msra.mxu0 %v362
    %619 = vmatmul.f32.gmra.mxu0 %v532
    %v620 = vpop.f32.mrf.mxu0
    %v621 = vadd.f32 0.0, %v620
    %622 = vdwg.mxu0
    %v624 = vsel %vm268, %v601, 0
    %626 = vmatpush.msra.mxu0 0.0
    %627 = vmatpush.msra.mxu0 0.0
    %628 = vmatpush.msra.mxu0 0.0
    %629 = vmatpush.msra.mxu0 0.0
    %630 = vmatpush.msra.mxu0 0.0
    %631 = vmatpush.msra.mxu0 0.0
    %632 = vmatpush.msra.mxu0 0.0
    %633 = vmatpush.msra.mxu0 0.0
    %634 = vmatpush.msra.mxu0 0.0
    %635 = vmatpush.msra.mxu0 0.0
    %636 = vmatpush.msra.mxu0 0.0
    %637 = vmatpush.msra.mxu0 0.0
    %638 = vmatpush.msra.mxu0 %v361
    %639 = vmatpush.msra.mxu0 %v360
    %640 = vmatpush.msra.mxu0 %v359
    %641 = vmatpush.msra.mxu0 %v358
    %642 = vmatmul.f32.gmra.mxu0 %v624
    %v643 = vpop.f32.mrf.mxu0
    %v644 = vadd.f32 %v621, %v643
    %645 = vdwg.mxu0
    %v646 = vtanh.pop %v644
    %v648 = vsel %vm268, %v646, 0
    %650 = vmatpush.msra.mxu0 0.0
    %651 = vmatpush.msra.mxu0 0.0
    %652 = vmatpush.msra.mxu0 0.0
    %653 = vmatpush.msra.mxu0 0.0
    %654 = vmatpush.msra.mxu0 0.0
    %655 = vmatpush.msra.mxu0 0.0
    %656 = vmatpush.msra.mxu0 0.0
    %657 = vmatpush.msra.mxu0 0.0
    %658 = vmatpush.msra.mxu0 0.0
    %659 = vmatpush.msra.mxu0 0.0
    %660 = vmatpush.msra.mxu0 0.0
    %661 = vmatpush.msra.mxu0 0.0
    %662 = vmatpush.msra.mxu0 %v376
    %663 = vmatpush.msra.mxu0 %v375
    %664 = vmatpush.msra.mxu0 %v374
    %665 = vmatpush.msra.mxu0 %v373
    %666 = vmatmul.f32.gmra.mxu0 %v648
    %v667 = vpop.f32.mrf.mxu0
    %v668 = vadd.f32 0.0, %v667
    %669 = vdwg.mxu0
    %v671 = vrot.slane %v668, 6
    %v673 = vadd.f32 %v344, %v671
    %674 = vmatpush.msra.mxu0 0.0
    %675 = vmatpush.msra.mxu0 0.0
    %676 = vmatpush.msra.mxu0 0.0
    %677 = vmatpush.msra.mxu0 0.0
    %678 = vmatpush.msra.mxu0 0.0
    %679 = vmatpush.msra.mxu0 0.0
    %680 = vmatpush.msra.mxu0 0.0
    %681 = vmatpush.msra.mxu0 0.0
    %682 = vmatpush.msra.mxu0 0.0
    %683 = vmatpush.msra.mxu0 0.0
    %684 = vmatpush.msra.mxu0 0.0
    %685 = vmatpush.msra.mxu0 0.0
    %686 = vmatpush.msra.mxu0 %v404
    %687 = vmatpush.msra.mxu0 %v403
    %688 = vmatpush.msra.mxu0 %v402
    %689 = vmatpush.msra.mxu0 %v401
    %690 = vmatmul.f32.gmra.mxu0 %v479
    %v691 = vpop.f32.mrf.mxu0
    %v692 = vadd.f32 0.0, %v691
    %693 = vdwg.mxu0
    %v695 = vrot.slane %v692, 6
    %v697 = vadd.f32 %v673, %v695
    %v698 = vtanh.pop %v697
    %v699 = vmul.f32 %v698, 0.5
    %v700 = vadd.f32 %v699, 0.5
    %v702 = vrot.slane %v446, 6
    %v704 = vmul.f32 %v700, %v702
    %706 = vrot.lane.b32.xlu0 %v698, 32
    %v707 = vpop.permute.xlu0 %706
    %v709 = vmul.f32 %v700, %v707
    %711 = vrot.lane.b32.xlu0 %v709, 32
    %v712 = vpop.permute.xlu0 %711
    %v714 = vadd.f32 %v704, %v712
    %v715 = vtanh.pop %v714
    %717 = vrot.lane.b32.xlu0 %v715, 32
    %v718 = vpop.permute.xlu0 %717
    %v720 = vmul.f32 %v700, %v718
    %721 = vmatpush.msra.mxu0 0.0
    %722 = vmatpush.msra.mxu0 0.0
    %723 = vmatpush.msra.mxu0 0.0
    %724 = vmatpush.msra.mxu0 0.0
    %725 = vmatpush.msra.mxu0 0.0
    %726 = vmatpush.msra.mxu0 0.0
    %727 = vmatpush.msra.mxu0 0.0
    %728 = vmatpush.msra.mxu0 0.0
    %729 = vmatpush.msra.mxu0 0.0
    %730 = vmatpush.msra.mxu0 0.0
    %731 = vmatpush.msra.mxu0 0.0
    %732 = vmatpush.msra.mxu0 0.0
    %733 = vmatpush.msra.mxu0 %v356
    %734 = vmatpush.msra.mxu0 %v355
    %735 = vmatpush.msra.mxu0 %v354
    %736 = vmatpush.msra.mxu0 %v353
    %737 = vmatmul.f32.gmra.mxu0 %v532
    %v738 = vpop.f32.mrf.mxu0
    %v739 = vadd.f32 0.0, %v738
    %740 = vdwg.mxu0
    %v742 = vrot.slane %v720, 2
    %743 = vrot.lane.b32.xlu0 %v742, 64
    %v744 = vpop.permute.xlu0 %743
    %v745 = vsel %vm268, %v744, 0
    %747 = vmatpush.msra.mxu0 0.0
    %748 = vmatpush.msra.mxu0 0.0
    %749 = vmatpush.msra.mxu0 0.0
    %750 = vmatpush.msra.mxu0 0.0
    %751 = vmatpush.msra.mxu0 0.0
    %752 = vmatpush.msra.mxu0 0.0
    %753 = vmatpush.msra.mxu0 0.0
    %754 = vmatpush.msra.mxu0 0.0
    %755 = vmatpush.msra.mxu0 0.0
    %756 = vmatpush.msra.mxu0 0.0
    %757 = vmatpush.msra.mxu0 0.0
    %758 = vmatpush.msra.mxu0 0.0
    %759 = vmatpush.msra.mxu0 %v352
    %760 = vmatpush.msra.mxu0 %v351
    %761 = vmatpush.msra.mxu0 %v350
    %762 = vmatpush.msra.mxu0 %v349
    %763 = vmatmul.f32.gmra.mxu0 %v745
    %v764 = vpop.f32.mrf.mxu0
    %v765 = vadd.f32 %v739, %v764
    %766 = vdwg.mxu0
    %v767 = vadd.f32 %v765, %v502
    %v768 = vtanh.pop %v767
    %v769 = vmul.f32 %v768, 0.5
    %v770 = vadd.f32 %v769, 0.5
    %v771 = vmul.f32 %v770, %v522
    %773 = vrot.lane.b32.xlu0 %v768, 32
    %v774 = vpop.permute.xlu0 %773
    %v776 = vmul.f32 %v770, %v774
    %778 = vrot.lane.b32.xlu0 %v776, 32
    %v779 = vpop.permute.xlu0 %778
    %v781 = vadd.f32 %v771, %v779
    %v782 = vtanh.pop %v781
    %784 = vrot.lane.b32.xlu0 %v782, 32
    %v785 = vpop.permute.xlu0 %784
    %v787 = vmul.f32 %v770, %v785
    %789 = vrot.lane.b32.xlu0 %v787, 64
    %v790 = vpop.permute.xlu0 %789
    %v791 = vsel %vm268, %v790, 0
    %793 = vmatpush.msra.mxu0 0.0
    %794 = vmatpush.msra.mxu0 0.0
    %795 = vmatpush.msra.mxu0 0.0
    %796 = vmatpush.msra.mxu0 0.0
    %797 = vmatpush.msra.mxu0 0.0
    %798 = vmatpush.msra.mxu0 0.0
    %799 = vmatpush.msra.mxu0 0.0
    %800 = vmatpush.msra.mxu0 0.0
    %801 = vmatpush.msra.mxu0 0.0
    %802 = vmatpush.msra.mxu0 0.0
    %803 = vmatpush.msra.mxu0 0.0
    %804 = vmatpush.msra.mxu0 0.0
    %805 = vmatpush.msra.mxu0 %v308
    %806 = vmatpush.msra.mxu0 %v305
    %807 = vmatpush.msra.mxu0 %v302
    %808 = vmatpush.msra.mxu0 %v299
    %809 = vmatmul.f32.gmra.mxu0 %v791
    %v810 = vpop.f32.mrf.mxu0
    %v811 = vadd.f32 %v259, %v810
    %812 = vdwg.mxu0
    %v813 = vmul.f32 %v811, 1.442695
    %v814 = vpow.pop %v813
    %v815 = vsel %vm556, %v814, 0.0
    %816 = vadd.xlane.f32.xlu0 %v815
    %v817 = vpop.xlane.xlu0 %816
    %v818 = vrcp.pop %v817
    %v819 = vmul.f32 %v817, %v818
    %v820 = vsub.f32 1.0, %v819
    %v821 = vmul.f32 %v818, %v820
    %v822 = vadd.f32 %v818, %v821
    %vm823 = vweird.f32 %v817
    %vm824 = vweird.f32 %v818
    %vm825 = vmor %vm823, %vm824
    %v826 = vsel %vm825, %v818, %v822
    %v827 = vand.u32 2147483647, %v817
    %vm828 = vcmp.eq.f32.partialorder %v827, 8.507059e+37
    %v829 = vand.u32 %v817, 2147483648
    %v830 = vor.u32 1.1754944e-38, %v829
    %v831 = vsel %vm828, %v830, %v826
    %v832 = vmul.f32 %v814, %v831
    %v834 = vsel %vm575, %v832, 0
    %836 = vmatpush.msra.mxu0 0.0
    %837 = vmatpush.msra.mxu0 0.0
    %838 = vmatpush.msra.mxu0 0.0
    %839 = vmatpush.msra.mxu0 0.0
    %840 = vmatpush.msra.mxu0 0.0
    %841 = vmatpush.msra.mxu0 0.0
    %842 = vmatpush.msra.mxu0 0.0
    %843 = vmatpush.msra.mxu0 0.0
    %844 = vmatpush.msra.mxu0 0.0
    %845 = vmatpush.msra.mxu0 0.0
    %846 = vmatpush.msra.mxu0 0.0
    %847 = vmatpush.msra.mxu0 0.0
    %848 = vmatpush.msra.mxu0 0.0
    %849 = vmatpush.msra.mxu0 %v581
    %850 = vmatpush.msra.mxu0 %v257
    %851 = vmatpush.msra.mxu0 %v256
    %852 = vmatmul.f32.gmra.mxu0 %v834
    %v853 = vpop.f32.mrf.mxu0
    %v854 = vadd.f32 0.0, %v853
    %855 = vdwg.mxu0
    %856 = vmatpush.msra.mxu0 0.0
    %857 = vmatpush.msra.mxu0 0.0
    %858 = vmatpush.msra.mxu0 0.0
    %859 = vmatpush.msra.mxu0 0.0
    %860 = vmatpush.msra.mxu0 0.0
    %861 = vmatpush.msra.mxu0 0.0
    %862 = vmatpush.msra.mxu0 0.0
    %863 = vmatpush.msra.mxu0 0.0
    %864 = vmatpush.msra.mxu0 0.0
    %865 = vmatpush.msra.mxu0 0.0
    %866 = vmatpush.msra.mxu0 0.0
    %867 = vmatpush.msra.mxu0 0.0
    %868 = vmatpush.msra.mxu0 %v365
    %869 = vmatpush.msra.mxu0 %v364
    %870 = vmatpush.msra.mxu0 %v363
    %871 = vmatpush.msra.mxu0 %v362
    %872 = vmatmul.f32.gmra.mxu0 %v791
    %v873 = vpop.f32.mrf.mxu0
    %v874 = vadd.f32 0.0, %v873
    %875 = vdwg.mxu0
    %v877 = vsel %vm268, %v854, 0
    %879 = vmatpush.msra.mxu0 0.0
    %880 = vmatpush.msra.mxu0 0.0
    %881 = vmatpush.msra.mxu0 0.0
    %882 = vmatpush.msra.mxu0 0.0
    %883 = vmatpush.msra.mxu0 0.0
    %884 = vmatpush.msra.mxu0 0.0
    %885 = vmatpush.msra.mxu0 0.0
    %886 = vmatpush.msra.mxu0 0.0
    %887 = vmatpush.msra.mxu0 0.0
    %888 = vmatpush.msra.mxu0 0.0
    %889 = vmatpush.msra.mxu0 0.0
    %890 = vmatpush.msra.mxu0 0.0
    %891 = vmatpush.msra.mxu0 %v361
    %892 = vmatpush.msra.mxu0 %v360
    %893 = vmatpush.msra.mxu0 %v359
    %894 = vmatpush.msra.mxu0 %v358
    %895 = vmatmul.f32.gmra.mxu0 %v877
    %v896 = vpop.f32.mrf.mxu0
    %v897 = vadd.f32 %v874, %v896
    %898 = vdwg.mxu0
    %v899 = vtanh.pop %v897
    %v901 = vsel %vm268, %v899, 0
    %903 = vmatpush.msra.mxu0 0.0
    %904 = vmatpush.msra.mxu0 0.0
    %905 = vmatpush.msra.mxu0 0.0
    %906 = vmatpush.msra.mxu0 0.0
    %907 = vmatpush.msra.mxu0 0.0
    %908 = vmatpush.msra.mxu0 0.0
    %909 = vmatpush.msra.mxu0 0.0
    %910 = vmatpush.msra.mxu0 0.0
    %911 = vmatpush.msra.mxu0 0.0
    %912 = vmatpush.msra.mxu0 0.0
    %913 = vmatpush.msra.mxu0 0.0
    %914 = vmatpush.msra.mxu0 0.0
    %915 = vmatpush.msra.mxu0 %v376
    %916 = vmatpush.msra.mxu0 %v375
    %917 = vmatpush.msra.mxu0 %v374
    %918 = vmatpush.msra.mxu0 %v373
    %919 = vmatmul.f32.gmra.mxu0 %v901
    %v920 = vpop.f32.mrf.mxu0
    %v921 = vadd.f32 0.0, %v920
    %922 = vdwg.mxu0
    %v924 = vrot.slane %v921, 4
    %v926 = vadd.f32 %v344, %v924
    %927 = vmatpush.msra.mxu0 0.0
    %928 = vmatpush.msra.mxu0 0.0
    %929 = vmatpush.msra.mxu0 0.0
    %930 = vmatpush.msra.mxu0 0.0
    %931 = vmatpush.msra.mxu0 0.0
    %932 = vmatpush.msra.mxu0 0.0
    %933 = vmatpush.msra.mxu0 0.0
    %934 = vmatpush.msra.mxu0 0.0
    %935 = vmatpush.msra.mxu0 0.0
    %936 = vmatpush.msra.mxu0 0.0
    %937 = vmatpush.msra.mxu0 0.0
    %938 = vmatpush.msra.mxu0 0.0
    %939 = vmatpush.msra.mxu0 %v404
    %940 = vmatpush.msra.mxu0 %v403
    %941 = vmatpush.msra.mxu0 %v402
    %942 = vmatpush.msra.mxu0 %v401
    %943 = vmatmul.f32.gmra.mxu0 %v745
    %v944 = vpop.f32.mrf.mxu0
    %v945 = vadd.f32 0.0, %v944
    %946 = vdwg.mxu0
    %v948 = vrot.slane %v945, 4
    %v950 = vadd.f32 %v926, %v948
    %v951 = vtanh.pop %v950
    %v952 = vmul.f32 %v951, 0.5
    %v953 = vadd.f32 %v952, 0.5
    %v955 = vrot.slane %v714, 6
    %v957 = vmul.f32 %v953, %v955
    %959 = vrot.lane.b32.xlu0 %v951, 32
    %v960 = vpop.permute.xlu0 %959
    %v962 = vmul.f32 %v953, %v960
    %964 = vrot.lane.b32.xlu0 %v962, 32
    %v965 = vpop.permute.xlu0 %964
    %v967 = vadd.f32 %v957, %v965
    %v968 = vtanh.pop %v967
    %970 = vrot.lane.b32.xlu0 %v968, 32
    %v971 = vpop.permute.xlu0 %970
    %v973 = vmul.f32 %v953, %v971
    %974 = vmatpush.msra.mxu0 0.0
    %975 = vmatpush.msra.mxu0 0.0
    %976 = vmatpush.msra.mxu0 0.0
    %977 = vmatpush.msra.mxu0 0.0
    %978 = vmatpush.msra.mxu0 0.0
    %979 = vmatpush.msra.mxu0 0.0
    %980 = vmatpush.msra.mxu0 0.0
    %981 = vmatpush.msra.mxu0 0.0
    %982 = vmatpush.msra.mxu0 0.0
    %983 = vmatpush.msra.mxu0 0.0
    %984 = vmatpush.msra.mxu0 0.0
    %985 = vmatpush.msra.mxu0 0.0
    %986 = vmatpush.msra.mxu0 %v356
    %987 = vmatpush.msra.mxu0 %v355
    %988 = vmatpush.msra.mxu0 %v354
    %989 = vmatpush.msra.mxu0 %v353
    %990 = vmatmul.f32.gmra.mxu0 %v791
    %v991 = vpop.f32.mrf.mxu0
    %v992 = vadd.f32 0.0, %v991
    %993 = vdwg.mxu0
    %v995 = vrot.slane %v973, 4
    %996 = vrot.lane.b32.xlu0 %v995, 64
    %v997 = vpop.permute.xlu0 %996
    %v998 = vsel %vm268, %v997, 0
    %1000 = vmatpush.msra.mxu0 0.0
    %1001 = vmatpush.msra.mxu0 0.0
    %1002 = vmatpush.msra.mxu0 0.0
    %1003 = vmatpush.msra.mxu0 0.0
    %1004 = vmatpush.msra.mxu0 0.0
    %1005 = vmatpush.msra.mxu0 0.0
    %1006 = vmatpush.msra.mxu0 0.0
    %1007 = vmatpush.msra.mxu0 0.0
    %1008 = vmatpush.msra.mxu0 0.0
    %1009 = vmatpush.msra.mxu0 0.0
    %1010 = vmatpush.msra.mxu0 0.0
    %1011 = vmatpush.msra.mxu0 0.0
    %1012 = vmatpush.msra.mxu0 %v352
    %1013 = vmatpush.msra.mxu0 %v351
    %1014 = vmatpush.msra.mxu0 %v350
    %1015 = vmatpush.msra.mxu0 %v349
    %1016 = vmatmul.f32.gmra.mxu0 %v998
    %v1017 = vpop.f32.mrf.mxu0
    %v1018 = vadd.f32 %v992, %v1017
    %1019 = vdwg.mxu0
    %v1020 = vadd.f32 %v1018, %v502
    %v1021 = vtanh.pop %v1020
    %v1022 = vmul.f32 %v1021, 0.5
    %v1023 = vadd.f32 %v1022, 0.5
    %v1024 = vmul.f32 %v1023, %v781
    %1026 = vrot.lane.b32.xlu0 %v1021, 32
    %v1027 = vpop.permute.xlu0 %1026
    %v1029 = vmul.f32 %v1023, %v1027
    %1031 = vrot.lane.b32.xlu0 %v1029, 32
    %v1032 = vpop.permute.xlu0 %1031
    %v1034 = vadd.f32 %v1024, %v1032
    %v1035 = vtanh.pop %v1034
    %1037 = vrot.lane.b32.xlu0 %v1035, 32
    %v1038 = vpop.permute.xlu0 %1037
    %v1040 = vmul.f32 %v1023, %v1038
    %1042 = vrot.lane.b32.xlu0 %v1040, 64
    %v1043 = vpop.permute.xlu0 %1042
    %v1044 = vsel %vm268, %v1043, 0
    %1046 = vmatpush.msra.mxu0 0.0
    %1047 = vmatpush.msra.mxu0 0.0
    %1048 = vmatpush.msra.mxu0 0.0
    %1049 = vmatpush.msra.mxu0 0.0
    %1050 = vmatpush.msra.mxu0 0.0
    %1051 = vmatpush.msra.mxu0 0.0
    %1052 = vmatpush.msra.mxu0 0.0
    %1053 = vmatpush.msra.mxu0 0.0
    %1054 = vmatpush.msra.mxu0 0.0
    %1055 = vmatpush.msra.mxu0 0.0
    %1056 = vmatpush.msra.mxu0 0.0
    %1057 = vmatpush.msra.mxu0 0.0
    %1058 = vmatpush.msra.mxu0 %v308
    %1059 = vmatpush.msra.mxu0 %v305
    %1060 = vmatpush.msra.mxu0 %v302
    %1061 = vmatpush.msra.mxu0 %v299
    %1062 = vmatmul.f32.gmra.mxu0 %v1044
    %v1063 = vpop.f32.mrf.mxu0
    %v1064 = vadd.f32 %v259, %v1063
    %1065 = vdwg.mxu0
    %v1066 = vmul.f32 %v1064, 1.442695
    %v1067 = vpow.pop %v1066
    %v1068 = vsel %vm556, %v1067, 0.0
    %1069 = vadd.xlane.f32.xlu0 %v1068
    %v1070 = vpop.xlane.xlu0 %1069
    %v1071 = vrcp.pop %v1070
    %v1072 = vmul.f32 %v1070, %v1071
    %v1073 = vsub.f32 1.0, %v1072
    %v1074 = vmul.f32 %v1071, %v1073
    %v1075 = vadd.f32 %v1071, %v1074
    %vm1076 = vweird.f32 %v1070
    %vm1077 = vweird.f32 %v1071
    %vm1078 = vmor %vm1076, %vm1077
    %v1079 = vsel %vm1078, %v1071, %v1075
    %v1080 = vand.u32 2147483647, %v1070
    %vm1081 = vcmp.eq.f32.partialorder %v1080, 8.507059e+37
    %v1082 = vand.u32 %v1070, 2147483648
    %v1083 = vor.u32 1.1754944e-38, %v1082
    %v1084 = vsel %vm1081, %v1083, %v1079
    %v1085 = vmul.f32 %v1067, %v1084
    %v1087 = vsel %vm575, %v1085, 0
    %1089 = vmatpush.msra.mxu0 0.0
    %1090 = vmatpush.msra.mxu0 0.0
    %1091 = vmatpush.msra.mxu0 0.0
    %1092 = vmatpush.msra.mxu0 0.0
    %1093 = vmatpush.msra.mxu0 0.0
    %1094 = vmatpush.msra.mxu0 0.0
    %1095 = vmatpush.msra.mxu0 0.0
    %1096 = vmatpush.msra.mxu0 0.0
    %1097 = vmatpush.msra.mxu0 0.0
    %1098 = vmatpush.msra.mxu0 0.0
    %1099 = vmatpush.msra.mxu0 0.0
    %1100 = vmatpush.msra.mxu0 0.0
    %1101 = vmatpush.msra.mxu0 0.0
    %1102 = vmatpush.msra.mxu0 %v581
    %1103 = vmatpush.msra.mxu0 %v257
    %1104 = vmatpush.msra.mxu0 %v256
    %1105 = vmatmul.f32.gmra.mxu0 %v1087
    %v1106 = vpop.f32.mrf.mxu0
    %v1107 = vadd.f32 0.0, %v1106
    %1108 = vdwg.mxu0
    %1109 = vmatpush.msra.mxu0 0.0
    %1110 = vmatpush.msra.mxu0 0.0
    %1111 = vmatpush.msra.mxu0 0.0
    %1112 = vmatpush.msra.mxu0 0.0
    %1113 = vmatpush.msra.mxu0 0.0
    %1114 = vmatpush.msra.mxu0 0.0
    %1115 = vmatpush.msra.mxu0 0.0
    %1116 = vmatpush.msra.mxu0 0.0
    %1117 = vmatpush.msra.mxu0 0.0
    %1118 = vmatpush.msra.mxu0 0.0
    %1119 = vmatpush.msra.mxu0 0.0
    %1120 = vmatpush.msra.mxu0 0.0
    %1121 = vmatpush.msra.mxu0 %v365
    %1122 = vmatpush.msra.mxu0 %v364
    %1123 = vmatpush.msra.mxu0 %v363
    %1124 = vmatpush.msra.mxu0 %v362
    %1125 = vmatmul.f32.gmra.mxu0 %v1044
    %v1126 = vpop.f32.mrf.mxu0
    %v1127 = vadd.f32 0.0, %v1126
    %1128 = vdwg.mxu0
    %v1130 = vsel %vm268, %v1107, 0
    %1132 = vmatpush.msra.mxu0 0.0
    %1133 = vmatpush.msra.mxu0 0.0
    %1134 = vmatpush.msra.mxu0 0.0
    %1135 = vmatpush.msra.mxu0 0.0
    %1136 = vmatpush.msra.mxu0 0.0
    %1137 = vmatpush.msra.mxu0 0.0
    %1138 = vmatpush.msra.mxu0 0.0
    %1139 = vmatpush.msra.mxu0 0.0
    %1140 = vmatpush.msra.mxu0 0.0
    %1141 = vmatpush.msra.mxu0 0.0
    %1142 = vmatpush.msra.mxu0 0.0
    %1143 = vmatpush.msra.mxu0 0.0
    %1144 = vmatpush.msra.mxu0 %v361
    %1145 = vmatpush.msra.mxu0 %v360
    %1146 = vmatpush.msra.mxu0 %v359
    %1147 = vmatpush.msra.mxu0 %v358
    %1148 = vmatmul.f32.gmra.mxu0 %v1130
    %v1149 = vpop.f32.mrf.mxu0
    %v1150 = vadd.f32 %v1127, %v1149
    %1151 = vdwg.mxu0
    %v1152 = vtanh.pop %v1150
    %v1154 = vsel %vm268, %v1152, 0
    %1156 = vmatpush.msra.mxu0 0.0
    %1157 = vmatpush.msra.mxu0 0.0
    %1158 = vmatpush.msra.mxu0 0.0
    %1159 = vmatpush.msra.mxu0 0.0
    %1160 = vmatpush.msra.mxu0 0.0
    %1161 = vmatpush.msra.mxu0 0.0
    %1162 = vmatpush.msra.mxu0 0.0
    %1163 = vmatpush.msra.mxu0 0.0
    %1164 = vmatpush.msra.mxu0 0.0
    %1165 = vmatpush.msra.mxu0 0.0
    %1166 = vmatpush.msra.mxu0 0.0
    %1167 = vmatpush.msra.mxu0 0.0
    %1168 = vmatpush.msra.mxu0 %v376
    %1169 = vmatpush.msra.mxu0 %v375
    %1170 = vmatpush.msra.mxu0 %v374
    %1171 = vmatpush.msra.mxu0 %v373
    %1172 = vmatmul.f32.gmra.mxu0 %v1154
    %v1173 = vpop.f32.mrf.mxu0
    %v1174 = vadd.f32 0.0, %v1173
    %1175 = vdwg.mxu0
    %v1177 = vrot.slane %v1174, 2
    %v1179 = vadd.f32 %v344, %v1177
    %1180 = vmatpush.msra.mxu0 0.0
    %1181 = vmatpush.msra.mxu0 0.0
    %1182 = vmatpush.msra.mxu0 0.0
    %1183 = vmatpush.msra.mxu0 0.0
    %1184 = vmatpush.msra.mxu0 0.0
    %1185 = vmatpush.msra.mxu0 0.0
    %1186 = vmatpush.msra.mxu0 0.0
    %1187 = vmatpush.msra.mxu0 0.0
    %1188 = vmatpush.msra.mxu0 0.0
    %1189 = vmatpush.msra.mxu0 0.0
    %1190 = vmatpush.msra.mxu0 0.0
    %1191 = vmatpush.msra.mxu0 0.0
    %1192 = vmatpush.msra.mxu0 %v404
    %1193 = vmatpush.msra.mxu0 %v403
    %1194 = vmatpush.msra.mxu0 %v402
    %1195 = vmatpush.msra.mxu0 %v401
    %1196 = vmatmul.f32.gmra.mxu0 %v998
    %v1197 = vpop.f32.mrf.mxu0
    %v1198 = vadd.f32 0.0, %v1197
    %1199 = vdwg.mxu0
    %v1201 = vrot.slane %v1198, 2
    %v1203 = vadd.f32 %v1179, %v1201
    %v1204 = vtanh.pop %v1203
    %v1205 = vmul.f32 %v1204, 0.5
    %v1206 = vadd.f32 %v1205, 0.5
    %v1208 = vrot.slane %v967, 6
    %v1210 = vmul.f32 %v1206, %v1208
    %1212 = vrot.lane.b32.xlu0 %v1204, 32
    %v1213 = vpop.permute.xlu0 %1212
    %v1215 = vmul.f32 %v1206, %v1213
    %1217 = vrot.lane.b32.xlu0 %v1215, 32
    %v1218 = vpop.permute.xlu0 %1217
    %v1220 = vadd.f32 %v1210, %v1218
    %v1221 = vtanh.pop %v1220
    %1223 = vrot.lane.b32.xlu0 %v1221, 32
    %v1224 = vpop.permute.xlu0 %1223
    %v1226 = vmul.f32 %v1206, %v1224
    %1227 = vmatpush.msra.mxu0 0.0
    %1228 = vmatpush.msra.mxu0 0.0
    %1229 = vmatpush.msra.mxu0 0.0
    %1230 = vmatpush.msra.mxu0 0.0
    %1231 = vmatpush.msra.mxu0 0.0
    %1232 = vmatpush.msra.mxu0 0.0
    %1233 = vmatpush.msra.mxu0 0.0
    %1234 = vmatpush.msra.mxu0 0.0
    %1235 = vmatpush.msra.mxu0 0.0
    %1236 = vmatpush.msra.mxu0 0.0
    %1237 = vmatpush.msra.mxu0 0.0
    %1238 = vmatpush.msra.mxu0 0.0
    %1239 = vmatpush.msra.mxu0 %v356
    %1240 = vmatpush.msra.mxu0 %v355
    %1241 = vmatpush.msra.mxu0 %v354
    %1242 = vmatpush.msra.mxu0 %v353
    %1243 = vmatmul.f32.gmra.mxu0 %v1044
    %v1244 = vpop.f32.mrf.mxu0
    %v1245 = vadd.f32 0.0, %v1244
    %1246 = vdwg.mxu0
    %v1248 = vrot.slane %v1226, 6
    %1249 = vrot.lane.b32.xlu0 %v1248, 64
    %v1250 = vpop.permute.xlu0 %1249
    %v1251 = vsel %vm268, %v1250, 0
    %1253 = vmatpush.msra.mxu0 0.0
    %1254 = vmatpush.msra.mxu0 0.0
    %1255 = vmatpush.msra.mxu0 0.0
    %1256 = vmatpush.msra.mxu0 0.0
    %1257 = vmatpush.msra.mxu0 0.0
    %1258 = vmatpush.msra.mxu0 0.0
    %1259 = vmatpush.msra.mxu0 0.0
    %1260 = vmatpush.msra.mxu0 0.0
    %1261 = vmatpush.msra.mxu0 0.0
    %1262 = vmatpush.msra.mxu0 0.0
    %1263 = vmatpush.msra.mxu0 0.0
    %1264 = vmatpush.msra.mxu0 0.0
    %1265 = vmatpush.msra.mxu0 %v352
    %1266 = vmatpush.msra.mxu0 %v351
    %1267 = vmatpush.msra.mxu0 %v350
    %1268 = vmatpush.msra.mxu0 %v349
    %1269 = vmatmul.f32.gmra.mxu0 %v1251
    %v1270 = vpop.f32.mrf.mxu0
    %v1271 = vadd.f32 %v1245, %v1270
    %1272 = vdwg.mxu0
    %v1273 = vadd.f32 %v1271, %v502
    %v1274 = vtanh.pop %v1273
    %v1275 = vmul.f32 %v1274, 0.5
    %v1276 = vadd.f32 %v1275, 0.5
    %v1277 = vmul.f32 %v1276, %v1034
    %1279 = vrot.lane.b32.xlu0 %v1274, 32
    %v1280 = vpop.permute.xlu0 %1279
    %v1282 = vmul.f32 %v1276, %v1280
    %1284 = vrot.lane.b32.xlu0 %v1282, 32
    %v1285 = vpop.permute.xlu0 %1284
    %v1287 = vadd.f32 %v1277, %v1285
    %v1288 = vtanh.pop %v1287
    %1290 = vrot.lane.b32.xlu0 %v1288, 32
    %v1291 = vpop.permute.xlu0 %1290
    %v1293 = vmul.f32 %v1276, %v1291
    %1295 = vrot.lane.b32.xlu0 %v1293, 64
    %v1296 = vpop.permute.xlu0 %1295
    %v1297 = vsel %vm268, %v1296, 0
    %1299 = vmatpush.msra.mxu0 0.0
    %1300 = vmatpush.msra.mxu0 0.0
    %1301 = vmatpush.msra.mxu0 0.0
    %1302 = vmatpush.msra.mxu0 0.0
    %1303 = vmatpush.msra.mxu0 0.0
    %1304 = vmatpush.msra.mxu0 0.0
    %1305 = vmatpush.msra.mxu0 0.0
    %1306 = vmatpush.msra.mxu0 0.0
    %1307 = vmatpush.msra.mxu0 0.0
    %1308 = vmatpush.msra.mxu0 0.0
    %1309 = vmatpush.msra.mxu0 0.0
    %1310 = vmatpush.msra.mxu0 0.0
    %1311 = vmatpush.msra.mxu0 %v308
    %1312 = vmatpush.msra.mxu0 %v305
    %1313 = vmatpush.msra.mxu0 %v302
    %1314 = vmatpush.msra.mxu0 %v299
    %1315 = vmatmul.f32.gmra.mxu0 %v1297
    %v1316 = vpop.f32.mrf.mxu0
    %v1317 = vadd.f32 %v259, %v1316
    %1318 = vdwg.mxu0
    %v1319 = vmul.f32 %v1317, 1.442695
    %v1320 = vpow.pop %v1319
    %v1321 = vsel %vm556, %v1320, 0.0
    %1322 = vadd.xlane.f32.xlu0 %v1321
    %v1323 = vpop.xlane.xlu0 %1322
    %v1324 = vrcp.pop %v1323
    %v1325 = vmul.f32 %v1323, %v1324
    %v1326 = vsub.f32 1.0, %v1325
    %v1327 = vmul.f32 %v1324, %v1326
    %v1328 = vadd.f32 %v1324, %v1327
    %vm1329 = vweird.f32 %v1323
    %vm1330 = vweird.f32 %v1324
    %vm1331 = vmor %vm1329, %vm1330
    %v1332 = vsel %vm1331, %v1324, %v1328
    %v1333 = vand.u32 2147483647, %v1323
    %vm1334 = vcmp.eq.f32.partialorder %v1333, 8.507059e+37
    %v1335 = vand.u32 %v1323, 2147483648
    %v1336 = vor.u32 1.1754944e-38, %v1335
    %v1337 = vsel %vm1334, %v1336, %v1332
    %v1338 = vmul.f32 %v1320, %v1337
    %v1340 = vsel %vm575, %v1338, 0
    %1342 = vmatpush.msra.mxu0 0.0
    %1343 = vmatpush.msra.mxu0 0.0
    %1344 = vmatpush.msra.mxu0 0.0
    %1345 = vmatpush.msra.mxu0 0.0
    %1346 = vmatpush.msra.mxu0 0.0
    %1347 = vmatpush.msra.mxu0 0.0
    %1348 = vmatpush.msra.mxu0 0.0
    %1349 = vmatpush.msra.mxu0 0.0
    %1350 = vmatpush.msra.mxu0 0.0
    %1351 = vmatpush.msra.mxu0 0.0
    %1352 = vmatpush.msra.mxu0 0.0
    %1353 = vmatpush.msra.mxu0 0.0
    %1354 = vmatpush.msra.mxu0 0.0
    %1355 = vmatpush.msra.mxu0 %v581
    %1356 = vmatpush.msra.mxu0 %v257
    %1357 = vmatpush.msra.mxu0 %v256
    %1358 = vmatmul.f32.gmra.mxu0 %v1340
    %v1359 = vpop.f32.mrf.mxu0
    %v1360 = vadd.f32 0.0, %v1359
    %1361 = vdwg.mxu0
    %1362 = vmatpush.msra.mxu0 0.0
    %1363 = vmatpush.msra.mxu0 0.0
    %1364 = vmatpush.msra.mxu0 0.0
    %1365 = vmatpush.msra.mxu0 0.0
    %1366 = vmatpush.msra.mxu0 0.0
    %1367 = vmatpush.msra.mxu0 0.0
    %1368 = vmatpush.msra.mxu0 0.0
    %1369 = vmatpush.msra.mxu0 0.0
    %1370 = vmatpush.msra.mxu0 0.0
    %1371 = vmatpush.msra.mxu0 0.0
    %1372 = vmatpush.msra.mxu0 0.0
    %1373 = vmatpush.msra.mxu0 0.0
    %1374 = vmatpush.msra.mxu0 %v365
    %1375 = vmatpush.msra.mxu0 %v364
    %1376 = vmatpush.msra.mxu0 %v363
    %1377 = vmatpush.msra.mxu0 %v362
    %1378 = vmatmul.f32.gmra.mxu0 %v1297
    %v1379 = vpop.f32.mrf.mxu0
    %v1380 = vadd.f32 0.0, %v1379
    %1381 = vdwg.mxu0
    %v1383 = vsel %vm268, %v1360, 0
    %1385 = vmatpush.msra.mxu0 0.0
    %1386 = vmatpush.msra.mxu0 0.0
    %1387 = vmatpush.msra.mxu0 0.0
    %1388 = vmatpush.msra.mxu0 0.0
    %1389 = vmatpush.msra.mxu0 0.0
    %1390 = vmatpush.msra.mxu0 0.0
    %1391 = vmatpush.msra.mxu0 0.0
    %1392 = vmatpush.msra.mxu0 0.0
    %1393 = vmatpush.msra.mxu0 0.0
    %1394 = vmatpush.msra.mxu0 0.0
    %1395 = vmatpush.msra.mxu0 0.0
    %1396 = vmatpush.msra.mxu0 0.0
    %1397 = vmatpush.msra.mxu0 %v361
    %1398 = vmatpush.msra.mxu0 %v360
    %1399 = vmatpush.msra.mxu0 %v359
    %1400 = vmatpush.msra.mxu0 %v358
    %1401 = vmatmul.f32.gmra.mxu0 %v1383
    %v1402 = vpop.f32.mrf.mxu0
    %v1403 = vadd.f32 %v1380, %v1402
    %1404 = vdwg.mxu0
    %v1405 = vtanh.pop %v1403
    %v1407 = vsel %vm268, %v1405, 0
    %1409 = vmatpush.msra.mxu0 0.0
    %1410 = vmatpush.msra.mxu0 0.0
    %1411 = vmatpush.msra.mxu0 0.0
    %1412 = vmatpush.msra.mxu0 0.0
    %1413 = vmatpush.msra.mxu0 0.0
    %1414 = vmatpush.msra.mxu0 0.0
    %1415 = vmatpush.msra.mxu0 0.0
    %1416 = vmatpush.msra.mxu0 0.0
    %1417 = vmatpush.msra.mxu0 0.0
    %1418 = vmatpush.msra.mxu0 0.0
    %1419 = vmatpush.msra.mxu0 0.0
    %1420 = vmatpush.msra.mxu0 0.0
    %1421 = vmatpush.msra.mxu0 %v376
    %1422 = vmatpush.msra.mxu0 %v375
    %1423 = vmatpush.msra.mxu0 %v374
    %1424 = vmatpush.msra.mxu0 %v373
    %1425 = vmatmul.f32.gmra.mxu0 %v1407
    %v1426 = vpop.f32.mrf.mxu0
    %v1427 = vadd.f32 0.0, %v1426
    %1428 = vdwg.mxu0
    %v1429 = vadd.f32 %v347, %v1427
    %1430 = vmatpush.msra.mxu0 0.0
    %1431 = vmatpush.msra.mxu0 0.0
    %1432 = vmatpush.msra.mxu0 0.0
    %1433 = vmatpush.msra.mxu0 0.0
    %1434 = vmatpush.msra.mxu0 0.0
    %1435 = vmatpush.msra.mxu0 0.0
    %1436 = vmatpush.msra.mxu0 0.0
    %1437 = vmatpush.msra.mxu0 0.0
    %1438 = vmatpush.msra.mxu0 0.0
    %1439 = vmatpush.msra.mxu0 0.0
    %1440 = vmatpush.msra.mxu0 0.0
    %1441 = vmatpush.msra.mxu0 0.0
    %1442 = vmatpush.msra.mxu0 %v404
    %1443 = vmatpush.msra.mxu0 %v403
    %1444 = vmatpush.msra.mxu0 %v402
    %1445 = vmatpush.msra.mxu0 %v401
    %1446 = vmatmul.f32.gmra.mxu0 %v1251
    %v1447 = vpop.f32.mrf.mxu0
    %v1448 = vadd.f32 0.0, %v1447
    %1449 = vdwg.mxu0
    %v1450 = vadd.f32 %v1429, %v1448
    %v1451 = vtanh.pop %v1450
    %v1452 = vmul.f32 %v1451, 0.5
    %v1453 = vadd.f32 %v1452, 0.5
    %v1455 = vrot.slane %v1220, 6
    %v1457 = vmul.f32 %v1453, %v1455
    %1459 = vrot.lane.b32.xlu0 %v1451, 32
    %v1460 = vpop.permute.xlu0 %1459
    %v1462 = vmul.f32 %v1453, %v1460
    %1464 = vrot.lane.b32.xlu0 %v1462, 32
    %v1465 = vpop.permute.xlu0 %1464
    %v1467 = vadd.f32 %v1457, %v1465
    %v1468 = vtanh.pop %v1467
    %1470 = vrot.lane.b32.xlu0 %v1468, 32
    %v1471 = vpop.permute.xlu0 %1470
    %v1473 = vmul.f32 %v1453, %v1471
    %1474 = vmatpush.msra.mxu0 0.0
    %1475 = vmatpush.msra.mxu0 0.0
    %1476 = vmatpush.msra.mxu0 0.0
    %1477 = vmatpush.msra.mxu0 0.0
    %1478 = vmatpush.msra.mxu0 0.0
    %1479 = vmatpush.msra.mxu0 0.0
    %1480 = vmatpush.msra.mxu0 0.0
    %1481 = vmatpush.msra.mxu0 0.0
    %1482 = vmatpush.msra.mxu0 0.0
    %1483 = vmatpush.msra.mxu0 0.0
    %1484 = vmatpush.msra.mxu0 0.0
    %1485 = vmatpush.msra.mxu0 0.0
    %1486 = vmatpush.msra.mxu0 %v356
    %1487 = vmatpush.msra.mxu0 %v355
    %1488 = vmatpush.msra.mxu0 %v354
    %1489 = vmatpush.msra.mxu0 %v353
    %1490 = vmatmul.f32.gmra.mxu0 %v1297
    %v1491 = vpop.f32.mrf.mxu0
    %v1492 = vadd.f32 0.0, %v1491
    %1493 = vdwg.mxu0
    %1495 = vrot.lane.b32.xlu0 %v1473, 64
    %v1496 = vpop.permute.xlu0 %1495
    %v1497 = vsel %vm268, %v1496, 0
    %1499 = vmatpush.msra.mxu0 0.0
    %1500 = vmatpush.msra.mxu0 0.0
    %1501 = vmatpush.msra.mxu0 0.0
    %1502 = vmatpush.msra.mxu0 0.0
    %1503 = vmatpush.msra.mxu0 0.0
    %1504 = vmatpush.msra.mxu0 0.0
    %1505 = vmatpush.msra.mxu0 0.0
    %1506 = vmatpush.msra.mxu0 0.0
    %1507 = vmatpush.msra.mxu0 0.0
    %1508 = vmatpush.msra.mxu0 0.0
    %1509 = vmatpush.msra.mxu0 0.0
    %1510 = vmatpush.msra.mxu0 0.0
    %1511 = vmatpush.msra.mxu0 %v352
    %1512 = vmatpush.msra.mxu0 %v351
    %1513 = vmatpush.msra.mxu0 %v350
    %1514 = vmatpush.msra.mxu0 %v349
    %1515 = vmatmul.f32.gmra.mxu0 %v1497
    %v1516 = vpop.f32.mrf.mxu0
    %v1517 = vadd.f32 %v1492, %v1516
    %1518 = vdwg.mxu0
    %v1519 = vadd.f32 %v1517, %v502
    %v1520 = vtanh.pop %v1519
    %v1521 = vmul.f32 %v1520, 0.5
    %v1522 = vadd.f32 %v1521, 0.5
    %v1523 = vmul.f32 %v1522, %v1287
    %1525 = vrot.lane.b32.xlu0 %v1520, 32
    %v1526 = vpop.permute.xlu0 %1525
    %v1528 = vmul.f32 %v1522, %v1526
    %1530 = vrot.lane.b32.xlu0 %v1528, 32
    %v1531 = vpop.permute.xlu0 %1530
    %v1533 = vadd.f32 %v1523, %v1531
    %v1534 = vtanh.pop %v1533
    %1536 = vrot.lane.b32.xlu0 %v1534, 32
    %v1537 = vpop.permute.xlu0 %1536
    %v1539 = vmul.f32 %v1522, %v1537
    %1541 = vrot.lane.b32.xlu0 %v1539, 64
    %v1542 = vpop.permute.xlu0 %1541
    %v1543 = vsel %vm268, %v1542, 0
    %1545 = vmatpush.msra.mxu0 0.0
    %1546 = vmatpush.msra.mxu0 0.0
    %1547 = vmatpush.msra.mxu0 0.0
    %1548 = vmatpush.msra.mxu0 0.0
    %1549 = vmatpush.msra.mxu0 0.0
    %1550 = vmatpush.msra.mxu0 0.0
    %1551 = vmatpush.msra.mxu0 0.0
    %1552 = vmatpush.msra.mxu0 0.0
    %1553 = vmatpush.msra.mxu0 0.0
    %1554 = vmatpush.msra.mxu0 0.0
    %1555 = vmatpush.msra.mxu0 0.0
    %1556 = vmatpush.msra.mxu0 0.0
    %1557 = vmatpush.msra.mxu0 %v308
    %1558 = vmatpush.msra.mxu0 %v305
    %1559 = vmatpush.msra.mxu0 %v302
    %1560 = vmatpush.msra.mxu0 %v299
    %1561 = vmatmul.f32.gmra.mxu0 %v1543
    %v1562 = vpop.f32.mrf.mxu0
    %v1563 = vadd.f32 %v259, %v1562
    %1564 = vdwg.mxu0
    %v1565 = vmul.f32 %v1563, 1.442695
    %v1566 = vpow.pop %v1565
    %v1567 = vsel %vm556, %v1566, 0.0
    %1568 = vadd.xlane.f32.xlu0 %v1567
    %v1569 = vpop.xlane.xlu0 %1568
    %v1570 = vrcp.pop %v1569
    %v1571 = vmul.f32 %v1569, %v1570
    %v1572 = vsub.f32 1.0, %v1571
    %v1573 = vmul.f32 %v1570, %v1572
    %v1574 = vadd.f32 %v1570, %v1573
    %vm1575 = vweird.f32 %v1569
    %vm1576 = vweird.f32 %v1570
    %vm1577 = vmor %vm1575, %vm1576
    %v1578 = vsel %vm1577, %v1570, %v1574
    %v1579 = vand.u32 2147483647, %v1569
    %vm1580 = vcmp.eq.f32.partialorder %v1579, 8.507059e+37
    %v1581 = vand.u32 %v1569, 2147483648
    %v1582 = vor.u32 1.1754944e-38, %v1581
    %v1583 = vsel %vm1580, %v1582, %v1578
    %v1584 = vmul.f32 %v1566, %v1583
    %v1586 = vsel %vm575, %v1584, 0
    %1588 = vmatpush.msra.mxu0 0.0
    %1589 = vmatpush.msra.mxu0 0.0
    %1590 = vmatpush.msra.mxu0 0.0
    %1591 = vmatpush.msra.mxu0 0.0
    %1592 = vmatpush.msra.mxu0 0.0
    %1593 = vmatpush.msra.mxu0 0.0
    %1594 = vmatpush.msra.mxu0 0.0
    %1595 = vmatpush.msra.mxu0 0.0
    %1596 = vmatpush.msra.mxu0 0.0
    %1597 = vmatpush.msra.mxu0 0.0
    %1598 = vmatpush.msra.mxu0 0.0
    %1599 = vmatpush.msra.mxu0 0.0
    %1600 = vmatpush.msra.mxu0 0.0
    %1601 = vmatpush.msra.mxu0 %v581
    %1602 = vmatpush.msra.mxu0 %v257
    %1603 = vmatpush.msra.mxu0 %v256
    %1604 = vmatmul.f32.gmra.mxu0 %v1586
    %v1605 = vpop.f32.mrf.mxu0
    %v1606 = vadd.f32 0.0, %v1605
    %1607 = vdwg.mxu0
    %1608 = vmatpush.msra.mxu0 0.0
    %1609 = vmatpush.msra.mxu0 0.0
    %1610 = vmatpush.msra.mxu0 0.0
    %1611 = vmatpush.msra.mxu0 0.0
    %1612 = vmatpush.msra.mxu0 0.0
    %1613 = vmatpush.msra.mxu0 0.0
    %1614 = vmatpush.msra.mxu0 0.0
    %1615 = vmatpush.msra.mxu0 0.0
    %1616 = vmatpush.msra.mxu0 0.0
    %1617 = vmatpush.msra.mxu0 0.0
    %1618 = vmatpush.msra.mxu0 0.0
    %1619 = vmatpush.msra.mxu0 0.0
    %1620 = vmatpush.msra.mxu0 %v365
    %1621 = vmatpush.msra.mxu0 %v364
    %1622 = vmatpush.msra.mxu0 %v363
    %1623 = vmatpush.msra.mxu0 %v362
    %1624 = vmatmul.f32.gmra.mxu0 %v1543
    %v1625 = vpop.f32.mrf.mxu0
    %v1626 = vadd.f32 0.0, %v1625
    %1627 = vdwg.mxu0
    %v1629 = vsel %vm268, %v1606, 0
    %1631 = vmatpush.msra.mxu0 0.0
    %1632 = vmatpush.msra.mxu0 0.0
    %1633 = vmatpush.msra.mxu0 0.0
    %1634 = vmatpush.msra.mxu0 0.0
    %1635 = vmatpush.msra.mxu0 0.0
    %1636 = vmatpush.msra.mxu0 0.0
    %1637 = vmatpush.msra.mxu0 0.0
    %1638 = vmatpush.msra.mxu0 0.0
    %1639 = vmatpush.msra.mxu0 0.0
    %1640 = vmatpush.msra.mxu0 0.0
    %1641 = vmatpush.msra.mxu0 0.0
    %1642 = vmatpush.msra.mxu0 0.0
    %1643 = vmatpush.msra.mxu0 %v361
    %1644 = vmatpush.msra.mxu0 %v360
    %1645 = vmatpush.msra.mxu0 %v359
    %1646 = vmatpush.msra.mxu0 %v358
    %1647 = vmatmul.f32.gmra.mxu0 %v1629
    %v1648 = vpop.f32.mrf.mxu0
    %v1649 = vadd.f32 %v1626, %v1648
    %1650 = vdwg.mxu0
    %v1651 = vtanh.pop %v1649
    %v1653 = vsel %vm268, %v1651, 0
    %1655 = vmatpush.msra.mxu0 0.0
    %1656 = vmatpush.msra.mxu0 0.0
    %1657 = vmatpush.msra.mxu0 0.0
    %1658 = vmatpush.msra.mxu0 0.0
    %1659 = vmatpush.msra.mxu0 0.0
    %1660 = vmatpush.msra.mxu0 0.0
    %1661 = vmatpush.msra.mxu0 0.0
    %1662 = vmatpush.msra.mxu0 0.0
    %1663 = vmatpush.msra.mxu0 0.0
    %1664 = vmatpush.msra.mxu0 0.0
    %1665 = vmatpush.msra.mxu0 0.0
    %1666 = vmatpush.msra.mxu0 0.0
    %1667 = vmatpush.msra.mxu0 %v376
    %1668 = vmatpush.msra.mxu0 %v375
    %1669 = vmatpush.msra.mxu0 %v374
    %1670 = vmatpush.msra.mxu0 %v373
    %1671 = vmatmul.f32.gmra.mxu0 %v1653
    %v1672 = vpop.f32.mrf.mxu0
    %v1673 = vadd.f32 0.0, %v1672
    %1674 = vdwg.mxu0
    %v1676 = vrot.slane %v1673, 6
    %v1678 = vadd.f32 %v347, %v1676
    %1679 = vmatpush.msra.mxu0 0.0
    %1680 = vmatpush.msra.mxu0 0.0
    %1681 = vmatpush.msra.mxu0 0.0
    %1682 = vmatpush.msra.mxu0 0.0
    %1683 = vmatpush.msra.mxu0 0.0
    %1684 = vmatpush.msra.mxu0 0.0
    %1685 = vmatpush.msra.mxu0 0.0
    %1686 = vmatpush.msra.mxu0 0.0
    %1687 = vmatpush.msra.mxu0 0.0
    %1688 = vmatpush.msra.mxu0 0.0
    %1689 = vmatpush.msra.mxu0 0.0
    %1690 = vmatpush.msra.mxu0 0.0
    %1691 = vmatpush.msra.mxu0 %v404
    %1692 = vmatpush.msra.mxu0 %v403
    %1693 = vmatpush.msra.mxu0 %v402
    %1694 = vmatpush.msra.mxu0 %v401
    %1695 = vmatmul.f32.gmra.mxu0 %v1497
    %v1696 = vpop.f32.mrf.mxu0
    %v1697 = vadd.f32 0.0, %v1696
    %1698 = vdwg.mxu0
    %v1700 = vrot.slane %v1697, 6
    %v1702 = vadd.f32 %v1678, %v1700
    %v1703 = vtanh.pop %v1702
    %v1704 = vmul.f32 %v1703, 0.5
    %v1705 = vadd.f32 %v1704, 0.5
    %v1707 = vrot.slane %v1467, 6
    %v1709 = vmul.f32 %v1705, %v1707
    %1711 = vrot.lane.b32.xlu0 %v1703, 32
    %v1712 = vpop.permute.xlu0 %1711
    %v1714 = vmul.f32 %v1705, %v1712
    %1716 = vrot.lane.b32.xlu0 %v1714, 32
    %v1717 = vpop.permute.xlu0 %1716
    %v1719 = vadd.f32 %v1709, %v1717
    %v1720 = vtanh.pop %v1719
    %1722 = vrot.lane.b32.xlu0 %v1720, 32
    %v1723 = vpop.permute.xlu0 %1722
    %v1725 = vmul.f32 %v1705, %v1723
    %1726 = vmatpush.msra.mxu0 0.0
    %1727 = vmatpush.msra.mxu0 0.0
    %1728 = vmatpush.msra.mxu0 0.0
    %1729 = vmatpush.msra.mxu0 0.0
    %1730 = vmatpush.msra.mxu0 0.0
    %1731 = vmatpush.msra.mxu0 0.0
    %1732 = vmatpush.msra.mxu0 0.0
    %1733 = vmatpush.msra.mxu0 0.0
    %1734 = vmatpush.msra.mxu0 0.0
    %1735 = vmatpush.msra.mxu0 0.0
    %1736 = vmatpush.msra.mxu0 0.0
    %1737 = vmatpush.msra.mxu0 0.0
    %1738 = vmatpush.msra.mxu0 %v356
    %1739 = vmatpush.msra.mxu0 %v355
    %1740 = vmatpush.msra.mxu0 %v354
    %1741 = vmatpush.msra.mxu0 %v353
    %1742 = vmatmul.f32.gmra.mxu0 %v1543
    %v1743 = vpop.f32.mrf.mxu0
    %v1744 = vadd.f32 0.0, %v1743
    %1745 = vdwg.mxu0
    %v1747 = vrot.slane %v1725, 2
    %1748 = vrot.lane.b32.xlu0 %v1747, 64
    %v1749 = vpop.permute.xlu0 %1748
    %v1750 = vsel %vm268, %v1749, 0
    %1752 = vmatpush.msra.mxu0 0.0
    %1753 = vmatpush.msra.mxu0 0.0
    %1754 = vmatpush.msra.mxu0 0.0
    %1755 = vmatpush.msra.mxu0 0.0
    %1756 = vmatpush.msra.mxu0 0.0
    %1757 = vmatpush.msra.mxu0 0.0
    %1758 = vmatpush.msra.mxu0 0.0
    %1759 = vmatpush.msra.mxu0 0.0
    %1760 = vmatpush.msra.mxu0 0.0
    %1761 = vmatpush.msra.mxu0 0.0
    %1762 = vmatpush.msra.mxu0 0.0
    %1763 = vmatpush.msra.mxu0 0.0
    %1764 = vmatpush.msra.mxu0 %v352
    %1765 = vmatpush.msra.mxu0 %v351
    %1766 = vmatpush.msra.mxu0 %v350
    %1767 = vmatpush.msra.mxu0 %v349
    %1768 = vmatmul.f32.gmra.mxu0 %v1750
    %v1769 = vpop.f32.mrf.mxu0
    %v1770 = vadd.f32 %v1744, %v1769
    %1771 = vdwg.mxu0
    %v1772 = vadd.f32 %v1770, %v502
    %v1773 = vtanh.pop %v1772
    %v1774 = vmul.f32 %v1773, 0.5
    %v1775 = vadd.f32 %v1774, 0.5
    %v1776 = vmul.f32 %v1775, %v1533
    %1778 = vrot.lane.b32.xlu0 %v1773, 32
    %v1779 = vpop.permute.xlu0 %1778
    %v1781 = vmul.f32 %v1775, %v1779
    %1783 = vrot.lane.b32.xlu0 %v1781, 32
    %v1784 = vpop.permute.xlu0 %1783
    %v1786 = vadd.f32 %v1776, %v1784
    %v1787 = vtanh.pop %v1786
    %1789 = vrot.lane.b32.xlu0 %v1787, 32
    %v1790 = vpop.permute.xlu0 %1789
    %v1792 = vmul.f32 %v1775, %v1790
    %1794 = vrot.lane.b32.xlu0 %v1792, 64
    %v1795 = vpop.permute.xlu0 %1794
    %v1796 = vsel %vm268, %v1795, 0
    %1798 = vmatpush.msra.mxu0 0.0
    %1799 = vmatpush.msra.mxu0 0.0
    %1800 = vmatpush.msra.mxu0 0.0
    %1801 = vmatpush.msra.mxu0 0.0
    %1802 = vmatpush.msra.mxu0 0.0
    %1803 = vmatpush.msra.mxu0 0.0
    %1804 = vmatpush.msra.mxu0 0.0
    %1805 = vmatpush.msra.mxu0 0.0
    %1806 = vmatpush.msra.mxu0 0.0
    %1807 = vmatpush.msra.mxu0 0.0
    %1808 = vmatpush.msra.mxu0 0.0
    %1809 = vmatpush.msra.mxu0 0.0
    %1810 = vmatpush.msra.mxu0 %v308
    %1811 = vmatpush.msra.mxu0 %v305
    %1812 = vmatpush.msra.mxu0 %v302
    %1813 = vmatpush.msra.mxu0 %v299
    %1814 = vmatmul.f32.gmra.mxu0 %v1796
    %v1815 = vpop.f32.mrf.mxu0
    %v1816 = vadd.f32 %v259, %v1815
    %1817 = vdwg.mxu0
    %v1818 = vmul.f32 %v1816, 1.442695
    %v1819 = vpow.pop %v1818
    %v1820 = vsel %vm556, %v1819, 0.0
    %1821 = vadd.xlane.f32.xlu0 %v1820
    %v1822 = vpop.xlane.xlu0 %1821
    %v1823 = vrcp.pop %v1822
    %v1824 = vmul.f32 %v1822, %v1823
    %v1825 = vsub.f32 1.0, %v1824
    %v1826 = vmul.f32 %v1823, %v1825
    %v1827 = vadd.f32 %v1823, %v1826
    %vm1828 = vweird.f32 %v1822
    %vm1829 = vweird.f32 %v1823
    %vm1830 = vmor %vm1828, %vm1829
    %v1831 = vsel %vm1830, %v1823, %v1827
    %v1832 = vand.u32 2147483647, %v1822
    %vm1833 = vcmp.eq.f32.partialorder %v1832, 8.507059e+37
    %v1834 = vand.u32 %v1822, 2147483648
    %v1835 = vor.u32 1.1754944e-38, %v1834
    %v1836 = vsel %vm1833, %v1835, %v1831
    %v1837 = vmul.f32 %v1819, %v1836
    %v1839 = vsel %vm575, %v1837, 0
    %1841 = vmatpush.msra.mxu0 0.0
    %1842 = vmatpush.msra.mxu0 0.0
    %1843 = vmatpush.msra.mxu0 0.0
    %1844 = vmatpush.msra.mxu0 0.0
    %1845 = vmatpush.msra.mxu0 0.0
    %1846 = vmatpush.msra.mxu0 0.0
    %1847 = vmatpush.msra.mxu0 0.0
    %1848 = vmatpush.msra.mxu0 0.0
    %1849 = vmatpush.msra.mxu0 0.0
    %1850 = vmatpush.msra.mxu0 0.0
    %1851 = vmatpush.msra.mxu0 0.0
    %1852 = vmatpush.msra.mxu0 0.0
    %1853 = vmatpush.msra.mxu0 0.0
    %1854 = vmatpush.msra.mxu0 %v581
    %1855 = vmatpush.msra.mxu0 %v257
    %1856 = vmatpush.msra.mxu0 %v256
    %1857 = vmatmul.f32.gmra.mxu0 %v1839
    %v1858 = vpop.f32.mrf.mxu0
    %v1859 = vadd.f32 0.0, %v1858
    %1860 = vdwg.mxu0
    %1861 = vmatpush.msra.mxu0 0.0
    %1862 = vmatpush.msra.mxu0 0.0
    %1863 = vmatpush.msra.mxu0 0.0
    %1864 = vmatpush.msra.mxu0 0.0
    %1865 = vmatpush.msra.mxu0 0.0
    %1866 = vmatpush.msra.mxu0 0.0
    %1867 = vmatpush.msra.mxu0 0.0
    %1868 = vmatpush.msra.mxu0 0.0
    %1869 = vmatpush.msra.mxu0 0.0
    %1870 = vmatpush.msra.mxu0 0.0
    %1871 = vmatpush.msra.mxu0 0.0
    %1872 = vmatpush.msra.mxu0 0.0
    %1873 = vmatpush.msra.mxu0 %v365
    %1874 = vmatpush.msra.mxu0 %v364
    %1875 = vmatpush.msra.mxu0 %v363
    %1876 = vmatpush.msra.mxu0 %v362
    %1877 = vmatmul.f32.gmra.mxu0 %v1796
    %v1878 = vpop.f32.mrf.mxu0
    %v1879 = vadd.f32 0.0, %v1878
    %1880 = vdwg.mxu0
    %v1882 = vsel %vm268, %v1859, 0
    %1884 = vmatpush.msra.mxu0 0.0
    %1885 = vmatpush.msra.mxu0 0.0
    %1886 = vmatpush.msra.mxu0 0.0
    %1887 = vmatpush.msra.mxu0 0.0
    %1888 = vmatpush.msra.mxu0 0.0
    %1889 = vmatpush.msra.mxu0 0.0
    %1890 = vmatpush.msra.mxu0 0.0
    %1891 = vmatpush.msra.mxu0 0.0
    %1892 = vmatpush.msra.mxu0 0.0
    %1893 = vmatpush.msra.mxu0 0.0
    %1894 = vmatpush.msra.mxu0 0.0
    %1895 = vmatpush.msra.mxu0 0.0
    %1896 = vmatpush.msra.mxu0 %v361
    %1897 = vmatpush.msra.mxu0 %v360
    %1898 = vmatpush.msra.mxu0 %v359
    %1899 = vmatpush.msra.mxu0 %v358
    %1900 = vmatmul.f32.gmra.mxu0 %v1882
    %v1901 = vpop.f32.mrf.mxu0
    %v1902 = vadd.f32 %v1879, %v1901
    %1903 = vdwg.mxu0
    %v1904 = vtanh.pop %v1902
    %v1906 = vsel %vm268, %v1904, 0
    %1908 = vmatpush.msra.mxu0 0.0
    %1909 = vmatpush.msra.mxu0 0.0
    %1910 = vmatpush.msra.mxu0 0.0
    %1911 = vmatpush.msra.mxu0 0.0
    %1912 = vmatpush.msra.mxu0 0.0
    %1913 = vmatpush.msra.mxu0 0.0
    %1914 = vmatpush.msra.mxu0 0.0
    %1915 = vmatpush.msra.mxu0 0.0
    %1916 = vmatpush.msra.mxu0 0.0
    %1917 = vmatpush.msra.mxu0 0.0
    %1918 = vmatpush.msra.mxu0 0.0
    %1919 = vmatpush.msra.mxu0 0.0
    %1920 = vmatpush.msra.mxu0 %v376
    %1921 = vmatpush.msra.mxu0 %v375
    %1922 = vmatpush.msra.mxu0 %v374
    %1923 = vmatpush.msra.mxu0 %v373
    %1924 = vmatmul.f32.gmra.mxu0 %v1906
    %v1925 = vpop.f32.mrf.mxu0
    %v1926 = vadd.f32 0.0, %v1925
    %1927 = vdwg.mxu0
    %v1929 = vrot.slane %v1926, 4
    %v1931 = vadd.f32 %v347, %v1929
    %1932 = vmatpush.msra.mxu0 0.0
    %1933 = vmatpush.msra.mxu0 0.0
    %1934 = vmatpush.msra.mxu0 0.0
    %1935 = vmatpush.msra.mxu0 0.0
    %1936 = vmatpush.msra.mxu0 0.0
    %1937 = vmatpush.msra.mxu0 0.0
    %1938 = vmatpush.msra.mxu0 0.0
    %1939 = vmatpush.msra.mxu0 0.0
    %1940 = vmatpush.msra.mxu0 0.0
    %1941 = vmatpush.msra.mxu0 0.0
    %1942 = vmatpush.msra.mxu0 0.0
    %1943 = vmatpush.msra.mxu0 0.0
    %1944 = vmatpush.msra.mxu0 %v404
    %1945 = vmatpush.msra.mxu0 %v403
    %1946 = vmatpush.msra.mxu0 %v402
    %1947 = vmatpush.msra.mxu0 %v401
    %1948 = vmatmul.f32.gmra.mxu0 %v1750
    %v1949 = vpop.f32.mrf.mxu0
    %v1950 = vadd.f32 0.0, %v1949
    %1951 = vdwg.mxu0
    %v1953 = vrot.slane %v1950, 4
    %v1955 = vadd.f32 %v1931, %v1953
    %v1956 = vtanh.pop %v1955
    %v1957 = vmul.f32 %v1956, 0.5
    %v1958 = vadd.f32 %v1957, 0.5
    %v1960 = vrot.slane %v1719, 6
    %v1962 = vmul.f32 %v1958, %v1960
    %1964 = vrot.lane.b32.xlu0 %v1956, 32
    %v1965 = vpop.permute.xlu0 %1964
    %v1967 = vmul.f32 %v1958, %v1965
    %1969 = vrot.lane.b32.xlu0 %v1967, 32
    %v1970 = vpop.permute.xlu0 %1969
    %v1972 = vadd.f32 %v1962, %v1970
    %v1973 = vtanh.pop %v1972
    %1975 = vrot.lane.b32.xlu0 %v1973, 32
    %v1976 = vpop.permute.xlu0 %1975
    %v1978 = vmul.f32 %v1958, %v1976
    %1979 = vmatpush.msra.mxu0 0.0
    %1980 = vmatpush.msra.mxu0 0.0
    %1981 = vmatpush.msra.mxu0 0.0
    %1982 = vmatpush.msra.mxu0 0.0
    %1983 = vmatpush.msra.mxu0 0.0
    %1984 = vmatpush.msra.mxu0 0.0
    %1985 = vmatpush.msra.mxu0 0.0
    %1986 = vmatpush.msra.mxu0 0.0
    %1987 = vmatpush.msra.mxu0 0.0
    %1988 = vmatpush.msra.mxu0 0.0
    %1989 = vmatpush.msra.mxu0 0.0
    %1990 = vmatpush.msra.mxu0 0.0
    %1991 = vmatpush.msra.mxu0 %v356
    %1992 = vmatpush.msra.mxu0 %v355
    %1993 = vmatpush.msra.mxu0 %v354
    %1994 = vmatpush.msra.mxu0 %v353
    %1995 = vmatmul.f32.gmra.mxu0 %v1796
    %v1996 = vpop.f32.mrf.mxu0
    %v1997 = vadd.f32 0.0, %v1996
    %1998 = vdwg.mxu0
    %v2000 = vrot.slane %v1978, 4
    %2001 = vrot.lane.b32.xlu0 %v2000, 64
    %v2002 = vpop.permute.xlu0 %2001
    %v2003 = vsel %vm268, %v2002, 0
    %2005 = vmatpush.msra.mxu0 0.0
    %2006 = vmatpush.msra.mxu0 0.0
    %2007 = vmatpush.msra.mxu0 0.0
    %2008 = vmatpush.msra.mxu0 0.0
    %2009 = vmatpush.msra.mxu0 0.0
    %2010 = vmatpush.msra.mxu0 0.0
    %2011 = vmatpush.msra.mxu0 0.0
    %2012 = vmatpush.msra.mxu0 0.0
    %2013 = vmatpush.msra.mxu0 0.0
    %2014 = vmatpush.msra.mxu0 0.0
    %2015 = vmatpush.msra.mxu0 0.0
    %2016 = vmatpush.msra.mxu0 0.0
    %2017 = vmatpush.msra.mxu0 %v352
    %2018 = vmatpush.msra.mxu0 %v351
    %2019 = vmatpush.msra.mxu0 %v350
    %2020 = vmatpush.msra.mxu0 %v349
    %2021 = vmatmul.f32.gmra.mxu0 %v2003
    %v2022 = vpop.f32.mrf.mxu0
    %v2023 = vadd.f32 %v1997, %v2022
    %2024 = vdwg.mxu0
    %v2025 = vadd.f32 %v2023, %v502
    %v2026 = vtanh.pop %v2025
    %v2027 = vmul.f32 %v2026, 0.5
    %v2028 = vadd.f32 %v2027, 0.5
    %v2029 = vmul.f32 %v2028, %v1786
    %2031 = vrot.lane.b32.xlu0 %v2026, 32
    %v2032 = vpop.permute.xlu0 %2031
    %v2034 = vmul.f32 %v2028, %v2032
    %2036 = vrot.lane.b32.xlu0 %v2034, 32
    %v2037 = vpop.permute.xlu0 %2036
    %v2039 = vadd.f32 %v2029, %v2037
    %v2040 = vtanh.pop %v2039
    %2042 = vrot.lane.b32.xlu0 %v2040, 32
    %v2043 = vpop.permute.xlu0 %2042
    %v2045 = vmul.f32 %v2028, %v2043
    %2047 = vrot.lane.b32.xlu0 %v2045, 64
    %v2048 = vpop.permute.xlu0 %2047
    %v2049 = vsel %vm268, %v2048, 0
    %2051 = vmatpush.msra.mxu0 0.0
    %2052 = vmatpush.msra.mxu0 0.0
    %2053 = vmatpush.msra.mxu0 0.0
    %2054 = vmatpush.msra.mxu0 0.0
    %2055 = vmatpush.msra.mxu0 0.0
    %2056 = vmatpush.msra.mxu0 0.0
    %2057 = vmatpush.msra.mxu0 0.0
    %2058 = vmatpush.msra.mxu0 0.0
    %2059 = vmatpush.msra.mxu0 0.0
    %2060 = vmatpush.msra.mxu0 0.0
    %2061 = vmatpush.msra.mxu0 0.0
    %2062 = vmatpush.msra.mxu0 0.0
    %2063 = vmatpush.msra.mxu0 %v308
    %2064 = vmatpush.msra.mxu0 %v305
    %2065 = vmatpush.msra.mxu0 %v302
    %2066 = vmatpush.msra.mxu0 %v299
    %2067 = vmatmul.f32.gmra.mxu0 %v2049
    %v2068 = vpop.f32.mrf.mxu0
    %v2069 = vadd.f32 %v259, %v2068
    %2070 = vdwg.mxu0
    %v2071 = vmul.f32 %v2069, 1.442695
    %v2072 = vpow.pop %v2071
    %v2073 = vsel %vm556, %v2072, 0.0
    %2074 = vadd.xlane.f32.xlu0 %v2073
    %v2075 = vpop.xlane.xlu0 %2074
    %v2076 = vrcp.pop %v2075
    %v2077 = vmul.f32 %v2075, %v2076
    %v2078 = vsub.f32 1.0, %v2077
    %v2079 = vmul.f32 %v2076, %v2078
    %v2080 = vadd.f32 %v2076, %v2079
    %vm2081 = vweird.f32 %v2075
    %vm2082 = vweird.f32 %v2076
    %vm2083 = vmor %vm2081, %vm2082
    %v2084 = vsel %vm2083, %v2076, %v2080
    %v2085 = vand.u32 2147483647, %v2075
    %vm2086 = vcmp.eq.f32.partialorder %v2085, 8.507059e+37
    %v2087 = vand.u32 %v2075, 2147483648
    %v2088 = vor.u32 1.1754944e-38, %v2087
    %v2089 = vsel %vm2086, %v2088, %v2084
    %v2090 = vmul.f32 %v2072, %v2089
    %v2092 = vsel %vm575, %v2090, 0
    %2094 = vmatpush.msra.mxu0 0.0
    %2095 = vmatpush.msra.mxu0 0.0
    %2096 = vmatpush.msra.mxu0 0.0
    %2097 = vmatpush.msra.mxu0 0.0
    %2098 = vmatpush.msra.mxu0 0.0
    %2099 = vmatpush.msra.mxu0 0.0
    %2100 = vmatpush.msra.mxu0 0.0
    %2101 = vmatpush.msra.mxu0 0.0
    %2102 = vmatpush.msra.mxu0 0.0
    %2103 = vmatpush.msra.mxu0 0.0
    %2104 = vmatpush.msra.mxu0 0.0
    %2105 = vmatpush.msra.mxu0 0.0
    %2106 = vmatpush.msra.mxu0 0.0
    %2107 = vmatpush.msra.mxu0 %v581
    %2108 = vmatpush.msra.mxu0 %v257
    %2109 = vmatpush.msra.mxu0 %v256
    %2110 = vmatmul.f32.gmra.mxu0 %v2092
    %v2111 = vpop.f32.mrf.mxu0
    %v2112 = vadd.f32 0.0, %v2111
    %2113 = vdwg.mxu0
    %2114 = vmatpush.msra.mxu0 0.0
    %2115 = vmatpush.msra.mxu0 0.0
    %2116 = vmatpush.msra.mxu0 0.0
    %2117 = vmatpush.msra.mxu0 0.0
    %2118 = vmatpush.msra.mxu0 0.0
    %2119 = vmatpush.msra.mxu0 0.0
    %2120 = vmatpush.msra.mxu0 0.0
    %2121 = vmatpush.msra.mxu0 0.0
    %2122 = vmatpush.msra.mxu0 0.0
    %2123 = vmatpush.msra.mxu0 0.0
    %2124 = vmatpush.msra.mxu0 0.0
    %2125 = vmatpush.msra.mxu0 0.0
    %2126 = vmatpush.msra.mxu0 %v365
    %2127 = vmatpush.msra.mxu0 %v364
    %2128 = vmatpush.msra.mxu0 %v363
    %2129 = vmatpush.msra.mxu0 %v362
    %2130 = vmatmul.f32.gmra.mxu0 %v2049
    %v2131 = vpop.f32.mrf.mxu0
    %v2132 = vadd.f32 0.0, %v2131
    %2133 = vdwg.mxu0
    %v2135 = vsel %vm268, %v2112, 0
    %2137 = vmatpush.msra.mxu0 0.0
    %2138 = vmatpush.msra.mxu0 0.0
    %2139 = vmatpush.msra.mxu0 0.0
    %2140 = vmatpush.msra.mxu0 0.0
    %2141 = vmatpush.msra.mxu0 0.0
    %2142 = vmatpush.msra.mxu0 0.0
    %2143 = vmatpush.msra.mxu0 0.0
    %2144 = vmatpush.msra.mxu0 0.0
    %2145 = vmatpush.msra.mxu0 0.0
    %2146 = vmatpush.msra.mxu0 0.0
    %2147 = vmatpush.msra.mxu0 0.0
    %2148 = vmatpush.msra.mxu0 0.0
    %2149 = vmatpush.msra.mxu0 %v361
    %2150 = vmatpush.msra.mxu0 %v360
    %2151 = vmatpush.msra.mxu0 %v359
    %2152 = vmatpush.msra.mxu0 %v358
    %2153 = vmatmul.f32.gmra.mxu0 %v2135
    %v2154 = vpop.f32.mrf.mxu0
    %v2155 = vadd.f32 %v2132, %v2154
    %2156 = vdwg.mxu0
    %v2157 = vtanh.pop %v2155
    %v2159 = vsel %vm268, %v2157, 0
    %2161 = vmatpush.msra.mxu0 0.0
    %2162 = vmatpush.msra.mxu0 0.0
    %2163 = vmatpush.msra.mxu0 0.0
    %2164 = vmatpush.msra.mxu0 0.0
    %2165 = vmatpush.msra.mxu0 0.0
    %2166 = vmatpush.msra.mxu0 0.0
    %2167 = vmatpush.msra.mxu0 0.0
    %2168 = vmatpush.msra.mxu0 0.0
    %2169 = vmatpush.msra.mxu0 0.0
    %2170 = vmatpush.msra.mxu0 0.0
    %2171 = vmatpush.msra.mxu0 0.0
    %2172 = vmatpush.msra.mxu0 0.0
    %2173 = vmatpush.msra.mxu0 %v376
    %2174 = vmatpush.msra.mxu0 %v375
    %2175 = vmatpush.msra.mxu0 %v374
    %2176 = vmatpush.msra.mxu0 %v373
    %2177 = vmatmul.f32.gmra.mxu0 %v2159
    %v2178 = vpop.f32.mrf.mxu0
    %v2179 = vadd.f32 0.0, %v2178
    %2180 = vdwg.mxu0
    %v2182 = vrot.slane %v2179, 2
    %v2184 = vadd.f32 %v347, %v2182
    %2185 = vmatpush.msra.mxu0 0.0
    %2186 = vmatpush.msra.mxu0 0.0
    %2187 = vmatpush.msra.mxu0 0.0
    %2188 = vmatpush.msra.mxu0 0.0
    %2189 = vmatpush.msra.mxu0 0.0
    %2190 = vmatpush.msra.mxu0 0.0
    %2191 = vmatpush.msra.mxu0 0.0
    %2192 = vmatpush.msra.mxu0 0.0
    %2193 = vmatpush.msra.mxu0 0.0
    %2194 = vmatpush.msra.mxu0 0.0
    %2195 = vmatpush.msra.mxu0 0.0
    %2196 = vmatpush.msra.mxu0 0.0
    %2197 = vmatpush.msra.mxu0 %v404
    %2198 = vmatpush.msra.mxu0 %v403
    %2199 = vmatpush.msra.mxu0 %v402
    %2200 = vmatpush.msra.mxu0 %v401
    %2201 = vmatmul.f32.gmra.mxu0 %v2003
    %v2202 = vpop.f32.mrf.mxu0
    %v2203 = vadd.f32 0.0, %v2202
    %2204 = vdwg.mxu0
    %v2206 = vrot.slane %v2203, 2
    %v2208 = vadd.f32 %v2184, %v2206
    %v2209 = vtanh.pop %v2208
    %v2210 = vmul.f32 %v2209, 0.5
    %v2211 = vadd.f32 %v2210, 0.5
    %v2213 = vrot.slane %v1972, 6
    %v2215 = vmul.f32 %v2211, %v2213
    %2217 = vrot.lane.b32.xlu0 %v2209, 32
    %v2218 = vpop.permute.xlu0 %2217
    %v2220 = vmul.f32 %v2211, %v2218
    %2222 = vrot.lane.b32.xlu0 %v2220, 32
    %v2223 = vpop.permute.xlu0 %2222
    %v2225 = vadd.f32 %v2215, %v2223
    %v2226 = vtanh.pop %v2225
    %2228 = vrot.lane.b32.xlu0 %v2226, 32
    %v2229 = vpop.permute.xlu0 %2228
    %v2231 = vmul.f32 %v2211, %v2229
    %2232 = vmatpush.msra.mxu0 0.0
    %2233 = vmatpush.msra.mxu0 0.0
    %2234 = vmatpush.msra.mxu0 0.0
    %2235 = vmatpush.msra.mxu0 0.0
    %2236 = vmatpush.msra.mxu0 0.0
    %2237 = vmatpush.msra.mxu0 0.0
    %2238 = vmatpush.msra.mxu0 0.0
    %2239 = vmatpush.msra.mxu0 0.0
    %2240 = vmatpush.msra.mxu0 0.0
    %2241 = vmatpush.msra.mxu0 0.0
    %2242 = vmatpush.msra.mxu0 0.0
    %2243 = vmatpush.msra.mxu0 0.0
    %2244 = vmatpush.msra.mxu0 %v356
    %2245 = vmatpush.msra.mxu0 %v355
    %2246 = vmatpush.msra.mxu0 %v354
    %2247 = vmatpush.msra.mxu0 %v353
    %2248 = vmatmul.f32.gmra.mxu0 %v2049
    %v2249 = vpop.f32.mrf.mxu0
    %v2250 = vadd.f32 0.0, %v2249
    %2251 = vdwg.mxu0
    %v2253 = vrot.slane %v2231, 6
    %2254 = vrot.lane.b32.xlu0 %v2253, 64
    %v2255 = vpop.permute.xlu0 %2254
    %v2256 = vsel %vm268, %v2255, 0
    %2258 = vmatpush.msra.mxu0 0.0
    %2259 = vmatpush.msra.mxu0 0.0
    %2260 = vmatpush.msra.mxu0 0.0
    %2261 = vmatpush.msra.mxu0 0.0
    %2262 = vmatpush.msra.mxu0 0.0
    %2263 = vmatpush.msra.mxu0 0.0
    %2264 = vmatpush.msra.mxu0 0.0
    %2265 = vmatpush.msra.mxu0 0.0
    %2266 = vmatpush.msra.mxu0 0.0
    %2267 = vmatpush.msra.mxu0 0.0
    %2268 = vmatpush.msra.mxu0 0.0
    %2269 = vmatpush.msra.mxu0 0.0
    %2270 = vmatpush.msra.mxu0 %v352
    %2271 = vmatpush.msra.mxu0 %v351
    %2272 = vmatpush.msra.mxu0 %v350
    %2273 = vmatpush.msra.mxu0 %v349
    %2274 = vmatmul.f32.gmra.mxu0 %v2256
    %v2275 = vpop.f32.mrf.mxu0
    %v2276 = vadd.f32 %v2250, %v2275
    %2277 = vdwg.mxu0
    %v2278 = vadd.f32 %v2276, %v502
    %v2279 = vtanh.pop %v2278
    %v2280 = vmul.f32 %v2279, 0.5
    %v2281 = vadd.f32 %v2280, 0.5
    %v2282 = vmul.f32 %v2281, %v2039
    %2284 = vrot.lane.b32.xlu0 %v2279, 32
    %v2285 = vpop.permute.xlu0 %2284
    %v2287 = vmul.f32 %v2281, %v2285
    %2289 = vrot.lane.b32.xlu0 %v2287, 32
    %v2290 = vpop.permute.xlu0 %2289
    %v2292 = vadd.f32 %v2282, %v2290
    %v2293 = vtanh.pop %v2292
    %2295 = vrot.lane.b32.xlu0 %v2293, 32
    %v2296 = vpop.permute.xlu0 %2295
    %v2298 = vmul.f32 %v2281, %v2296
    %2300 = vrot.lane.b32.xlu0 %v2298, 64
    %v2301 = vpop.permute.xlu0 %2300
    %v2302 = vsel %vm268, %v2301, 0
    %2304 = vmatpush.msra.mxu0 0.0
    %2305 = vmatpush.msra.mxu0 0.0
    %2306 = vmatpush.msra.mxu0 0.0
    %2307 = vmatpush.msra.mxu0 0.0
    %2308 = vmatpush.msra.mxu0 0.0
    %2309 = vmatpush.msra.mxu0 0.0
    %2310 = vmatpush.msra.mxu0 0.0
    %2311 = vmatpush.msra.mxu0 0.0
    %2312 = vmatpush.msra.mxu0 0.0
    %2313 = vmatpush.msra.mxu0 0.0
    %2314 = vmatpush.msra.mxu0 0.0
    %2315 = vmatpush.msra.mxu0 0.0
    %2316 = vmatpush.msra.mxu0 %v308
    %2317 = vmatpush.msra.mxu0 %v305
    %2318 = vmatpush.msra.mxu0 %v302
    %2319 = vmatpush.msra.mxu0 %v299
    %2320 = vmatmul.f32.gmra.mxu0 %v2302
    %v2321 = vpop.f32.mrf.mxu0
    %v2322 = vadd.f32 %v259, %v2321
    %2323 = vdwg.mxu0
    %v2324 = vmul.f32 %v2322, 1.442695
    %v2325 = vpow.pop %v2324
    %v2326 = vsel %vm556, %v2325, 0.0
    %2327 = vadd.xlane.f32.xlu0 %v2326
    %v2328 = vpop.xlane.xlu0 %2327
    %v2329 = vrcp.pop %v2328
    %v2330 = vmul.f32 %v2328, %v2329
    %v2331 = vsub.f32 1.0, %v2330
    %v2332 = vmul.f32 %v2329, %v2331
    %v2333 = vadd.f32 %v2329, %v2332
    %vm2334 = vweird.f32 %v2328
    %vm2335 = vweird.f32 %v2329
    %vm2336 = vmor %vm2334, %vm2335
    %v2337 = vsel %vm2336, %v2329, %v2333
    %v2338 = vand.u32 2147483647, %v2328
    %vm2339 = vcmp.eq.f32.partialorder %v2338, 8.507059e+37
    %v2340 = vand.u32 %v2328, 2147483648
    %v2341 = vor.u32 1.1754944e-38, %v2340
    %v2342 = vsel %vm2339, %v2341, %v2337
    %v2343 = vmul.f32 %v2325, %v2342
    %v2345 = vsel %vm575, %v2343, 0
    %2347 = vmatpush.msra.mxu0 0.0
    %2348 = vmatpush.msra.mxu0 0.0
    %2349 = vmatpush.msra.mxu0 0.0
    %2350 = vmatpush.msra.mxu0 0.0
    %2351 = vmatpush.msra.mxu0 0.0
    %2352 = vmatpush.msra.mxu0 0.0
    %2353 = vmatpush.msra.mxu0 0.0
    %2354 = vmatpush.msra.mxu0 0.0
    %2355 = vmatpush.msra.mxu0 0.0
    %2356 = vmatpush.msra.mxu0 0.0
    %2357 = vmatpush.msra.mxu0 0.0
    %2358 = vmatpush.msra.mxu0 0.0
    %2359 = vmatpush.msra.mxu0 0.0
    %2360 = vmatpush.msra.mxu0 %v581
    %2361 = vmatpush.msra.mxu0 %v257
    %2362 = vmatpush.msra.mxu0 %v256
    %2363 = vmatmul.f32.gmra.mxu0 %v2345
    %v2364 = vpop.f32.mrf.mxu0
    %v2365 = vadd.f32 0.0, %v2364
    %2366 = vdwg.mxu0
    %2367 = vmatpush.msra.mxu0 0.0
    %2368 = vmatpush.msra.mxu0 0.0
    %2369 = vmatpush.msra.mxu0 0.0
    %2370 = vmatpush.msra.mxu0 0.0
    %2371 = vmatpush.msra.mxu0 0.0
    %2372 = vmatpush.msra.mxu0 0.0
    %2373 = vmatpush.msra.mxu0 0.0
    %2374 = vmatpush.msra.mxu0 0.0
    %2375 = vmatpush.msra.mxu0 0.0
    %2376 = vmatpush.msra.mxu0 0.0
    %2377 = vmatpush.msra.mxu0 0.0
    %2378 = vmatpush.msra.mxu0 0.0
    %2379 = vmatpush.msra.mxu0 %v365
    %2380 = vmatpush.msra.mxu0 %v364
    %2381 = vmatpush.msra.mxu0 %v363
    %2382 = vmatpush.msra.mxu0 %v362
    %2383 = vmatmul.f32.gmra.mxu0 %v2302
    %v2384 = vpop.f32.mrf.mxu0
    %v2385 = vadd.f32 0.0, %v2384
    %2386 = vdwg.mxu0
    %v2388 = vsel %vm268, %v2365, 0
    %2390 = vmatpush.msra.mxu0 0.0
    %2391 = vmatpush.msra.mxu0 0.0
    %2392 = vmatpush.msra.mxu0 0.0
    %2393 = vmatpush.msra.mxu0 0.0
    %2394 = vmatpush.msra.mxu0 0.0
    %2395 = vmatpush.msra.mxu0 0.0
    %2396 = vmatpush.msra.mxu0 0.0
    %2397 = vmatpush.msra.mxu0 0.0
    %2398 = vmatpush.msra.mxu0 0.0
    %2399 = vmatpush.msra.mxu0 0.0
    %2400 = vmatpush.msra.mxu0 0.0
    %2401 = vmatpush.msra.mxu0 0.0
    %2402 = vmatpush.msra.mxu0 %v361
    %2403 = vmatpush.msra.mxu0 %v360
    %2404 = vmatpush.msra.mxu0 %v359
    %2405 = vmatpush.msra.mxu0 %v358
    %2406 = vmatmul.f32.gmra.mxu0 %v2388
    %v2407 = vpop.f32.mrf.mxu0
    %v2408 = vadd.f32 %v2385, %v2407
    %2409 = vdwg.mxu0
    %v2410 = vtanh.pop %v2408
    %vm2411 = vcmask 254976
    %2412 = vst.msk [vmem:[#allocation23] sm:$0x3] %vm2411, %v646
    %2413 = vst.msk [vmem:[#allocation23 + $0x2] sm:$0x3] %vm2411, %v899
    %2414 = vst.msk [vmem:[#allocation23 + $0x4] sm:$0x3] %vm2411, %v1152
    %2415 = vst.msk [vmem:[#allocation23 + $0x6] sm:$0x3] %vm2411, %v1405
    %2416 = vst.msk [vmem:[#allocation23 + $0x8] sm:$0x3] %vm2411, %v1651
    %2417 = vst.msk [vmem:[#allocation23 + $0xa] sm:$0x3] %vm2411, %v1904
    %2418 = vst.msk [vmem:[#allocation23 + $0xc] sm:$0x3] %vm2411, %v2157
    %2419 = vst.msk [vmem:[#allocation23 + $0xe] sm:$0x3] %vm2411, %v2410
    %2420 = vst.msk [vmem:[#allocation24] sm:$0x3] %vm556, %v574
    %2421 = vst.msk [vmem:[#allocation24 + $0x2] sm:$0x3] %vm556, %v832
    %2422 = vst.msk [vmem:[#allocation24 + $0x4] sm:$0x3] %vm556, %v1085
    %2423 = vst.msk [vmem:[#allocation24 + $0x6] sm:$0x3] %vm556, %v1338
    %2424 = vst.msk [vmem:[#allocation24 + $0x8] sm:$0x3] %vm556, %v1584
    %2425 = vst.msk [vmem:[#allocation24 + $0xa] sm:$0x3] %vm556, %v1837
    %2426 = vst.msk [vmem:[#allocation24 + $0xc] sm:$0x3] %vm556, %v2090
    %2427 = vst.msk [vmem:[#allocation24 + $0xe] sm:$0x3] %vm556, %v2343
    %v2428 = vrot.slane %v2298, 2
    %2429 = vrot.lane.b32.xlu0 %v2231, 64
    %v2430 = vpop.permute.xlu0 %2429
    %2431 = vrot.lane.b32.xlu0 %v2428, 64
    %v2432 = vpop.permute.xlu0 %2431
    %vm2435 = vcmask 261126
    %2436 = vst.msk [vmem:[#allocation26 - $0x6] sm:$0xc0] %vm2435, %v2430
    %2437 = vst.msk [vmem:[#allocation26 - $0x4] sm:$0xc0] %vm2435, %v2432
    %v2439 = vrot.slane %v2292, 2
    %2441 = vrot.lane.b32.xlu0 %v2225, 96
    %v2442 = vpop.permute.xlu0 %2441
    %2443 = vrot.lane.b32.xlu0 %v2439, 96
    %v2444 = vpop.permute.xlu0 %2443
    %2447 = vst.msk [vmem:[#allocation27 - $0x6] sm:$0xc0] %vm2435, %v2442
    %2448 = vst.msk [vmem:[#allocation27 - $0x4] sm:$0xc0] %vm2435, %v2444
    // Predicated region
    $region118: #{tpu_custom_call.1} parent=1 // pred_check
      _
    $region119: #{tpu_custom_call.1} parent=1 // pred_check_branch
      %2450 = sbr.rel (0) target = $region121
    $region120: #{tpu_custom_call.1} parent=1 // pred_region
      %2452 = vsyncadd [#allocation4], 0
      %s2453 = sshll.u32 [#allocation23], 4
      %s2454 = int_to_ptr.vmem [resolvable:$true] %s2453
      %s2455 = sshll.u32 %s16, 4
      %s2456 = int_to_ptr.hbm [resolvable:$true] %s2455
      %2461 = dma.vmem_to_hbm [thread:$0]  %s2454, 256, %s2456, [#allocation4], 32, 32, 2
    $region121: #{tpu_custom_call.1} parent=1 // pred_fallthru
      _
    // Predicated region
    $region122: #{tpu_custom_call.1} parent=1 // pred_check
      _
    $region123: #{tpu_custom_call.1} parent=1 // pred_check_branch
      %2463 = sbr.rel (0) target = $region125
    $region124: #{tpu_custom_call.1} parent=1 // pred_region
      %2465 = vsyncadd [#allocation25], 0
      %s2466 = sshll.u32 [#allocation24], 4
      %s2467 = int_to_ptr.vmem [resolvable:$true] %s2466
      %s2468 = sshll.u32 %s17, 4
      %s2469 = int_to_ptr.hbm [resolvable:$true] %s2468
      %2474 = dma.vmem_to_hbm [thread:$0]  %s2467, 256, %s2469, [#allocation25], 32, 32, 2
    $region125: #{tpu_custom_call.1} parent=1 // pred_fallthru
      _
    // Predicated region
    $region126: #{tpu_custom_call.1} parent=1 // pred_check
      _
    $region127: #{tpu_custom_call.1} parent=1 // pred_check_branch
      %2476 = sbr.rel (0) target = $region129
    $region128: #{tpu_custom_call.1} parent=1 // pred_region
      %2478 = vsyncadd [#allocation25], 0
      %s2479 = sshll.u32 [#allocation26], 4
      %s2480 = int_to_ptr.vmem [resolvable:$true] %s2479
      %s2481 = sshll.u32 %s18, 4
      %s2482 = int_to_ptr.hbm [resolvable:$true] %s2481
      %2487 = dma.vmem_to_hbm [thread:$0]  %s2480, 64, %s2482, [#allocation25], 32, 32, 2
    $region129: #{tpu_custom_call.1} parent=1 // pred_fallthru
      _
    // Predicated region
    $region130: #{tpu_custom_call.1} parent=1 // pred_check
      _
    $region131: #{tpu_custom_call.1} parent=1 // pred_check_branch
      %2489 = sbr.rel (0) target = $region133
    $region132: #{tpu_custom_call.1} parent=1 // pred_region
      %2491 = vsyncadd [#allocation28], 0
      %s2492 = sshll.u32 [#allocation27], 4
      %s2493 = int_to_ptr.vmem [resolvable:$true] %s2492
      %s2494 = sshll.u32 %s19, 4
      %s2495 = int_to_ptr.hbm [resolvable:$true] %s2494
      %2500 = dma.vmem_to_hbm [thread:$0]  %s2493, 64, %s2495, [#allocation28], 32, 32, 2
    $region133: #{tpu_custom_call.1} parent=1 // pred_fallthru
      _
    // Predicated region
    $region134: #{tpu_custom_call.1} parent=1 // pred_check
      _
    $region135: #{tpu_custom_call.1} parent=1 // pred_check_branch
      %2502 = sbr.rel (0) target = $region137
    $region136: #{tpu_custom_call.1} parent=1 // pred_region
      %2504 = dma.done [#allocation4], 256
    $region137: #{tpu_custom_call.1} parent=1 // pred_fallthru
      _
    // Predicated region
    $region138: #{tpu_custom_call.1} parent=1 // pred_check
      _
    $region139: #{tpu_custom_call.1} parent=1 // pred_check_branch
      %2506 = sbr.rel (0) target = $region141
    $region140: #{tpu_custom_call.1} parent=1 // pred_region
      %2508 = dma.done [#allocation25], 256
    $region141: #{tpu_custom_call.1} parent=1 // pred_fallthru
      _
    // Predicated region
    $region142: #{tpu_custom_call.1} parent=1 // pred_check
      _
    $region143: #{tpu_custom_call.1} parent=1 // pred_check_branch
      %2510 = sbr.rel (0) target = $region145
    $region144: #{tpu_custom_call.1} parent=1 // pred_region
      %2512 = dma.done [#allocation25], 64
    $region145: #{tpu_custom_call.1} parent=1 // pred_fallthru
      _
    // Predicated region
    $region146: #{tpu_custom_call.1} parent=1 // pred_check
      _
    $region147: #{tpu_custom_call.1} parent=1 // pred_check_branch
      %2514 = sbr.rel (0) target = $region149
    $region148: #{tpu_custom_call.1} parent=1 // pred_region
      %2516 = dma.done [#allocation28], 64
    $region149: #{tpu_custom_call.1} parent=1 // pred_fallthru
      _
    %2517 = vsyncpa [#allocation3], 1
    %2518 = vsyncpa [#allocation6], 1
    %2519 = vsyncpa [#allocation9], 1
    %2520 = vsyncpa [#allocation12], 1
    %2521 = vsyncpa [#allocation15], 1
    %2522 = vsyncpa [#allocation18], 1
    %2523 = vsyncpa [#allocation21], 1
    %2524 = vsyncpa [#allocation4], 1
    %2525 = vsyncpa [#allocation25], 1
    %2526 = vsyncpa [#allocation28], 1

</llo_original>
